<compile_context>
chip_gen: v6e
topology: v6e:2x2x1
jax: 0.10.0
libtpu: 0.0.40
codegen_flags: <defaults>
</compile_context>

<pallas_src>
import numpy as np
import jax
import jax.numpy as jnp
from jax.experimental import pallas as pl
from jax.experimental.pallas import tpu as pltpu


def _round_up(x, m):
    return ((x + m - 1) // m) * m


def _tensorcores_per_chip():
    """Best-effort TensorCore count per chip (v7x: 2; v5e/v6e: 1)."""
    try:
        kind = str(getattr(jax.devices()[0], "device_kind", "")).lower()
    except Exception:
        return 1
    return 2 if "v7" in kind else 1


# ----------------------------- Pallas kernel --------------------------------
def qnet_kernel(x_ref, w_ref, b_ref, out_ref):
    """One (TM, in_pad) activation tile through the whole Qnet.

    w_ref is a single stacked bf16 weight array; row layout:
      [0      : in_pad]  branch layer-1, block-diagonal, cols 0:384
      [in_pad : +384  ]  branch layer-2, block-diagonal, cols 0:384
      [ ...   : +384  ]  fc   (384 -> 128),              cols 0:128
      [ ...   : +128  ]  fc1  (128 -> 128),              cols 0:128
      [ ...   : +128  ]  fc2  (128 -> 64, zero-padded to 128 cols)
      [ ...   : +128  ]  fused action heads (64 rows used, rest zero)
    b_ref is a (8, WW) f32 array, one bias per row in the same order.
    All slice offsets are static and 128-aligned (lane) / 8-aligned (sublane).
    """
    f32 = jnp.float32
    in_pad = x_ref.shape[1]
    head_n = out_ref.shape[1]
    r1 = in_pad          # start of branch layer-2 block
    r2 = r1 + 384        # fc
    r3 = r2 + 384        # fc1
    r4 = r3 + 128        # fc2 (padded)
    r5 = r4 + 128        # action heads (padded rows)

    def mx(a, w):
        # MXU matmul: bf16 operands, f32 accumulation.
        return jnp.dot(a.astype(w.dtype), w, preferred_element_type=f32)

    # Branch first layers, fused via block-diagonal weight.
    h = jax.nn.relu(mx(x_ref[...], w_ref[0:r1, 0:384]) + b_ref[0:1, 0:384])
    # Branch second layers, fused via block-diagonal weight.
    h = jax.nn.relu(mx(h, w_ref[r1:r2, 0:384]) + b_ref[1:2, 0:384])
    # fc over concat(h1,h2,h3): single (384,128) matmul.
    x = jax.nn.relu(mx(h, w_ref[r2:r3, 0:128]) + b_ref[2:3, 0:128])
    # Trunk.
    x = jax.nn.relu(mx(x, w_ref[r3:r4, 0:128]) + b_ref[3:4, 0:128])
    # fc2 padded to 128 lanes: padded lanes come out as sigmoid(0)=0.5 and are
    # cancelled by the zero rows of the head weight below.
    x = jax.nn.sigmoid(mx(x, w_ref[r4:r5, 0:128]) + b_ref[4:5, 0:128])
    # Fused, lane-dense action heads (wrapper splits placing/routing).
    out_ref[...] = mx(x, w_ref[r5:r5 + 128, 0:head_n]) + b_ref[5:6, 0:head_n]


# --------------------------- parameter handling -------------------------------
def make_qnet_params(key, in1, in2, in3, placing_action, routing_action,
                     fc1_units=128, fc2_units=64, hidden_dim=128):
    """PyTorch-style init U(-1/sqrt(fan_in), +1/sqrt(fan_in)).
    Weights stored as (in, out); biases as (1, out); all f32."""
    assert hidden_dim == 128 and fc1_units == 128 and fc2_units <= 128
    p_out = placing_action[0] * placing_action[1]
    r_out = routing_action[0] * routing_action[1]
    layer_dims = [
        ("wp1", in1, 128), ("wp2", 128, 128),
        ("wr1", in2, 128), ("wr2", 128, 128),
        ("wu1", in3, 128), ("wu2", 128, 128),
        ("wfc", 3 * 128, hidden_dim),
        ("wfc1", hidden_dim, fc1_units),
        ("wfc2", fc1_units, fc2_units),
        ("wa1", fc2_units, p_out),
        ("wa2", fc2_units, r_out),
    ]
    params = {}
    keys = jax.random.split(key, 2 * len(layer_dims))
    for i, (name, fan_in, fan_out) in enumerate(layer_dims):
        bound = 1.0 / np.sqrt(fan_in)
        params[name] = jax.random.uniform(
            keys[2 * i], (fan_in, fan_out), jnp.float32, -bound, bound)
        params["b" + name[1:]] = jax.random.uniform(
            keys[2 * i + 1], (1, fan_out), jnp.float32, -bound, bound)
    return params


def pack_qnet_params(params, placing_action, routing_action,
                     param_dtype=jnp.bfloat16):
    """Kernel-ready params: one stacked bf16 weight array + one f32 bias array.

    Fusions/padding (all zero-padded AFTER assembly; 0 is exact in bf16):
      * branch layer-1 weights -> block-diagonal (in_pad, 384), input rows
        padded to a multiple of 128 lanes,
      * branch layer-2 weights -> block-diagonal (384, 384),
      * fc kept whole (384, 128),
      * fc2 output padded 64 -> 128 columns,
      * both action heads fused, input rows padded 64 -> 128 (zeros), output
        padded to a lane-dense multiple of 128.
    """
    f32 = jnp.float32
    p_out = placing_action[0] * placing_action[1]
    r_out = routing_action[0] * routing_action[1]
    in1 = params["wp1"].shape[0]
    in2 = params["wr1"].shape[0]
    in3 = params["wu1"].shape[0]
    in_total = in1 + in2 + in3
    in_pad = max(128, _round_up(in_total, 128))
    head_n = max(128, _round_up(p_out + r_out, 128))
    ww = max(384, head_n)

    assert params["wfc"].shape == (384, 128)
    assert params["wfc1"].shape == (128, 128)
    assert params["wfc2"].shape[0] == 128 and params["wfc2"].shape[1] <= 128
    fc2_units = params["wfc2"].shape[1]

    # Branch layer-1: block-diagonal, input rows zero-padded to in_pad.
    w1 = jnp.zeros((in_pad, 384), f32)
    w1 = w1.at[0:in1, 0:128].set(params["wp1"])
    w1 = w1.at[in1:in1 + in2, 128:256].set(params["wr1"])
    w1 = w1.at[in1 + in2:in_total, 256:384].set(params["wu1"])
    b1 = jnp.concatenate([params["bp1"], params["br1"], params["bu1"]], axis=1)

    # Branch layer-2: block-diagonal.
    w2 = jnp.zeros((384, 384), f32)
    w2 = w2.at[0:128, 0:128].set(params["wp2"])
    w2 = w2.at[128:256, 128:256].set(params["wr2"])
    w2 = w2.at[256:384, 256:384].set(params["wu2"])
    b2 = jnp.concatenate([params["bp2"], params["br2"], params["bu2"]], axis=1)

    # fc2 padded to 128 output columns (zeros).
    wfc2 = jnp.zeros((128, 128), f32).at[:, 0:fc2_units].set(params["wfc2"])
    bfc2 = jnp.zeros((1, 128), f32).at[:, 0:fc2_units].set(params["bfc2"])

    # Fused action heads; input rows padded to 128 with zeros (cancels the
    # sigmoid(0)=0.5 of fc2's padded lanes), lane-dense padded output width.
    wh = jnp.zeros((128, head_n), f32)
    wh = wh.at[0:fc2_units, 0:p_out].set(params["wa1"])
    wh = wh.at[0:fc2_units, p_out:p_out + r_out].set(params["wa2"])
    bh = jnp.zeros((1, head_n), f32)
    bh = bh.at[:, 0:p_out].set(params["ba1"])
    bh = bh.at[:, p_out:p_out + r_out].set(params["ba2"])

    # One stacked bf16 weight array -> a single input DMA.
    wstk = jnp.zeros((in_pad + 1152, ww), f32)
    row = 0
    for blk in (w1, w2, params["wfc"], params["wfc1"], wfc2, wh):
        wstk = wstk.at[row:row + blk.shape[0], 0:blk.shape[1]].set(blk)
        row += blk.shape[0]
    assert row == in_pad + 1152
    wstk = wstk.astype(param_dtype)

    # One stacked f32 bias array (8 rows for sublane alignment).
    bstk = jnp.zeros((8, ww), f32)
    for i, b in enumerate((b1, b2, params["bfc"], params["bfc1"], bfc2, bh)):
        bstk = bstk.at[i:i + 1, 0:b.shape[1]].set(b)

    return {"w": wstk, "b": bstk,
            "in_total": in_total, "in_pad": in_pad, "head_n": head_n}


# ------------------------------ JAX wrapper ----------------------------------
def qnet_forward(state, packed, placing_action, routing_action, *, block_m=None):
    p_out = placing_action[0] * placing_action[1]
    r_out = routing_action[0] * routing_action[1]
    in_total = packed["in_total"]
    in_pad = packed["in_pad"]
    head_n = packed["head_n"]

    x1 = jnp.asarray(state["last_container_placement"], jnp.float32)
    x2 = jnp.asarray(state["last_request_routing"], jnp.float32)
    x3 = jnp.asarray(state["user_request"], jnp.float32)
    batch = x1.shape[0]
    xcat = jnp.concatenate(
        [x1.reshape(batch, -1), x2.reshape(batch, -1), x3.reshape(batch, -1)],
        axis=1)
    assert xcat.shape[1] == in_total, "state feature sizes do not match params"
    # Pad features to a lane-dense 128-multiple (matching w1's padded rows).
    xcat = jnp.pad(xcat, ((0, 0), (0, in_pad - in_total)))

    # One batch tile per TensorCore: grid=(1,) on v5e/v6e (per-step overhead
    # dominates this tiny net), an even >=2-step grid on v7x so "parallel"
    # actually splits work across its two cores.  Cap the tile at 512 rows.
    n_cores = _tensorcores_per_chip()
    if block_m is None:
        block_m = max(8, min(512, _round_up(pl.cdiv(batch, n_cores), 8)))
    bm = block_m
    b_pad = _round_up(batch, bm)
    if b_pad != batch:
        xcat = jnp.pad(xcat, ((0, b_pad - batch), (0, 0)))

    w = packed["w"]
    b = packed["b"]
    # Activation tile moves with the grid; the stacked weight/bias arrays have
    # a constant block index -> DMA'd once, VMEM-resident across all steps.
    grid_spec = pltpu.PrefetchScalarGridSpec(
        num_scalar_prefetch=0,
        grid=(b_pad // bm,),
        in_specs=[pl.BlockSpec((bm, in_pad), lambda i: (i, 0)),
                  pl.BlockSpec(w.shape, lambda i: (0, 0)),
                  pl.BlockSpec(b.shape, lambda i: (0, 0))],
        out_specs=pl.BlockSpec((bm, head_n), lambda i: (i, 0)),
    )
    out_flat = pl.pallas_call(
        qnet_kernel,
        out_shape=jax.ShapeDtypeStruct((b_pad, head_n), jnp.float32),
        grid_spec=grid_spec,
        compiler_params=pltpu.CompilerParams(
            dimension_semantics=("parallel",)),   # batch axis: both TCs on v7x
    )(xcat, w, b)

    place = out_flat[:batch, 0:p_out]
    route = out_flat[:batch, p_out:p_out + r_out]
    return {
        "now_container_place":
            place.reshape(batch, placing_action[0], placing_action[1]),
        "now_request_routing":
            route.reshape(batch, routing_action[0], routing_action[1]),
    }


# --------------------------- pure-JAX reference -------------------------------
def qnet_reference(state, params, placing_action, routing_action, param_dtype):
    """Mirrors the PyTorch Qnet.forward (per-sample batch semantics) with the
    same weight/activation rounding the kernel uses and f32 accumulation."""
    f32 = jnp.float32

    def lin(a, w, b):
        return jnp.dot(a.astype(param_dtype).astype(f32),
                       w.astype(param_dtype).astype(f32)) + b

    batch = state["last_container_placement"].shape[0]
    x1 = jnp.asarray(state["last_container_placement"], f32).reshape(batch, -1)
    x2 = jnp.asarray(state["last_request_routing"], f32).reshape(batch, -1)
    x3 = jnp.asarray(state["user_request"], f32).reshape(batch, -1)

    h1 = jax.nn.relu(lin(x1, params["wp1"], params["bp1"]))
    h1 = jax.nn.relu(lin(h1, params["wp2"], params["bp2"]))
    h2 = jax.nn.relu(lin(x2, params["wr1"], params["br1"]))
    h2 = jax.nn.relu(lin(h2, params["wr2"], params["br2"]))
    h3 = jax.nn.relu(lin(x3, params["wu1"], params["bu1"]))
    h3 = jax.nn.relu(lin(h3, params["wu2"], params["bu2"]))

    xc = jnp.concatenate([h1, h2, h3], axis=1)
    x = jax.nn.relu(lin(xc, params["wfc"], params["bfc"]))
    x = jax.nn.relu(lin(x, params["wfc1"], params["bfc1"]))
    x = jax.nn.sigmoid(lin(x, params["wfc2"], params["bfc2"]))
    place = lin(x, params["wa1"], params["ba1"])
    route = lin(x, params["wa2"], params["ba2"])
    return place, route


# ---------------------------------- main --------------------------------------
if __name__ == "__main__":
    key = jax.random.PRNGKey(0)
    k_state, k_params = jax.random.split(key)

    # Small per-sample shapes, batched to fill MXU rows and exercise the grid.
    B = 256
    placing_action = (4, 4)                  # -> p_out = 16
    routing_action = (4, 2)                  # -> r_out = 8
    state_shapes = {
        "last_container_placement": (4, 4),  # input_shape1 = 16
        "last_request_routing": (4, 2),      # input_shape2 = 8
        "user_request": (2, 4),              # input_shape3 = 8
    }

    ks = jax.random.split(k_state, 3)
    state = {
        name: jax.random.normal(k, (B,) + shape, jnp.float32)
        for (name, shape), k in zip(state_shapes.items(), ks)
    }

    params = make_qnet_params(
        k_params,
        in1=int(np.prod(state_shapes["last_container_placement"])),
        in2=int(np.prod(state_shapes["last_request_routing"])),
        in3=int(np.prod(state_shapes["user_request"])),
        placing_action=placing_action,
        routing_action=routing_action,
    )
    packed = pack_qnet_params(params, placing_action, routing_action,
                              param_dtype=jnp.bfloat16)

    out = qnet_forward(state, packed, placing_action, routing_action)
    jax.block_until_ready(out)

    assert out["now_container_place"].shape == (B, 4, 4)
    assert out["now_request_routing"].shape == (B, 4, 2)

    # Correctness check against a pure-JAX reference with identical rounding.
    ref_place, ref_route = qnet_reference(state, params, placing_action,
                                          routing_action, jnp.bfloat16)
    np.testing.assert_allclose(
        np.asarray(out["now_container_place"]).reshape(B, -1),
        np.asarray(ref_place), rtol=1e-2, atol=1e-2)
    np.testing.assert_allclose(
        np.asarray(out["now_request_routing"]).reshape(B, -1),
        np.asarray(ref_route), rtol=1e-2, atol=1e-2)

    print("KERNEL_OK")
</pallas_src>

<mosaic_0001>
module attributes {stable_mosaic.version = 11 : i64} {
  func.func @qnet_kernel(%arg0: i32, %arg1: memref<256x128xf32, #tpu.memory_space<vmem>>, %arg2: memref<1280x384xbf16, #tpu.memory_space<vmem>>, %arg3: memref<8x384xf32, #tpu.memory_space<vmem>>, %arg4: memref<256x128xf32, #tpu.memory_space<vmem>>) attributes {dimension_semantics = [#tpu.dimension_semantics<parallel>], iteration_bounds = array<i64: 1>, scalar_prefetch = 0 : i64, scratch_operands = 0 : i64, tpu.core_type = #tpu.core_type<tc>, window_params = [{transform_indices = @transform_0, window_bounds = array<i64: 256, 128>}, {pipeline_mode = #tpu.pipeline_mode<synchronous>, transform_indices = @transform_1, window_bounds = array<i64: 1280, 384>}, {pipeline_mode = #tpu.pipeline_mode<synchronous>, transform_indices = @transform_2, window_bounds = array<i64: 8, 384>}, {transform_indices = @transform_3, window_bounds = array<i64: 256, 128>}]} {
    %c0 = arith.constant 0 : index
    %c0_0 = arith.constant 0 : index
    %0 = vector.load %arg1[%c0, %c0_0] : memref<256x128xf32, #tpu.memory_space<vmem>>, vector<256x128xf32>
    %c0_1 = arith.constant 0 : index
    %c0_2 = arith.constant 0 : index
    %1 = vector.load %arg2[%c0_1, %c0_2] : memref<1280x384xbf16, #tpu.memory_space<vmem>>, vector<128x384xbf16>
    %2 = arith.truncf %0 : vector<256x128xf32> to vector<256x128xbf16>
    %cst = arith.constant dense<0.000000e+00> : vector<256x384xf32>
    %3 = tpu.matmul %2, %1, %cst {dimension_numbers = #tpu.dot_dimension_numbers<[1], [0], [0], [1], [0, 0, 1, 1], [], []>} : vector<256x128xbf16>, vector<128x384xbf16>, vector<256x384xf32> -> vector<256x384xf32>
    %c0_3 = arith.constant 0 : index
    %c0_4 = arith.constant 0 : index
    %4 = vector.load %arg3[%c0_3, %c0_4] : memref<8x384xf32, #tpu.memory_space<vmem>>, vector<1x384xf32>
    %5 = vector.broadcast %4 : vector<1x384xf32> to vector<256x384xf32>
    %6 = arith.addf %3, %5 : vector<256x384xf32>
    %cst_5 = arith.constant 0.000000e+00 : f32
    %7 = vector.broadcast %cst_5 : f32 to vector<256x384xf32>
    %8 = arith.maximumf %6, %7 : vector<256x384xf32>
    %c128 = arith.constant 128 : index
    %c0_6 = arith.constant 0 : index
    %9 = vector.load %arg2[%c128, %c0_6] : memref<1280x384xbf16, #tpu.memory_space<vmem>>, vector<384x384xbf16>
    %10 = arith.truncf %8 : vector<256x384xf32> to vector<256x384xbf16>
    %cst_7 = arith.constant dense<0.000000e+00> : vector<256x384xf32>
    %11 = tpu.matmul %10, %9, %cst_7 {dimension_numbers = #tpu.dot_dimension_numbers<[1], [0], [0], [1], [0, 0, 1, 1], [], []>} : vector<256x384xbf16>, vector<384x384xbf16>, vector<256x384xf32> -> vector<256x384xf32>
    %c1 = arith.constant 1 : index
    %c0_8 = arith.constant 0 : index
    %12 = vector.load %arg3[%c1, %c0_8] : memref<8x384xf32, #tpu.memory_space<vmem>>, vector<1x384xf32>
    %13 = vector.broadcast %12 : vector<1x384xf32> to vector<256x384xf32>
    %14 = arith.addf %11, %13 : vector<256x384xf32>
    %cst_9 = arith.constant 0.000000e+00 : f32
    %15 = vector.broadcast %cst_9 : f32 to vector<256x384xf32>
    %16 = arith.maximumf %14, %15 : vector<256x384xf32>
    %c512 = arith.constant 512 : index
    %c0_10 = arith.constant 0 : index
    %17 = vector.load %arg2[%c512, %c0_10] : memref<1280x384xbf16, #tpu.memory_space<vmem>>, vector<384x128xbf16>
    %18 = arith.truncf %16 : vector<256x384xf32> to vector<256x384xbf16>
    %cst_11 = arith.constant dense<0.000000e+00> : vector<256x128xf32>
    %19 = tpu.matmul %18, %17, %cst_11 {dimension_numbers = #tpu.dot_dimension_numbers<[1], [0], [0], [1], [0, 0, 1, 1], [], []>} : vector<256x384xbf16>, vector<384x128xbf16>, vector<256x128xf32> -> vector<256x128xf32>
    %c2 = arith.constant 2 : index
    %c0_12 = arith.constant 0 : index
    %20 = vector.load %arg3[%c2, %c0_12] : memref<8x384xf32, #tpu.memory_space<vmem>>, vector<1x128xf32>
    %21 = vector.broadcast %20 : vector<1x128xf32> to vector<256x128xf32>
    %22 = arith.addf %19, %21 : vector<256x128xf32>
    %cst_13 = arith.constant 0.000000e+00 : f32
    %23 = vector.broadcast %cst_13 : f32 to vector<256x128xf32>
    %24 = arith.maximumf %22, %23 : vector<256x128xf32>
    %c896 = arith.constant 896 : index
    %c0_14 = arith.constant 0 : index
    %25 = vector.load %arg2[%c896, %c0_14] : memref<1280x384xbf16, #tpu.memory_space<vmem>>, vector<128x128xbf16>
    %26 = arith.truncf %24 : vector<256x128xf32> to vector<256x128xbf16>
    %cst_15 = arith.constant dense<0.000000e+00> : vector<256x128xf32>
    %27 = tpu.matmul %26, %25, %cst_15 {dimension_numbers = #tpu.dot_dimension_numbers<[1], [0], [0], [1], [0, 0, 1, 1], [], []>} : vector<256x128xbf16>, vector<128x128xbf16>, vector<256x128xf32> -> vector<256x128xf32>
    %c3 = arith.constant 3 : index
    %c0_16 = arith.constant 0 : index
    %28 = vector.load %arg3[%c3, %c0_16] : memref<8x384xf32, #tpu.memory_space<vmem>>, vector<1x128xf32>
    %29 = vector.broadcast %28 : vector<1x128xf32> to vector<256x128xf32>
    %30 = arith.addf %27, %29 : vector<256x128xf32>
    %cst_17 = arith.constant 0.000000e+00 : f32
    %31 = vector.broadcast %cst_17 : f32 to vector<256x128xf32>
    %32 = arith.maximumf %30, %31 : vector<256x128xf32>
    %c1024 = arith.constant 1024 : index
    %c0_18 = arith.constant 0 : index
    %33 = vector.load %arg2[%c1024, %c0_18] : memref<1280x384xbf16, #tpu.memory_space<vmem>>, vector<128x128xbf16>
    %34 = arith.truncf %32 : vector<256x128xf32> to vector<256x128xbf16>
    %cst_19 = arith.constant dense<0.000000e+00> : vector<256x128xf32>
    %35 = tpu.matmul %34, %33, %cst_19 {dimension_numbers = #tpu.dot_dimension_numbers<[1], [0], [0], [1], [0, 0, 1, 1], [], []>} : vector<256x128xbf16>, vector<128x128xbf16>, vector<256x128xf32> -> vector<256x128xf32>
    %c4 = arith.constant 4 : index
    %c0_20 = arith.constant 0 : index
    %36 = vector.load %arg3[%c4, %c0_20] : memref<8x384xf32, #tpu.memory_space<vmem>>, vector<1x128xf32>
    %37 = vector.broadcast %36 : vector<1x128xf32> to vector<256x128xf32>
    %38 = arith.addf %35, %37 : vector<256x128xf32>
    %39 = arith.negf %38 : vector<256x128xf32>
    %40 = math.exp %39 : vector<256x128xf32>
    %cst_21 = arith.constant 1.000000e+00 : f32
    %41 = vector.broadcast %cst_21 : f32 to vector<256x128xf32>
    %42 = arith.addf %41, %40 : vector<256x128xf32>
    %43 = arith.divf %41, %42 : vector<256x128xf32>
    %c1152 = arith.constant 1152 : index
    %c0_22 = arith.constant 0 : index
    %44 = vector.load %arg2[%c1152, %c0_22] : memref<1280x384xbf16, #tpu.memory_space<vmem>>, vector<128x128xbf16>
    %45 = arith.truncf %43 : vector<256x128xf32> to vector<256x128xbf16>
    %cst_23 = arith.constant dense<0.000000e+00> : vector<256x128xf32>
    %46 = tpu.matmul %45, %44, %cst_23 {dimension_numbers = #tpu.dot_dimension_numbers<[1], [0], [0], [1], [0, 0, 1, 1], [], []>} : vector<256x128xbf16>, vector<128x128xbf16>, vector<256x128xf32> -> vector<256x128xf32>
    %c5 = arith.constant 5 : index
    %c0_24 = arith.constant 0 : index
    %47 = vector.load %arg3[%c5, %c0_24] : memref<8x384xf32, #tpu.memory_space<vmem>>, vector<1x128xf32>
    %48 = vector.broadcast %47 : vector<1x128xf32> to vector<256x128xf32>
    %49 = arith.addf %46, %48 : vector<256x128xf32>
    %c0_25 = arith.constant 0 : index
    %c0_26 = arith.constant 0 : index
    %50 = vector.load %arg4[%c0_25, %c0_26] : memref<256x128xf32, #tpu.memory_space<vmem>>, vector<256x128xf32>
    tpu.vector_store %arg4[%c0_25, %c0_26], %49 {strides = array<i32>} : memref<256x128xf32, #tpu.memory_space<vmem>>, vector<256x128xf32>,
    return
  }
  func.func @transform_0(%arg0: i32) -> (i32, i32) {
    %c0_i32 = arith.constant 0 : i32
    %c0_i32_0 = arith.constant 0 : i32
    return %arg0, %c0_i32 : i32, i32
  }
  func.func @transform_1(%arg0: i32) -> (i32, i32) {
    %c0_i32 = arith.constant 0 : i32
    %c0_i32_0 = arith.constant 0 : i32
    %c0_i32_1 = arith.constant 0 : i32
    return %c0_i32, %c0_i32_0 : i32, i32
  }
  func.func @transform_2(%arg0: i32) -> (i32, i32) {
    %c0_i32 = arith.constant 0 : i32
    %c0_i32_0 = arith.constant 0 : i32
    %c0_i32_1 = arith.constant 0 : i32
    return %c0_i32, %c0_i32_0 : i32, i32
  }
  func.func @transform_3(%arg0: i32) -> (i32, i32) {
    %c0_i32 = arith.constant 0 : i32
    %c0_i32_0 = arith.constant 0 : i32
    return %arg0, %c0_i32 : i32, i32
  }
}

</mosaic_0001>

<llo_original>
// kernel: tpu_custom_call.1
$region0: #{tpu_custom_call.1}
  #allocation0 [shape = 'u32[]', space=smem, size = 0x4, offset = 0x4, fixed_abs, tag = 'smem constant byte address 0x4 - core index']
  #allocation1 [shape = 'u32[144,128]{1,0:T(1,128)}', space=vmem, size = 0x12000, scoped, tag = 'internal scratch']
  %s0 = inlined_call_operand.hbm [shape: f32[256,128], index: 0, kind: input, shape index: {}]
  %s1 = inlined_call_operand.hbm [shape: bf16[1280,384], index: 1, kind: input, shape index: {}]
  %s2 = inlined_call_operand.hbm [shape: f32[8,384], index: 2, kind: input, shape index: {}]
  %s3 = inlined_call_operand.hbm [shape: f32[256,128], index: 3, kind: output, shape index: {}]
  %s4 = sld [smem:[#allocation0]]
  $region34: #{tpu_custom_call.1} parent=0
    _
  %s6 = ssub.s32 1, %s4
  %s7 = scalar_select 0, %s6, %s4
  $region1: #{tpu_custom_call.1} parent=0
    #allocation2 [shape = 'u8[131072]{0}', space=vmem, size = 0x20000, scoped, tag = 'input window, operand 0, single buffered']
    #allocation3 [shape = 's32[1]{0}', space=sflag, size = 0x4, scoped, tag = 'scoped memory for tpu_custom_call.1']
    #allocation4 [shape = 's32[1]{0}', space=sflag, size = 0x4, scoped, tag = 'scoped memory for tpu_custom_call.1']
    #allocation5 [shape = 'u8[983040]{0}', space=vmem, size = 0xf0000, scoped, tag = 'input window, operand 1, single buffered']
    #allocation6 [shape = 's32[1]{0}', space=sflag, size = 0x4, scoped, tag = 'scoped memory for tpu_custom_call.1']
    #allocation7 [shape = 'u8[12288]{0}', space=vmem, size = 0x3000, scoped, tag = 'input window, operand 2, single buffered']
    #allocation8 [shape = 'u8[131072]{0}', space=vmem, size = 0x20000, scoped, tag = 'output window, operand 0, single buffered']
    %8 = vsyncpa [#allocation3], 0
    %9 = vsyncpa [#allocation6], 0
    %10 = vsyncpa [#allocation4], 0
    // Predicated region
    $region2: #{tpu_custom_call.1} parent=1 // pred_check
      _
    $region3: #{tpu_custom_call.1} parent=1 // pred_check_branch
      %12 = sbr.rel (0) target = $region5
    $region4: #{tpu_custom_call.1} parent=1 // pred_region
      %s14 = ssub.s32 4096, 4096
      %15 = vsyncadd [#allocation3], %s14
      %s16 = sshll.u32 [#allocation2], 4
      %s17 = int_to_ptr.vmem [resolvable:$true] %s16
      %22 = dma.hbm_to_vmem [thread:$0]  %s0, 4096, %s17, [#allocation3], 128, 128, 8
    $region5: #{tpu_custom_call.1} parent=1 // pred_fallthru
      _
    // Predicated region
    $region6: #{tpu_custom_call.1} parent=1 // pred_check
      _
    $region7: #{tpu_custom_call.1} parent=1 // pred_check_branch
      %24 = sbr.rel (0) target = $region9
    $region8: #{tpu_custom_call.1} parent=1 // pred_region
      %s26 = ssub.s32 30720, 30720
      %27 = vsyncadd [#allocation6], %s26
      %s28 = sshll.u32 [#allocation5], 4
      %s29 = int_to_ptr.vmem [resolvable:$true] %s28
      %34 = dma.hbm_to_vmem [thread:$0]  %s1, 30720, %s29, [#allocation6], 192, 192, 12
    $region9: #{tpu_custom_call.1} parent=1 // pred_fallthru
      _
    // Predicated region
    $region10: #{tpu_custom_call.1} parent=1 // pred_check
      _
    $region11: #{tpu_custom_call.1} parent=1 // pred_check_branch
      %36 = sbr.rel (0) target = $region13
    $region12: #{tpu_custom_call.1} parent=1 // pred_region
      %s38 = ssub.s32 384, 384
      %39 = vsyncadd [#allocation6], %s38
      %s41 = sshll.u32 [#allocation7], 4
      %s42 = int_to_ptr.vmem [resolvable:$true] %s41
      %44 = dma.hbm_to_vmem [thread:$0]  %s2, 384, %s42, [#allocation6]
    $region13: #{tpu_custom_call.1} parent=1 // pred_fallthru
      _
    // Predicated region
    $region14: #{tpu_custom_call.1} parent=1 // pred_check
      _
    $region15: #{tpu_custom_call.1} parent=1 // pred_check_branch
      %46 = sbr.rel (0) target = $region17
    $region16: #{tpu_custom_call.1} parent=1 // pred_region
      %47 = dma.done [#allocation3], 4096
    $region17: #{tpu_custom_call.1} parent=1 // pred_fallthru
      _
    // Predicated region
    $region18: #{tpu_custom_call.1} parent=1 // pred_check
      _
    $region19: #{tpu_custom_call.1} parent=1 // pred_check_branch
      %49 = sbr.rel (0) target = $region21
    $region20: #{tpu_custom_call.1} parent=1 // pred_region
      %50 = dma.done [#allocation6], 30720
    $region21: #{tpu_custom_call.1} parent=1 // pred_fallthru
      _
    // Predicated region
    $region22: #{tpu_custom_call.1} parent=1 // pred_check
      _
    $region23: #{tpu_custom_call.1} parent=1 // pred_check_branch
      %52 = sbr.rel (0) target = $region25
    $region24: #{tpu_custom_call.1} parent=1 // pred_region
      %53 = dma.done [#allocation6], 384
    $region25: #{tpu_custom_call.1} parent=1 // pred_fallthru
      _
    %v55 = vld [vmem:[#allocation2] sm:$0xff]
    %v56 = vld [vmem:[#allocation2 + $0x8] sm:$0xff]
    %v57 = vld [vmem:[#allocation2 + $0x10] sm:$0xff]
    %v58 = vld [vmem:[#allocation2 + $0x18] sm:$0xff]
    %v59 = vld [vmem:[#allocation2 + $0x20] sm:$0xff]
    %v60 = vld [vmem:[#allocation2 + $0x28] sm:$0xff]
    %v61 = vld [vmem:[#allocation2 + $0x30] sm:$0xff]
    %v62 = vld [vmem:[#allocation2 + $0x38] sm:$0xff]
    %v63 = vld [vmem:[#allocation2 + $0x40] sm:$0xff]
    %v64 = vld [vmem:[#allocation2 + $0x48] sm:$0xff]
    %v65 = vld [vmem:[#allocation2 + $0x50] sm:$0xff]
    %v66 = vld [vmem:[#allocation2 + $0x58] sm:$0xff]
    %v67 = vld [vmem:[#allocation2 + $0x60] sm:$0xff]
    %v68 = vld [vmem:[#allocation2 + $0x68] sm:$0xff]
    %v69 = vld [vmem:[#allocation2 + $0x70] sm:$0xff]
    %v70 = vld [vmem:[#allocation2 + $0x78] sm:$0xff]
    %v71 = vld [vmem:[#allocation2 + $0x80] sm:$0xff]
    %v72 = vld [vmem:[#allocation2 + $0x88] sm:$0xff]
    %v73 = vld [vmem:[#allocation2 + $0x90] sm:$0xff]
    %v74 = vld [vmem:[#allocation2 + $0x98] sm:$0xff]
    %v75 = vld [vmem:[#allocation2 + $0xa0] sm:$0xff]
    %v76 = vld [vmem:[#allocation2 + $0xa8] sm:$0xff]
    %v77 = vld [vmem:[#allocation2 + $0xb0] sm:$0xff]
    %v78 = vld [vmem:[#allocation2 + $0xb8] sm:$0xff]
    %v79 = vld [vmem:[#allocation2 + $0xc0] sm:$0xff]
    %v80 = vld [vmem:[#allocation2 + $0xc8] sm:$0xff]
    %v81 = vld [vmem:[#allocation2 + $0xd0] sm:$0xff]
    %v82 = vld [vmem:[#allocation2 + $0xd8] sm:$0xff]
    %v83 = vld [vmem:[#allocation2 + $0xe0] sm:$0xff]
    %v84 = vld [vmem:[#allocation2 + $0xe8] sm:$0xff]
    %v85 = vld [vmem:[#allocation2 + $0xf0] sm:$0xff]
    %v86 = vld [vmem:[#allocation2 + $0xf8] sm:$0xff]
    %v87 = vld [vmem:[#allocation5] sm:$0xff]
    %v88 = vld [vmem:[#allocation5 + $0x8] sm:$0xf]
    %v89 = vld [vmem:[#allocation5 + $0xc] sm:$0xff]
    %v90 = vld [vmem:[#allocation5 + $0x14] sm:$0xf]
    %v91 = vld [vmem:[#allocation5 + $0x18] sm:$0xff]
    %v92 = vld [vmem:[#allocation5 + $0x20] sm:$0xf]
    %v93 = vld [vmem:[#allocation5 + $0x24] sm:$0xff]
    %v94 = vld [vmem:[#allocation5 + $0x2c] sm:$0xf]
    %v95 = vld [vmem:[#allocation5 + $0x30] sm:$0xff]
    %v96 = vld [vmem:[#allocation5 + $0x38] sm:$0xf]
    %v97 = vld [vmem:[#allocation5 + $0x3c] sm:$0xff]
    %v98 = vld [vmem:[#allocation5 + $0x44] sm:$0xf]
    %v99 = vld [vmem:[#allocation5 + $0x48] sm:$0xff]
    %v100 = vld [vmem:[#allocation5 + $0x50] sm:$0xf]
    %v101 = vld [vmem:[#allocation5 + $0x54] sm:$0xff]
    %v102 = vld [vmem:[#allocation5 + $0x5c] sm:$0xf]
    %v103 = vld [vmem:[#allocation5 + $0x60] sm:$0xff]
    %v104 = vld [vmem:[#allocation5 + $0x68] sm:$0xf]
    %v105 = vld [vmem:[#allocation5 + $0x6c] sm:$0xff]
    %v106 = vld [vmem:[#allocation5 + $0x74] sm:$0xf]
    %v107 = vld [vmem:[#allocation5 + $0x78] sm:$0xff]
    %v108 = vld [vmem:[#allocation5 + $0x80] sm:$0xf]
    %v109 = vld [vmem:[#allocation5 + $0x84] sm:$0xff]
    %v110 = vld [vmem:[#allocation5 + $0x8c] sm:$0xf]
    %v111 = vld [vmem:[#allocation5 + $0x90] sm:$0xff]
    %v112 = vld [vmem:[#allocation5 + $0x98] sm:$0xf]
    %v113 = vld [vmem:[#allocation5 + $0x9c] sm:$0xff]
    %v114 = vld [vmem:[#allocation5 + $0xa4] sm:$0xf]
    %v115 = vld [vmem:[#allocation5 + $0xa8] sm:$0xff]
    %v116 = vld [vmem:[#allocation5 + $0xb0] sm:$0xf]
    %v117 = vld [vmem:[#allocation5 + $0xb4] sm:$0xff]
    %v118 = vld [vmem:[#allocation5 + $0xbc] sm:$0xf]
    %v119 = vpack.c.bf16 %v56, %v55
    %v120 = vpack.c.bf16 %v58, %v57
    %v121 = vpack.c.bf16 %v60, %v59
    %v122 = vpack.c.bf16 %v62, %v61
    %v123 = vpack.c.bf16 %v64, %v63
    %v124 = vpack.c.bf16 %v66, %v65
    %v125 = vpack.c.bf16 %v68, %v67
    %v126 = vpack.c.bf16 %v70, %v69
    %v127 = vpack.c.bf16 %v72, %v71
    %v128 = vpack.c.bf16 %v74, %v73
    %v129 = vpack.c.bf16 %v76, %v75
    %v130 = vpack.c.bf16 %v78, %v77
    %v131 = vpack.c.bf16 %v80, %v79
    %v132 = vpack.c.bf16 %v82, %v81
    %v133 = vpack.c.bf16 %v84, %v83
    %v134 = vpack.c.bf16 %v86, %v85
    %v135 = vld [vmem:[#allocation7] ss:$8 sm:$0x7]
    %v137 = vlaneseq
    %v138 = vshrl.u32 %v137, 7
    %v139 = vsub.s32 0, %v138
    %v140 = vrot.slane %v135, %v139
    %v141 = vlaneseq
    %v142 = vshrl.u32 %v141, 7
    %v143 = vsub.s32 1, %v142
    %v144 = vrot.slane %v135, %v143
    %v145 = vlaneseq
    %v146 = vshrl.u32 %v145, 7
    %v147 = vsub.s32 2, %v146
    %v148 = vrot.slane %v135, %v147
    %v184 = vunpack.c.l.b16 %v87
    %v185 = vunpack.c.h.b16 %v87
    %v186 = vunpack.c.l.b16 %v88
    %v187 = vunpack.c.l.b16 %v89
    %v188 = vunpack.c.h.b16 %v89
    %v189 = vunpack.c.l.b16 %v90
    %v190 = vunpack.c.l.b16 %v91
    %v191 = vunpack.c.h.b16 %v91
    %v192 = vunpack.c.l.b16 %v92
    %v193 = vunpack.c.l.b16 %v93
    %v194 = vunpack.c.h.b16 %v93
    %v195 = vunpack.c.l.b16 %v94
    %v196 = vunpack.c.l.b16 %v95
    %v197 = vunpack.c.h.b16 %v95
    %v198 = vunpack.c.l.b16 %v96
    %v199 = vunpack.c.l.b16 %v97
    %v200 = vunpack.c.h.b16 %v97
    %v201 = vunpack.c.l.b16 %v98
    %v202 = vunpack.c.l.b16 %v99
    %v203 = vunpack.c.h.b16 %v99
    %v204 = vunpack.c.l.b16 %v100
    %v205 = vunpack.c.l.b16 %v101
    %v206 = vunpack.c.h.b16 %v101
    %v207 = vunpack.c.l.b16 %v102
    %v208 = vunpack.c.l.b16 %v103
    %v209 = vunpack.c.h.b16 %v103
    %v210 = vunpack.c.l.b16 %v104
    %v211 = vunpack.c.l.b16 %v105
    %v212 = vunpack.c.h.b16 %v105
    %v213 = vunpack.c.l.b16 %v106
    %v214 = vunpack.c.l.b16 %v107
    %v215 = vunpack.c.h.b16 %v107
    %v216 = vunpack.c.l.b16 %v108
    %v217 = vunpack.c.l.b16 %v109
    %v218 = vunpack.c.h.b16 %v109
    %v219 = vunpack.c.l.b16 %v110
    %v220 = vunpack.c.l.b16 %v111
    %v221 = vunpack.c.h.b16 %v111
    %v222 = vunpack.c.l.b16 %v112
    %v223 = vunpack.c.l.b16 %v113
    %v224 = vunpack.c.h.b16 %v113
    %v225 = vunpack.c.l.b16 %v114
    %v226 = vunpack.c.l.b16 %v115
    %v227 = vunpack.c.h.b16 %v115
    %v228 = vunpack.c.l.b16 %v116
    %v229 = vunpack.c.l.b16 %v117
    %v230 = vunpack.c.h.b16 %v117
    %v231 = vunpack.c.l.b16 %v118
    %v232 = vpack.c.b16 %v187, %v184
    %v233 = vpack.c.b16 %v188, %v185
    %v234 = vpack.c.b16 %v189, %v186
    %v235 = vpack.c.b16 %v193, %v190
    %v236 = vpack.c.b16 %v194, %v191
    %v237 = vpack.c.b16 %v195, %v192
    %v238 = vpack.c.b16 %v199, %v196
    %v239 = vpack.c.b16 %v200, %v197
    %v240 = vpack.c.b16 %v201, %v198
    %v241 = vpack.c.b16 %v205, %v202
    %v242 = vpack.c.b16 %v206, %v203
    %v243 = vpack.c.b16 %v207, %v204
    %v244 = vpack.c.b16 %v211, %v208
    %v245 = vpack.c.b16 %v212, %v209
    %v246 = vpack.c.b16 %v213, %v210
    %v247 = vpack.c.b16 %v217, %v214
    %v248 = vpack.c.b16 %v218, %v215
    %v249 = vpack.c.b16 %v219, %v216
    %v250 = vpack.c.b16 %v223, %v220
    %v251 = vpack.c.b16 %v224, %v221
    %v252 = vpack.c.b16 %v225, %v222
    %v253 = vpack.c.b16 %v229, %v226
    %v254 = vpack.c.b16 %v230, %v227
    %v255 = vpack.c.b16 %v231, %v228
    %280 = vmatprep.subr.bf16.mxu0 %v254
    %281 = vmatpush1.bf16.msra.mxu0 %v253
    %282 = vmatprep.subr.bf16.mxu0 %v251
    %283 = vmatpush1.bf16.msra.mxu0 %v250
    %284 = vmatprep.subr.bf16.mxu0 %v248
    %285 = vmatpush1.bf16.msra.mxu0 %v247
    %286 = vmatprep.subr.bf16.mxu0 %v245
    %287 = vmatpush1.bf16.msra.mxu0 %v244
    %288 = vmatprep.subr.bf16.mxu0 %v242
    %289 = vmatpush1.bf16.msra.mxu0 %v241
    %290 = vmatprep.subr.bf16.mxu0 %v239
    %291 = vmatpush1.bf16.msra.mxu0 %v238
    %292 = vmatprep.subr.bf16.mxu0 %v236
    %293 = vmatpush1.bf16.msra.mxu0 %v235
    %294 = vmatprep.subr.bf16.mxu0 %v233
    %295 = vmatpush1.bf16.msra.mxu0 %v232
    %296 = vmatprep.subr.bf16.mxu0 0
    %297 = vmatpush2.bf16.msra.mxu0 0
    %298 = vmatprep.subr.bf16.mxu0 0
    %299 = vmatpush2.bf16.msra.mxu0 0
    %300 = vmatprep.subr.bf16.mxu0 0
    %301 = vmatpush2.bf16.msra.mxu0 0
    %302 = vmatprep.subr.bf16.mxu0 0
    %303 = vmatpush2.bf16.msra.mxu0 0
    %304 = vmatprep.subr.bf16.mxu0 0
    %305 = vmatpush2.bf16.msra.mxu0 0
    %306 = vmatprep.subr.bf16.mxu0 0
    %307 = vmatpush2.bf16.msra.mxu0 0
    %308 = vmatprep.subr.bf16.mxu0 0
    %309 = vmatpush2.bf16.msra.mxu0 0
    %310 = vmatprep.subr.bf16.mxu0 0
    %311 = vmatpush2.bf16.msra.mxu0 0
    %312 = vmatprep.mubr.bf16.mxu0 0
    %313 = vmatmul.mubr.bf16.gmra.mxu0 %v119
    %v314 = vpop.f32.mrf.mxu0
    %v315 = vadd.f32 %v140, %v314
    %v316 = vpop.f32.mrf.mxu0
    %v317 = vadd.f32 %v144, %v316
    %v318 = vpop.f32.mrf.mxu0
    %v319 = vadd.f32 %v140, %v318
    %v320 = vpop.f32.mrf.mxu0
    %v321 = vadd.f32 %v144, %v320
    %322 = vmatprep.mubr.bf16.mxu0 0
    %323 = vmatmul.mubr.bf16.gmra.mxu0 %v120
    %v324 = vpop.f32.mrf.mxu0
    %v325 = vadd.f32 %v140, %v324
    %v326 = vpop.f32.mrf.mxu0
    %v327 = vadd.f32 %v144, %v326
    %v328 = vpop.f32.mrf.mxu0
    %v329 = vadd.f32 %v140, %v328
    %v330 = vpop.f32.mrf.mxu0
    %v331 = vadd.f32 %v144, %v330
    %332 = vmatprep.mubr.bf16.mxu0 0
    %333 = vmatmul.mubr.bf16.gmra.mxu0 %v121
    %v334 = vpop.f32.mrf.mxu0
    %v335 = vadd.f32 %v140, %v334
    %v336 = vpop.f32.mrf.mxu0
    %v337 = vadd.f32 %v144, %v336
    %v338 = vpop.f32.mrf.mxu0
    %v339 = vadd.f32 %v140, %v338
    %v340 = vpop.f32.mrf.mxu0
    %v341 = vadd.f32 %v144, %v340
    %342 = vmatprep.mubr.bf16.mxu0 0
    %343 = vmatmul.mubr.bf16.gmra.mxu0 %v122
    %v344 = vpop.f32.mrf.mxu0
    %v345 = vadd.f32 %v140, %v344
    %v346 = vpop.f32.mrf.mxu0
    %v347 = vadd.f32 %v144, %v346
    %v348 = vpop.f32.mrf.mxu0
    %v349 = vadd.f32 %v140, %v348
    %v350 = vpop.f32.mrf.mxu0
    %v351 = vadd.f32 %v144, %v350
    %352 = vmatprep.mubr.bf16.mxu0 0
    %353 = vmatmul.mubr.bf16.gmra.mxu0 %v123
    %v354 = vpop.f32.mrf.mxu0
    %v355 = vadd.f32 %v140, %v354
    %v356 = vpop.f32.mrf.mxu0
    %v357 = vadd.f32 %v144, %v356
    %v358 = vpop.f32.mrf.mxu0
    %v359 = vadd.f32 %v140, %v358
    %v360 = vpop.f32.mrf.mxu0
    %v361 = vadd.f32 %v144, %v360
    %362 = vmatprep.mubr.bf16.mxu0 0
    %363 = vmatmul.mubr.bf16.gmra.mxu0 %v124
    %v364 = vpop.f32.mrf.mxu0
    %v365 = vadd.f32 %v140, %v364
    %v366 = vpop.f32.mrf.mxu0
    %v367 = vadd.f32 %v144, %v366
    %v368 = vpop.f32.mrf.mxu0
    %v369 = vadd.f32 %v140, %v368
    %v370 = vpop.f32.mrf.mxu0
    %v371 = vadd.f32 %v144, %v370
    %372 = vmatprep.mubr.bf16.mxu0 0
    %373 = vmatmul.mubr.bf16.gmra.mxu0 %v125
    %v374 = vpop.f32.mrf.mxu0
    %v375 = vadd.f32 %v140, %v374
    %v376 = vpop.f32.mrf.mxu0
    %v377 = vadd.f32 %v144, %v376
    %v378 = vpop.f32.mrf.mxu0
    %v379 = vadd.f32 %v140, %v378
    %v380 = vpop.f32.mrf.mxu0
    %v381 = vadd.f32 %v144, %v380
    %382 = vmatprep.mubr.bf16.mxu0 0
    %383 = vmatmul.mubr.bf16.gmra.mxu0 %v126
    %v384 = vpop.f32.mrf.mxu0
    %v385 = vadd.f32 %v140, %v384
    %v386 = vpop.f32.mrf.mxu0
    %v387 = vadd.f32 %v144, %v386
    %v388 = vpop.f32.mrf.mxu0
    %v389 = vadd.f32 %v140, %v388
    %v390 = vpop.f32.mrf.mxu0
    %v391 = vadd.f32 %v144, %v390
    %392 = vmatprep.mubr.bf16.mxu0 0
    %393 = vmatmul.mubr.bf16.gmra.mxu0 %v127
    %v394 = vpop.f32.mrf.mxu0
    %v395 = vadd.f32 %v140, %v394
    %v396 = vpop.f32.mrf.mxu0
    %v397 = vadd.f32 %v144, %v396
    %v398 = vpop.f32.mrf.mxu0
    %v399 = vadd.f32 %v140, %v398
    %v400 = vpop.f32.mrf.mxu0
    %v401 = vadd.f32 %v144, %v400
    %402 = vmatprep.mubr.bf16.mxu0 0
    %403 = vmatmul.mubr.bf16.gmra.mxu0 %v128
    %v404 = vpop.f32.mrf.mxu0
    %v405 = vadd.f32 %v140, %v404
    %v406 = vpop.f32.mrf.mxu0
    %v407 = vadd.f32 %v144, %v406
    %v408 = vpop.f32.mrf.mxu0
    %v409 = vadd.f32 %v140, %v408
    %v410 = vpop.f32.mrf.mxu0
    %v411 = vadd.f32 %v144, %v410
    %412 = vmatprep.mubr.bf16.mxu0 0
    %413 = vmatmul.mubr.bf16.gmra.mxu0 %v129
    %v414 = vpop.f32.mrf.mxu0
    %v415 = vadd.f32 %v140, %v414
    %v416 = vpop.f32.mrf.mxu0
    %v417 = vadd.f32 %v144, %v416
    %v418 = vpop.f32.mrf.mxu0
    %v419 = vadd.f32 %v140, %v418
    %v420 = vpop.f32.mrf.mxu0
    %v421 = vadd.f32 %v144, %v420
    %422 = vmatprep.mubr.bf16.mxu0 0
    %423 = vmatmul.mubr.bf16.gmra.mxu0 %v130
    %v424 = vpop.f32.mrf.mxu0
    %v425 = vadd.f32 %v140, %v424
    %v426 = vpop.f32.mrf.mxu0
    %v427 = vadd.f32 %v144, %v426
    %v428 = vpop.f32.mrf.mxu0
    %v429 = vadd.f32 %v140, %v428
    %v430 = vpop.f32.mrf.mxu0
    %v431 = vadd.f32 %v144, %v430
    %432 = vmatprep.mubr.bf16.mxu0 0
    %433 = vmatmul.mubr.bf16.gmra.mxu0 %v131
    %v434 = vpop.f32.mrf.mxu0
    %v435 = vadd.f32 %v140, %v434
    %v436 = vpop.f32.mrf.mxu0
    %v437 = vadd.f32 %v144, %v436
    %v438 = vpop.f32.mrf.mxu0
    %v439 = vadd.f32 %v140, %v438
    %v440 = vpop.f32.mrf.mxu0
    %v441 = vadd.f32 %v144, %v440
    %442 = vmatprep.mubr.bf16.mxu0 0
    %443 = vmatmul.mubr.bf16.gmra.mxu0 %v132
    %v444 = vpop.f32.mrf.mxu0
    %v445 = vadd.f32 %v140, %v444
    %v446 = vpop.f32.mrf.mxu0
    %v447 = vadd.f32 %v144, %v446
    %v448 = vpop.f32.mrf.mxu0
    %v449 = vadd.f32 %v140, %v448
    %v450 = vpop.f32.mrf.mxu0
    %v451 = vadd.f32 %v144, %v450
    %452 = vmatprep.mubr.bf16.mxu0 0
    %453 = vmatmul.mubr.bf16.gmra.mxu0 %v133
    %v454 = vpop.f32.mrf.mxu0
    %v455 = vadd.f32 %v140, %v454
    %v456 = vpop.f32.mrf.mxu0
    %v457 = vadd.f32 %v144, %v456
    %v458 = vpop.f32.mrf.mxu0
    %v459 = vadd.f32 %v140, %v458
    %v460 = vpop.f32.mrf.mxu0
    %v461 = vadd.f32 %v144, %v460
    %462 = vmatprep.mubr.bf16.mxu0 0
    %463 = vmatmul.mubr.bf16.gmra.mxu0 %v134
    %v464 = vpop.f32.mrf.mxu0
    %v465 = vadd.f32 %v140, %v464
    %v466 = vpop.f32.mrf.mxu0
    %v467 = vadd.f32 %v144, %v466
    %v468 = vpop.f32.mrf.mxu0
    %v469 = vadd.f32 %v140, %v468
    %v470 = vpop.f32.mrf.mxu0
    %v471 = vadd.f32 %v144, %v470
    %472 = vdwg.mxu0
    %473 = vmatprep.subr.bf16.mxu0 0
    %474 = vmatpush1.bf16.msra.mxu0 %v255
    %475 = vmatprep.subr.bf16.mxu0 0
    %476 = vmatpush1.bf16.msra.mxu0 %v252
    %477 = vmatprep.subr.bf16.mxu0 0
    %478 = vmatpush1.bf16.msra.mxu0 %v249
    %479 = vmatprep.subr.bf16.mxu0 0
    %480 = vmatpush1.bf16.msra.mxu0 %v246
    %481 = vmatprep.subr.bf16.mxu0 0
    %482 = vmatpush1.bf16.msra.mxu0 %v243
    %483 = vmatprep.subr.bf16.mxu0 0
    %484 = vmatpush1.bf16.msra.mxu0 %v240
    %485 = vmatprep.subr.bf16.mxu0 0
    %486 = vmatpush1.bf16.msra.mxu0 %v237
    %487 = vmatprep.subr.bf16.mxu0 0
    %488 = vmatpush1.bf16.msra.mxu0 %v234
    %489 = vmatprep.subr.bf16.mxu0 0
    %490 = vmatpush2.bf16.msra.mxu0 0
    %491 = vmatprep.subr.bf16.mxu0 0
    %492 = vmatpush2.bf16.msra.mxu0 0
    %493 = vmatprep.subr.bf16.mxu0 0
    %494 = vmatpush2.bf16.msra.mxu0 0
    %495 = vmatprep.subr.bf16.mxu0 0
    %496 = vmatpush2.bf16.msra.mxu0 0
    %497 = vmatprep.subr.bf16.mxu0 0
    %498 = vmatpush2.bf16.msra.mxu0 0
    %499 = vmatprep.subr.bf16.mxu0 0
    %500 = vmatpush2.bf16.msra.mxu0 0
    %501 = vmatprep.subr.bf16.mxu0 0
    %502 = vmatpush2.bf16.msra.mxu0 0
    %503 = vmatprep.subr.bf16.mxu0 0
    %504 = vmatpush2.bf16.msra.mxu0 0
    %505 = vmatprep.mubr.bf16.mxu0 0
    %506 = vmatmul.mubr.bf16.gmra.mxu0 %v119
    %v507 = vpop.f32.mrf.mxu0
    %v508 = vadd.f32 %v148, %v507
    %v509 = vpop.f32.mrf.mxu0
    %v510 = vpop.f32.mrf.mxu0
    %v511 = vadd.f32 %v148, %v510
    %v512 = vpop.f32.mrf.mxu0
    %513 = vmatprep.mubr.bf16.mxu0 0
    %514 = vmatmul.mubr.bf16.gmra.mxu0 %v120
    %v515 = vpop.f32.mrf.mxu0
    %v516 = vadd.f32 %v148, %v515
    %v517 = vpop.f32.mrf.mxu0
    %v518 = vpop.f32.mrf.mxu0
    %v519 = vadd.f32 %v148, %v518
    %v520 = vpop.f32.mrf.mxu0
    %521 = vmatprep.mubr.bf16.mxu0 0
    %522 = vmatmul.mubr.bf16.gmra.mxu0 %v121
    %v523 = vpop.f32.mrf.mxu0
    %v524 = vadd.f32 %v148, %v523
    %v525 = vpop.f32.mrf.mxu0
    %v526 = vpop.f32.mrf.mxu0
    %v527 = vadd.f32 %v148, %v526
    %v528 = vpop.f32.mrf.mxu0
    %529 = vmatprep.mubr.bf16.mxu0 0
    %530 = vmatmul.mubr.bf16.gmra.mxu0 %v122
    %v531 = vpop.f32.mrf.mxu0
    %v532 = vadd.f32 %v148, %v531
    %v533 = vpop.f32.mrf.mxu0
    %v534 = vpop.f32.mrf.mxu0
    %v535 = vadd.f32 %v148, %v534
    %v536 = vpop.f32.mrf.mxu0
    %537 = vmatprep.mubr.bf16.mxu0 0
    %538 = vmatmul.mubr.bf16.gmra.mxu0 %v123
    %v539 = vpop.f32.mrf.mxu0
    %v540 = vadd.f32 %v148, %v539
    %v541 = vpop.f32.mrf.mxu0
    %v542 = vpop.f32.mrf.mxu0
    %v543 = vadd.f32 %v148, %v542
    %v544 = vpop.f32.mrf.mxu0
    %545 = vmatprep.mubr.bf16.mxu0 0
    %546 = vmatmul.mubr.bf16.gmra.mxu0 %v124
    %v547 = vpop.f32.mrf.mxu0
    %v548 = vadd.f32 %v148, %v547
    %v549 = vpop.f32.mrf.mxu0
    %v550 = vpop.f32.mrf.mxu0
    %v551 = vadd.f32 %v148, %v550
    %v552 = vpop.f32.mrf.mxu0
    %553 = vmatprep.mubr.bf16.mxu0 0
    %554 = vmatmul.mubr.bf16.gmra.mxu0 %v125
    %v555 = vpop.f32.mrf.mxu0
    %v556 = vadd.f32 %v148, %v555
    %v557 = vpop.f32.mrf.mxu0
    %v558 = vpop.f32.mrf.mxu0
    %v559 = vadd.f32 %v148, %v558
    %v560 = vpop.f32.mrf.mxu0
    %561 = vmatprep.mubr.bf16.mxu0 0
    %562 = vmatmul.mubr.bf16.gmra.mxu0 %v126
    %v563 = vpop.f32.mrf.mxu0
    %v564 = vadd.f32 %v148, %v563
    %v565 = vpop.f32.mrf.mxu0
    %v566 = vpop.f32.mrf.mxu0
    %v567 = vadd.f32 %v148, %v566
    %v568 = vpop.f32.mrf.mxu0
    %569 = vmatprep.mubr.bf16.mxu0 0
    %570 = vmatmul.mubr.bf16.gmra.mxu0 %v127
    %v571 = vpop.f32.mrf.mxu0
    %v572 = vadd.f32 %v148, %v571
    %v573 = vpop.f32.mrf.mxu0
    %v574 = vpop.f32.mrf.mxu0
    %v575 = vadd.f32 %v148, %v574
    %v576 = vpop.f32.mrf.mxu0
    %577 = vmatprep.mubr.bf16.mxu0 0
    %578 = vmatmul.mubr.bf16.gmra.mxu0 %v128
    %v579 = vpop.f32.mrf.mxu0
    %v580 = vadd.f32 %v148, %v579
    %v581 = vpop.f32.mrf.mxu0
    %v582 = vpop.f32.mrf.mxu0
    %v583 = vadd.f32 %v148, %v582
    %v584 = vpop.f32.mrf.mxu0
    %585 = vmatprep.mubr.bf16.mxu0 0
    %586 = vmatmul.mubr.bf16.gmra.mxu0 %v129
    %v587 = vpop.f32.mrf.mxu0
    %v588 = vadd.f32 %v148, %v587
    %v589 = vpop.f32.mrf.mxu0
    %v590 = vpop.f32.mrf.mxu0
    %v591 = vadd.f32 %v148, %v590
    %v592 = vpop.f32.mrf.mxu0
    %593 = vmatprep.mubr.bf16.mxu0 0
    %594 = vmatmul.mubr.bf16.gmra.mxu0 %v130
    %v595 = vpop.f32.mrf.mxu0
    %v596 = vadd.f32 %v148, %v595
    %v597 = vpop.f32.mrf.mxu0
    %v598 = vpop.f32.mrf.mxu0
    %v599 = vadd.f32 %v148, %v598
    %v600 = vpop.f32.mrf.mxu0
    %601 = vmatprep.mubr.bf16.mxu0 0
    %602 = vmatmul.mubr.bf16.gmra.mxu0 %v131
    %v603 = vpop.f32.mrf.mxu0
    %v604 = vadd.f32 %v148, %v603
    %v605 = vpop.f32.mrf.mxu0
    %v606 = vpop.f32.mrf.mxu0
    %v607 = vadd.f32 %v148, %v606
    %v608 = vpop.f32.mrf.mxu0
    %609 = vmatprep.mubr.bf16.mxu0 0
    %610 = vmatmul.mubr.bf16.gmra.mxu0 %v132
    %v611 = vpop.f32.mrf.mxu0
    %v612 = vadd.f32 %v148, %v611
    %v613 = vpop.f32.mrf.mxu0
    %v614 = vpop.f32.mrf.mxu0
    %v615 = vadd.f32 %v148, %v614
    %v616 = vpop.f32.mrf.mxu0
    %617 = vmatprep.mubr.bf16.mxu0 0
    %618 = vmatmul.mubr.bf16.gmra.mxu0 %v133
    %v619 = vpop.f32.mrf.mxu0
    %v620 = vadd.f32 %v148, %v619
    %v621 = vpop.f32.mrf.mxu0
    %v622 = vpop.f32.mrf.mxu0
    %v623 = vadd.f32 %v148, %v622
    %v624 = vpop.f32.mrf.mxu0
    %625 = vmatprep.mubr.bf16.mxu0 0
    %626 = vmatmul.mubr.bf16.gmra.mxu0 %v134
    %v627 = vpop.f32.mrf.mxu0
    %v628 = vadd.f32 %v148, %v627
    %v629 = vpop.f32.mrf.mxu0
    %v630 = vpop.f32.mrf.mxu0
    %v631 = vadd.f32 %v148, %v630
    %v632 = vpop.f32.mrf.mxu0
    %633 = vdwg.mxu0
    %v634 = vmax.f32 %v315, 0.0
    %v635 = vmax.f32 %v317, 0.0
    %v636 = vmax.f32 %v508, 0.0
    %v637 = vmax.f32 %v319, 0.0
    %v638 = vmax.f32 %v321, 0.0
    %v639 = vmax.f32 %v511, 0.0
    %v640 = vmax.f32 %v325, 0.0
    %v641 = vmax.f32 %v327, 0.0
    %v642 = vmax.f32 %v516, 0.0
    %v643 = vmax.f32 %v329, 0.0
    %v644 = vmax.f32 %v331, 0.0
    %v645 = vmax.f32 %v519, 0.0
    %v646 = vmax.f32 %v335, 0.0
    %v647 = vmax.f32 %v337, 0.0
    %v648 = vmax.f32 %v524, 0.0
    %v649 = vmax.f32 %v339, 0.0
    %v650 = vmax.f32 %v341, 0.0
    %v651 = vmax.f32 %v527, 0.0
    %v652 = vmax.f32 %v345, 0.0
    %v653 = vmax.f32 %v347, 0.0
    %v654 = vmax.f32 %v532, 0.0
    %v655 = vmax.f32 %v349, 0.0
    %v656 = vmax.f32 %v351, 0.0
    %v657 = vmax.f32 %v535, 0.0
    %v658 = vmax.f32 %v355, 0.0
    %v659 = vmax.f32 %v357, 0.0
    %v660 = vmax.f32 %v540, 0.0
    %v661 = vmax.f32 %v359, 0.0
    %v662 = vmax.f32 %v361, 0.0
    %v663 = vmax.f32 %v543, 0.0
    %v664 = vmax.f32 %v365, 0.0
    %v665 = vmax.f32 %v367, 0.0
    %v666 = vmax.f32 %v548, 0.0
    %v667 = vmax.f32 %v369, 0.0
    %v668 = vmax.f32 %v371, 0.0
    %v669 = vmax.f32 %v551, 0.0
    %v670 = vmax.f32 %v375, 0.0
    %v671 = vmax.f32 %v377, 0.0
    %v672 = vmax.f32 %v556, 0.0
    %v673 = vmax.f32 %v379, 0.0
    %v674 = vmax.f32 %v381, 0.0
    %v675 = vmax.f32 %v559, 0.0
    %v676 = vmax.f32 %v385, 0.0
    %v677 = vmax.f32 %v387, 0.0
    %v678 = vmax.f32 %v564, 0.0
    %v679 = vmax.f32 %v389, 0.0
    %v680 = vmax.f32 %v391, 0.0
    %v681 = vmax.f32 %v567, 0.0
    %v682 = vmax.f32 %v395, 0.0
    %v683 = vmax.f32 %v397, 0.0
    %v684 = vmax.f32 %v572, 0.0
    %v685 = vmax.f32 %v399, 0.0
    %v686 = vmax.f32 %v401, 0.0
    %v687 = vmax.f32 %v575, 0.0
    %v688 = vmax.f32 %v405, 0.0
    %v689 = vmax.f32 %v407, 0.0
    %v690 = vmax.f32 %v580, 0.0
    %v691 = vmax.f32 %v409, 0.0
    %v692 = vmax.f32 %v411, 0.0
    %v693 = vmax.f32 %v583, 0.0
    %v694 = vmax.f32 %v415, 0.0
    %v695 = vmax.f32 %v417, 0.0
    %v696 = vmax.f32 %v588, 0.0
    %v697 = vmax.f32 %v419, 0.0
    %v698 = vmax.f32 %v421, 0.0
    %v699 = vmax.f32 %v591, 0.0
    %v700 = vmax.f32 %v425, 0.0
    %v701 = vmax.f32 %v427, 0.0
    %v702 = vmax.f32 %v596, 0.0
    %v703 = vmax.f32 %v429, 0.0
    %v704 = vmax.f32 %v431, 0.0
    %v705 = vmax.f32 %v599, 0.0
    %v706 = vmax.f32 %v435, 0.0
    %v707 = vmax.f32 %v437, 0.0
    %v708 = vmax.f32 %v604, 0.0
    %v709 = vmax.f32 %v439, 0.0
    %v710 = vmax.f32 %v441, 0.0
    %v711 = vmax.f32 %v607, 0.0
    %v712 = vmax.f32 %v445, 0.0
    %v713 = vmax.f32 %v447, 0.0
    %v714 = vmax.f32 %v612, 0.0
    %v715 = vmax.f32 %v449, 0.0
    %v716 = vmax.f32 %v451, 0.0
    %v717 = vmax.f32 %v615, 0.0
    %v718 = vmax.f32 %v455, 0.0
    %v719 = vmax.f32 %v457, 0.0
    %v720 = vmax.f32 %v620, 0.0
    %v721 = vmax.f32 %v459, 0.0
    %v722 = vmax.f32 %v461, 0.0
    %v723 = vmax.f32 %v623, 0.0
    %v724 = vmax.f32 %v465, 0.0
    %v725 = vmax.f32 %v467, 0.0
    %v726 = vmax.f32 %v628, 0.0
    %v727 = vmax.f32 %v469, 0.0
    %v728 = vmax.f32 %v471, 0.0
    %v729 = vmax.f32 %v631, 0.0
    %v730 = vld [vmem:[#allocation5 + $0xc0] sm:$0xff]
    %v731 = vld [vmem:[#allocation5 + $0xc8] sm:$0xf]
    %v732 = vld [vmem:[#allocation5 + $0xcc] sm:$0xff]
    %v733 = vld [vmem:[#allocation5 + $0xd4] sm:$0xf]
    %v734 = vld [vmem:[#allocation5 + $0xd8] sm:$0xff]
    %v735 = vld [vmem:[#allocation5 + $0xe0] sm:$0xf]
    %v736 = vld [vmem:[#allocation5 + $0xe4] sm:$0xff]
    %v737 = vld [vmem:[#allocation5 + $0xec] sm:$0xf]
    %v738 = vld [vmem:[#allocation5 + $0xf0] sm:$0xff]
    %v739 = vld [vmem:[#allocation5 + $0xf8] sm:$0xf]
    %v740 = vld [vmem:[#allocation5 + $0xfc] sm:$0xff]
    %v741 = vld [vmem:[#allocation5 + $0x104] sm:$0xf]
    %v742 = vld [vmem:[#allocation5 + $0x108] sm:$0xff]
    %v743 = vld [vmem:[#allocation5 + $0x110] sm:$0xf]
    %v744 = vld [vmem:[#allocation5 + $0x114] sm:$0xff]
    %v745 = vld [vmem:[#allocation5 + $0x11c] sm:$0xf]
    %v746 = vld [vmem:[#allocation5 + $0x120] sm:$0xff]
    %v747 = vld [vmem:[#allocation5 + $0x128] sm:$0xf]
    %v748 = vld [vmem:[#allocation5 + $0x12c] sm:$0xff]
    %v749 = vld [vmem:[#allocation5 + $0x134] sm:$0xf]
    %v750 = vld [vmem:[#allocation5 + $0x138] sm:$0xff]
    %v751 = vld [vmem:[#allocation5 + $0x140] sm:$0xf]
    %v752 = vld [vmem:[#allocation5 + $0x144] sm:$0xff]
    %v753 = vld [vmem:[#allocation5 + $0x14c] sm:$0xf]
    %v754 = vld [vmem:[#allocation5 + $0x150] sm:$0xff]
    %v755 = vld [vmem:[#allocation5 + $0x158] sm:$0xf]
    %v756 = vld [vmem:[#allocation5 + $0x15c] sm:$0xff]
    %v757 = vld [vmem:[#allocation5 + $0x164] sm:$0xf]
    %v758 = vld [vmem:[#allocation5 + $0x168] sm:$0xff]
    %v759 = vld [vmem:[#allocation5 + $0x170] sm:$0xf]
    %v760 = vld [vmem:[#allocation5 + $0x174] sm:$0xff]
    %v761 = vld [vmem:[#allocation5 + $0x17c] sm:$0xf]
    %v762 = vld [vmem:[#allocation5 + $0x180] sm:$0xff]
    %v763 = vld [vmem:[#allocation5 + $0x188] sm:$0xf]
    %v764 = vld [vmem:[#allocation5 + $0x18c] sm:$0xff]
    %v765 = vld [vmem:[#allocation5 + $0x194] sm:$0xf]
    %v766 = vld [vmem:[#allocation5 + $0x198] sm:$0xff]
    %v767 = vld [vmem:[#allocation5 + $0x1a0] sm:$0xf]
    %v768 = vld [vmem:[#allocation5 + $0x1a4] sm:$0xff]
    %v769 = vld [vmem:[#allocation5 + $0x1ac] sm:$0xf]
    %v770 = vld [vmem:[#allocation5 + $0x1b0] sm:$0xff]
    %v771 = vld [vmem:[#allocation5 + $0x1b8] sm:$0xf]
    %v772 = vld [vmem:[#allocation5 + $0x1bc] sm:$0xff]
    %v773 = vld [vmem:[#allocation5 + $0x1c4] sm:$0xf]
    %v774 = vld [vmem:[#allocation5 + $0x1c8] sm:$0xff]
    %v775 = vld [vmem:[#allocation5 + $0x1d0] sm:$0xf]
    %v776 = vld [vmem:[#allocation5 + $0x1d4] sm:$0xff]
    %v777 = vld [vmem:[#allocation5 + $0x1dc] sm:$0xf]
    %v778 = vld [vmem:[#allocation5 + $0x1e0] sm:$0xff]
    %v779 = vld [vmem:[#allocation5 + $0x1e8] sm:$0xf]
    %v780 = vld [vmem:[#allocation5 + $0x1ec] sm:$0xff]
    %v781 = vld [vmem:[#allocation5 + $0x1f4] sm:$0xf]
    %v782 = vld [vmem:[#allocation5 + $0x1f8] sm:$0xff]
    %v783 = vld [vmem:[#allocation5 + $0x200] sm:$0xf]
    %v784 = vld [vmem:[#allocation5 + $0x204] sm:$0xff]
    %v785 = vld [vmem:[#allocation5 + $0x20c] sm:$0xf]
    %v786 = vld [vmem:[#allocation5 + $0x210] sm:$0xff]
    %v787 = vld [vmem:[#allocation5 + $0x218] sm:$0xf]
    %v788 = vld [vmem:[#allocation5 + $0x21c] sm:$0xff]
    %v789 = vld [vmem:[#allocation5 + $0x224] sm:$0xf]
    %v790 = vld [vmem:[#allocation5 + $0x228] sm:$0xff]
    %v791 = vld [vmem:[#allocation5 + $0x230] sm:$0xf]
    %v792 = vld [vmem:[#allocation5 + $0x234] sm:$0xff]
    %v793 = vld [vmem:[#allocation5 + $0x23c] sm:$0xf]
    %v794 = vld [vmem:[#allocation5 + $0x240] sm:$0xff]
    %v795 = vld [vmem:[#allocation5 + $0x248] sm:$0xf]
    %v796 = vld [vmem:[#allocation5 + $0x24c] sm:$0xff]
    %v797 = vld [vmem:[#allocation5 + $0x254] sm:$0xf]
    %v798 = vld [vmem:[#allocation5 + $0x258] sm:$0xff]
    %v799 = vld [vmem:[#allocation5 + $0x260] sm:$0xf]
    %v800 = vld [vmem:[#allocation5 + $0x264] sm:$0xff]
    %v801 = vld [vmem:[#allocation5 + $0x26c] sm:$0xf]
    %v802 = vld [vmem:[#allocation5 + $0x270] sm:$0xff]
    %v803 = vld [vmem:[#allocation5 + $0x278] sm:$0xf]
    %v804 = vld [vmem:[#allocation5 + $0x27c] sm:$0xff]
    %v805 = vld [vmem:[#allocation5 + $0x284] sm:$0xf]
    %v806 = vld [vmem:[#allocation5 + $0x288] sm:$0xff]
    %v807 = vld [vmem:[#allocation5 + $0x290] sm:$0xf]
    %v808 = vld [vmem:[#allocation5 + $0x294] sm:$0xff]
    %v809 = vld [vmem:[#allocation5 + $0x29c] sm:$0xf]
    %v810 = vld [vmem:[#allocation5 + $0x2a0] sm:$0xff]
    %v811 = vld [vmem:[#allocation5 + $0x2a8] sm:$0xf]
    %v812 = vld [vmem:[#allocation5 + $0x2ac] sm:$0xff]
    %v813 = vld [vmem:[#allocation5 + $0x2b4] sm:$0xf]
    %v814 = vld [vmem:[#allocation5 + $0x2b8] sm:$0xff]
    %v815 = vld [vmem:[#allocation5 + $0x2c0] sm:$0xf]
    %v816 = vld [vmem:[#allocation5 + $0x2c4] sm:$0xff]
    %v817 = vld [vmem:[#allocation5 + $0x2cc] sm:$0xf]
    %v818 = vld [vmem:[#allocation5 + $0x2d0] sm:$0xff]
    %v819 = vld [vmem:[#allocation5 + $0x2d8] sm:$0xf]
    %v820 = vld [vmem:[#allocation5 + $0x2dc] sm:$0xff]
    %v821 = vld [vmem:[#allocation5 + $0x2e4] sm:$0xf]
    %v822 = vld [vmem:[#allocation5 + $0x2e8] sm:$0xff]
    %v823 = vld [vmem:[#allocation5 + $0x2f0] sm:$0xf]
    %v824 = vld [vmem:[#allocation5 + $0x2f4] sm:$0xff]
    %v825 = vld [vmem:[#allocation5 + $0x2fc] sm:$0xf]
    %v826 = vpack.c.bf16 %v637, %v634
    %v827 = vpack.c.bf16 %v638, %v635
    %v828 = vpack.c.bf16 %v639, %v636
    %v829 = vpack.c.bf16 %v643, %v640
    %v830 = vpack.c.bf16 %v644, %v641
    %v831 = vpack.c.bf16 %v645, %v642
    %v832 = vpack.c.bf16 %v649, %v646
    %v833 = vpack.c.bf16 %v650, %v647
    %v834 = vpack.c.bf16 %v651, %v648
    %v835 = vpack.c.bf16 %v655, %v652
    %v836 = vpack.c.bf16 %v656, %v653
    %v837 = vpack.c.bf16 %v657, %v654
    %v838 = vpack.c.bf16 %v661, %v658
    %v839 = vpack.c.bf16 %v662, %v659
    %v840 = vpack.c.bf16 %v663, %v660
    %v841 = vpack.c.bf16 %v667, %v664
    %v842 = vpack.c.bf16 %v668, %v665
    %v843 = vpack.c.bf16 %v669, %v666
    %v844 = vpack.c.bf16 %v673, %v670
    %v845 = vpack.c.bf16 %v674, %v671
    %v846 = vpack.c.bf16 %v675, %v672
    %v847 = vpack.c.bf16 %v679, %v676
    %v848 = vpack.c.bf16 %v680, %v677
    %v849 = vpack.c.bf16 %v681, %v678
    %v850 = vpack.c.bf16 %v685, %v682
    %v851 = vpack.c.bf16 %v686, %v683
    %v852 = vpack.c.bf16 %v687, %v684
    %v853 = vpack.c.bf16 %v691, %v688
    %v854 = vpack.c.bf16 %v692, %v689
    %v855 = vpack.c.bf16 %v693, %v690
    %v856 = vpack.c.bf16 %v697, %v694
    %v857 = vpack.c.bf16 %v698, %v695
    %v858 = vpack.c.bf16 %v699, %v696
    %v859 = vpack.c.bf16 %v703, %v700
    %v860 = vpack.c.bf16 %v704, %v701
    %v861 = vpack.c.bf16 %v705, %v702
    %v862 = vpack.c.bf16 %v709, %v706
    %v863 = vpack.c.bf16 %v710, %v707
    %v864 = vpack.c.bf16 %v711, %v708
    %v865 = vpack.c.bf16 %v715, %v712
    %v866 = vpack.c.bf16 %v716, %v713
    %v867 = vpack.c.bf16 %v717, %v714
    %v868 = vpack.c.bf16 %v721, %v718
    %v869 = vpack.c.bf16 %v722, %v719
    %v870 = vpack.c.bf16 %v723, %v720
    %v871 = vpack.c.bf16 %v727, %v724
    %v872 = vpack.c.bf16 %v728, %v725
    %v873 = vpack.c.bf16 %v729, %v726
    %s874 = scalar_lea.vmem [#allocation7], 1
    %v875 = vld [vmem:[%s874] ss:$8 sm:$0x7]
    %v877 = vlaneseq
    %v878 = vshrl.u32 %v877, 7
    %v879 = vsub.s32 0, %v878
    %v880 = vrot.slane %v875, %v879
    %v881 = vlaneseq
    %v882 = vshrl.u32 %v881, 7
    %v883 = vsub.s32 1, %v882
    %v884 = vrot.slane %v875, %v883
    %v885 = vlaneseq
    %v886 = vshrl.u32 %v885, 7
    %v887 = vsub.s32 2, %v886
    %v888 = vrot.slane %v875, %v887
    %v988 = vunpack.c.l.b16 %v730
    %v989 = vunpack.c.h.b16 %v730
    %v990 = vunpack.c.l.b16 %v731
    %v991 = vunpack.c.l.b16 %v732
    %v992 = vunpack.c.h.b16 %v732
    %v993 = vunpack.c.l.b16 %v733
    %v994 = vunpack.c.l.b16 %v734
    %v995 = vunpack.c.h.b16 %v734
    %v996 = vunpack.c.l.b16 %v735
    %v997 = vunpack.c.l.b16 %v736
    %v998 = vunpack.c.h.b16 %v736
    %v999 = vunpack.c.l.b16 %v737
    %v1000 = vunpack.c.l.b16 %v738
    %v1001 = vunpack.c.h.b16 %v738
    %v1002 = vunpack.c.l.b16 %v739
    %v1003 = vunpack.c.l.b16 %v740
    %v1004 = vunpack.c.h.b16 %v740
    %v1005 = vunpack.c.l.b16 %v741
    %v1006 = vunpack.c.l.b16 %v742
    %v1007 = vunpack.c.h.b16 %v742
    %v1008 = vunpack.c.l.b16 %v743
    %v1009 = vunpack.c.l.b16 %v744
    %v1010 = vunpack.c.h.b16 %v744
    %v1011 = vunpack.c.l.b16 %v745
    %v1012 = vunpack.c.l.b16 %v746
    %v1013 = vunpack.c.h.b16 %v746
    %v1014 = vunpack.c.l.b16 %v747
    %v1015 = vunpack.c.l.b16 %v748
    %v1016 = vunpack.c.h.b16 %v748
    %v1017 = vunpack.c.l.b16 %v749
    %v1018 = vunpack.c.l.b16 %v750
    %v1019 = vunpack.c.h.b16 %v750
    %v1020 = vunpack.c.l.b16 %v751
    %v1021 = vunpack.c.l.b16 %v752
    %v1022 = vunpack.c.h.b16 %v752
    %v1023 = vunpack.c.l.b16 %v753
    %v1024 = vunpack.c.l.b16 %v754
    %v1025 = vunpack.c.h.b16 %v754
    %v1026 = vunpack.c.l.b16 %v755
    %v1027 = vunpack.c.l.b16 %v756
    %v1028 = vunpack.c.h.b16 %v756
    %v1029 = vunpack.c.l.b16 %v757
    %v1030 = vunpack.c.l.b16 %v758
    %v1031 = vunpack.c.h.b16 %v758
    %v1032 = vunpack.c.l.b16 %v759
    %v1033 = vunpack.c.l.b16 %v760
    %v1034 = vunpack.c.h.b16 %v760
    %v1035 = vunpack.c.l.b16 %v761
    %v1036 = vunpack.c.l.b16 %v762
    %v1037 = vunpack.c.h.b16 %v762
    %v1038 = vunpack.c.l.b16 %v763
    %v1039 = vunpack.c.l.b16 %v764
    %v1040 = vunpack.c.h.b16 %v764
    %v1041 = vunpack.c.l.b16 %v765
    %v1042 = vunpack.c.l.b16 %v766
    %v1043 = vunpack.c.h.b16 %v766
    %v1044 = vunpack.c.l.b16 %v767
    %v1045 = vunpack.c.l.b16 %v768
    %v1046 = vunpack.c.h.b16 %v768
    %v1047 = vunpack.c.l.b16 %v769
    %v1048 = vunpack.c.l.b16 %v770
    %v1049 = vunpack.c.h.b16 %v770
    %v1050 = vunpack.c.l.b16 %v771
    %v1051 = vunpack.c.l.b16 %v772
    %v1052 = vunpack.c.h.b16 %v772
    %v1053 = vunpack.c.l.b16 %v773
    %v1054 = vunpack.c.l.b16 %v774
    %v1055 = vunpack.c.h.b16 %v774
    %v1056 = vunpack.c.l.b16 %v775
    %v1057 = vunpack.c.l.b16 %v776
    %v1058 = vunpack.c.h.b16 %v776
    %v1059 = vunpack.c.l.b16 %v777
    %v1060 = vunpack.c.l.b16 %v778
    %v1061 = vunpack.c.h.b16 %v778
    %v1062 = vunpack.c.l.b16 %v779
    %v1063 = vunpack.c.l.b16 %v780
    %v1064 = vunpack.c.h.b16 %v780
    %v1065 = vunpack.c.l.b16 %v781
    %v1066 = vunpack.c.l.b16 %v782
    %v1067 = vunpack.c.h.b16 %v782
    %v1068 = vunpack.c.l.b16 %v783
    %v1069 = vunpack.c.l.b16 %v784
    %v1070 = vunpack.c.h.b16 %v784
    %v1071 = vunpack.c.l.b16 %v785
    %v1072 = vunpack.c.l.b16 %v786
    %v1073 = vunpack.c.h.b16 %v786
    %v1074 = vunpack.c.l.b16 %v787
    %v1075 = vunpack.c.l.b16 %v788
    %v1076 = vunpack.c.h.b16 %v788
    %v1077 = vunpack.c.l.b16 %v789
    %v1078 = vunpack.c.l.b16 %v790
    %v1079 = vunpack.c.h.b16 %v790
    %v1080 = vunpack.c.l.b16 %v791
    %v1081 = vunpack.c.l.b16 %v792
    %v1082 = vunpack.c.h.b16 %v792
    %v1083 = vunpack.c.l.b16 %v793
    %v1084 = vunpack.c.l.b16 %v794
    %v1085 = vunpack.c.h.b16 %v794
    %v1086 = vunpack.c.l.b16 %v795
    %v1087 = vunpack.c.l.b16 %v796
    %v1088 = vunpack.c.h.b16 %v796
    %v1089 = vunpack.c.l.b16 %v797
    %v1090 = vunpack.c.l.b16 %v798
    %v1091 = vunpack.c.h.b16 %v798
    %v1092 = vunpack.c.l.b16 %v799
    %v1093 = vunpack.c.l.b16 %v800
    %v1094 = vunpack.c.h.b16 %v800
    %v1095 = vunpack.c.l.b16 %v801
    %v1096 = vunpack.c.l.b16 %v802
    %v1097 = vunpack.c.h.b16 %v802
    %v1098 = vunpack.c.l.b16 %v803
    %v1099 = vunpack.c.l.b16 %v804
    %v1100 = vunpack.c.h.b16 %v804
    %v1101 = vunpack.c.l.b16 %v805
    %v1102 = vunpack.c.l.b16 %v806
    %v1103 = vunpack.c.h.b16 %v806
    %v1104 = vunpack.c.l.b16 %v807
    %v1105 = vunpack.c.l.b16 %v808
    %v1106 = vunpack.c.h.b16 %v808
    %v1107 = vunpack.c.l.b16 %v809
    %v1108 = vunpack.c.l.b16 %v810
    %v1109 = vunpack.c.h.b16 %v810
    %v1110 = vunpack.c.l.b16 %v811
    %v1111 = vunpack.c.l.b16 %v812
    %v1112 = vunpack.c.h.b16 %v812
    %v1113 = vunpack.c.l.b16 %v813
    %v1114 = vunpack.c.l.b16 %v814
    %v1115 = vunpack.c.h.b16 %v814
    %v1116 = vunpack.c.l.b16 %v815
    %v1117 = vunpack.c.l.b16 %v816
    %v1118 = vunpack.c.h.b16 %v816
    %v1119 = vunpack.c.l.b16 %v817
    %v1120 = vunpack.c.l.b16 %v818
    %v1121 = vunpack.c.h.b16 %v818
    %v1122 = vunpack.c.l.b16 %v819
    %v1123 = vunpack.c.l.b16 %v820
    %v1124 = vunpack.c.h.b16 %v820
    %v1125 = vunpack.c.l.b16 %v821
    %v1126 = vunpack.c.l.b16 %v822
    %v1127 = vunpack.c.h.b16 %v822
    %v1128 = vunpack.c.l.b16 %v823
    %v1129 = vunpack.c.l.b16 %v824
    %v1130 = vunpack.c.h.b16 %v824
    %v1131 = vunpack.c.l.b16 %v825
    %v1132 = vpack.c.b16 %v991, %v988
    %v1133 = vpack.c.b16 %v992, %v989
    %v1134 = vpack.c.b16 %v993, %v990
    %v1135 = vpack.c.b16 %v997, %v994
    %v1136 = vpack.c.b16 %v998, %v995
    %v1137 = vpack.c.b16 %v999, %v996
    %v1138 = vpack.c.b16 %v1003, %v1000
    %v1139 = vpack.c.b16 %v1004, %v1001
    %v1140 = vpack.c.b16 %v1005, %v1002
    %v1141 = vpack.c.b16 %v1009, %v1006
    %v1142 = vpack.c.b16 %v1010, %v1007
    %v1143 = vpack.c.b16 %v1011, %v1008
    %v1144 = vpack.c.b16 %v1015, %v1012
    %v1145 = vpack.c.b16 %v1016, %v1013
    %v1146 = vpack.c.b16 %v1017, %v1014
    %v1147 = vpack.c.b16 %v1021, %v1018
    %v1148 = vpack.c.b16 %v1022, %v1019
    %v1149 = vpack.c.b16 %v1023, %v1020
    %v1150 = vpack.c.b16 %v1027, %v1024
    %v1151 = vpack.c.b16 %v1028, %v1025
    %v1152 = vpack.c.b16 %v1029, %v1026
    %v1153 = vpack.c.b16 %v1033, %v1030
    %v1154 = vpack.c.b16 %v1034, %v1031
    %v1155 = vpack.c.b16 %v1035, %v1032
    %v1156 = vpack.c.b16 %v1039, %v1036
    %v1157 = vpack.c.b16 %v1040, %v1037
    %v1158 = vpack.c.b16 %v1041, %v1038
    %v1159 = vpack.c.b16 %v1045, %v1042
    %v1160 = vpack.c.b16 %v1046, %v1043
    %v1161 = vpack.c.b16 %v1047, %v1044
    %v1162 = vpack.c.b16 %v1051, %v1048
    %v1163 = vpack.c.b16 %v1052, %v1049
    %v1164 = vpack.c.b16 %v1053, %v1050
    %v1165 = vpack.c.b16 %v1057, %v1054
    %v1166 = vpack.c.b16 %v1058, %v1055
    %v1167 = vpack.c.b16 %v1059, %v1056
    %v1168 = vpack.c.b16 %v1063, %v1060
    %v1169 = vpack.c.b16 %v1064, %v1061
    %v1170 = vpack.c.b16 %v1065, %v1062
    %v1171 = vpack.c.b16 %v1069, %v1066
    %v1172 = vpack.c.b16 %v1070, %v1067
    %v1173 = vpack.c.b16 %v1071, %v1068
    %v1174 = vpack.c.b16 %v1075, %v1072
    %v1175 = vpack.c.b16 %v1076, %v1073
    %v1176 = vpack.c.b16 %v1077, %v1074
    %v1177 = vpack.c.b16 %v1081, %v1078
    %v1178 = vpack.c.b16 %v1082, %v1079
    %v1179 = vpack.c.b16 %v1083, %v1080
    %v1180 = vpack.c.b16 %v1087, %v1084
    %v1181 = vpack.c.b16 %v1088, %v1085
    %v1182 = vpack.c.b16 %v1089, %v1086
    %v1183 = vpack.c.b16 %v1093, %v1090
    %v1184 = vpack.c.b16 %v1094, %v1091
    %v1185 = vpack.c.b16 %v1095, %v1092
    %v1186 = vpack.c.b16 %v1099, %v1096
    %v1187 = vpack.c.b16 %v1100, %v1097
    %v1188 = vpack.c.b16 %v1101, %v1098
    %v1189 = vpack.c.b16 %v1105, %v1102
    %v1190 = vpack.c.b16 %v1106, %v1103
    %v1191 = vpack.c.b16 %v1107, %v1104
    %v1192 = vpack.c.b16 %v1111, %v1108
    %v1193 = vpack.c.b16 %v1112, %v1109
    %v1194 = vpack.c.b16 %v1113, %v1110
    %v1195 = vpack.c.b16 %v1117, %v1114
    %v1196 = vpack.c.b16 %v1118, %v1115
    %v1197 = vpack.c.b16 %v1119, %v1116
    %v1198 = vpack.c.b16 %v1123, %v1120
    %v1199 = vpack.c.b16 %v1124, %v1121
    %v1200 = vpack.c.b16 %v1125, %v1122
    %v1201 = vpack.c.b16 %v1129, %v1126
    %v1202 = vpack.c.b16 %v1130, %v1127
    %v1203 = vpack.c.b16 %v1131, %v1128
    %1276 = vmatprep.subr.bf16.mxu0 %v1154
    %1277 = vmatpush1.bf16.msra.mxu0 %v1153
    %1278 = vmatprep.subr.bf16.mxu0 %v1151
    %1279 = vmatpush1.bf16.msra.mxu0 %v1150
    %1280 = vmatprep.subr.bf16.mxu0 %v1148
    %1281 = vmatpush1.bf16.msra.mxu0 %v1147
    %1282 = vmatprep.subr.bf16.mxu0 %v1145
    %1283 = vmatpush1.bf16.msra.mxu0 %v1144
    %1284 = vmatprep.subr.bf16.mxu0 %v1142
    %1285 = vmatpush1.bf16.msra.mxu0 %v1141
    %1286 = vmatprep.subr.bf16.mxu0 %v1139
    %1287 = vmatpush1.bf16.msra.mxu0 %v1138
    %1288 = vmatprep.subr.bf16.mxu0 %v1136
    %1289 = vmatpush1.bf16.msra.mxu0 %v1135
    %1290 = vmatprep.subr.bf16.mxu0 %v1133
    %1291 = vmatpush1.bf16.msra.mxu0 %v1132
    %1292 = vmatprep.subr.bf16.mxu0 %v1178
    %1293 = vmatpush2.bf16.msra.mxu0 %v1177
    %1294 = vmatprep.subr.bf16.mxu0 %v1175
    %1295 = vmatpush2.bf16.msra.mxu0 %v1174
    %1296 = vmatprep.subr.bf16.mxu0 %v1172
    %1297 = vmatpush2.bf16.msra.mxu0 %v1171
    %1298 = vmatprep.subr.bf16.mxu0 %v1169
    %1299 = vmatpush2.bf16.msra.mxu0 %v1168
    %1300 = vmatprep.subr.bf16.mxu0 %v1166
    %1301 = vmatpush2.bf16.msra.mxu0 %v1165
    %1302 = vmatprep.subr.bf16.mxu0 %v1163
    %1303 = vmatpush2.bf16.msra.mxu0 %v1162
    %1304 = vmatprep.subr.bf16.mxu0 %v1160
    %1305 = vmatpush2.bf16.msra.mxu0 %v1159
    %1306 = vmatprep.subr.bf16.mxu0 %v1157
    %1307 = vmatpush2.bf16.msra.mxu0 %v1156
    %1308 = vmatprep.mubr.bf16.mxu0 %v827
    %1309 = vmatmul.mubr.bf16.gmra.mxu0 %v826
    %v1310 = vpop.f32.mrf.mxu0
    %v1311 = vadd.f32 %v880, %v1310
    %v1312 = vpop.f32.mrf.mxu0
    %v1313 = vadd.f32 %v884, %v1312
    %v1314 = vpop.f32.mrf.mxu0
    %v1315 = vadd.f32 %v880, %v1314
    %v1316 = vpop.f32.mrf.mxu0
    %v1317 = vadd.f32 %v884, %v1316
    %1318 = vmatprep.mubr.bf16.mxu0 %v830
    %1319 = vmatmul.mubr.bf16.gmra.mxu0 %v829
    %v1320 = vpop.f32.mrf.mxu0
    %v1321 = vadd.f32 %v880, %v1320
    %v1322 = vpop.f32.mrf.mxu0
    %v1323 = vadd.f32 %v884, %v1322
    %v1324 = vpop.f32.mrf.mxu0
    %v1325 = vadd.f32 %v880, %v1324
    %v1326 = vpop.f32.mrf.mxu0
    %v1327 = vadd.f32 %v884, %v1326
    %1328 = vmatprep.mubr.bf16.mxu0 %v833
    %1329 = vmatmul.mubr.bf16.gmra.mxu0 %v832
    %v1330 = vpop.f32.mrf.mxu0
    %v1331 = vadd.f32 %v880, %v1330
    %v1332 = vpop.f32.mrf.mxu0
    %v1333 = vadd.f32 %v884, %v1332
    %v1334 = vpop.f32.mrf.mxu0
    %v1335 = vadd.f32 %v880, %v1334
    %v1336 = vpop.f32.mrf.mxu0
    %v1337 = vadd.f32 %v884, %v1336
    %1338 = vmatprep.mubr.bf16.mxu0 %v836
    %1339 = vmatmul.mubr.bf16.gmra.mxu0 %v835
    %v1340 = vpop.f32.mrf.mxu0
    %v1341 = vadd.f32 %v880, %v1340
    %v1342 = vpop.f32.mrf.mxu0
    %v1343 = vadd.f32 %v884, %v1342
    %v1344 = vpop.f32.mrf.mxu0
    %v1345 = vadd.f32 %v880, %v1344
    %v1346 = vpop.f32.mrf.mxu0
    %v1347 = vadd.f32 %v884, %v1346
    %1348 = vmatprep.mubr.bf16.mxu0 %v839
    %1349 = vmatmul.mubr.bf16.gmra.mxu0 %v838
    %v1350 = vpop.f32.mrf.mxu0
    %v1351 = vadd.f32 %v880, %v1350
    %v1352 = vpop.f32.mrf.mxu0
    %v1353 = vadd.f32 %v884, %v1352
    %v1354 = vpop.f32.mrf.mxu0
    %v1355 = vadd.f32 %v880, %v1354
    %v1356 = vpop.f32.mrf.mxu0
    %v1357 = vadd.f32 %v884, %v1356
    %1358 = vmatprep.mubr.bf16.mxu0 %v842
    %1359 = vmatmul.mubr.bf16.gmra.mxu0 %v841
    %v1360 = vpop.f32.mrf.mxu0
    %v1361 = vadd.f32 %v880, %v1360
    %v1362 = vpop.f32.mrf.mxu0
    %v1363 = vadd.f32 %v884, %v1362
    %v1364 = vpop.f32.mrf.mxu0
    %v1365 = vadd.f32 %v880, %v1364
    %v1366 = vpop.f32.mrf.mxu0
    %v1367 = vadd.f32 %v884, %v1366
    %1368 = vmatprep.mubr.bf16.mxu0 %v845
    %1369 = vmatmul.mubr.bf16.gmra.mxu0 %v844
    %v1370 = vpop.f32.mrf.mxu0
    %v1371 = vadd.f32 %v880, %v1370
    %v1372 = vpop.f32.mrf.mxu0
    %v1373 = vadd.f32 %v884, %v1372
    %v1374 = vpop.f32.mrf.mxu0
    %v1375 = vadd.f32 %v880, %v1374
    %v1376 = vpop.f32.mrf.mxu0
    %v1377 = vadd.f32 %v884, %v1376
    %1378 = vmatprep.mubr.bf16.mxu0 %v848
    %1379 = vmatmul.mubr.bf16.gmra.mxu0 %v847
    %v1380 = vpop.f32.mrf.mxu0
    %v1381 = vadd.f32 %v880, %v1380
    %v1382 = vpop.f32.mrf.mxu0
    %v1383 = vadd.f32 %v884, %v1382
    %v1384 = vpop.f32.mrf.mxu0
    %v1385 = vadd.f32 %v880, %v1384
    %v1386 = vpop.f32.mrf.mxu0
    %v1387 = vadd.f32 %v884, %v1386
    %1388 = vmatprep.mubr.bf16.mxu0 %v851
    %1389 = vmatmul.mubr.bf16.gmra.mxu0 %v850
    %v1390 = vpop.f32.mrf.mxu0
    %v1391 = vadd.f32 %v880, %v1390
    %v1392 = vpop.f32.mrf.mxu0
    %v1393 = vadd.f32 %v884, %v1392
    %v1394 = vpop.f32.mrf.mxu0
    %v1395 = vadd.f32 %v880, %v1394
    %v1396 = vpop.f32.mrf.mxu0
    %v1397 = vadd.f32 %v884, %v1396
    %1398 = vmatprep.mubr.bf16.mxu0 %v854
    %1399 = vmatmul.mubr.bf16.gmra.mxu0 %v853
    %v1400 = vpop.f32.mrf.mxu0
    %v1401 = vadd.f32 %v880, %v1400
    %v1402 = vpop.f32.mrf.mxu0
    %v1403 = vadd.f32 %v884, %v1402
    %v1404 = vpop.f32.mrf.mxu0
    %v1405 = vadd.f32 %v880, %v1404
    %v1406 = vpop.f32.mrf.mxu0
    %v1407 = vadd.f32 %v884, %v1406
    %1408 = vmatprep.mubr.bf16.mxu0 %v857
    %1409 = vmatmul.mubr.bf16.gmra.mxu0 %v856
    %v1410 = vpop.f32.mrf.mxu0
    %v1411 = vadd.f32 %v880, %v1410
    %v1412 = vpop.f32.mrf.mxu0
    %v1413 = vadd.f32 %v884, %v1412
    %v1414 = vpop.f32.mrf.mxu0
    %v1415 = vadd.f32 %v880, %v1414
    %v1416 = vpop.f32.mrf.mxu0
    %v1417 = vadd.f32 %v884, %v1416
    %1418 = vmatprep.mubr.bf16.mxu0 %v860
    %1419 = vmatmul.mubr.bf16.gmra.mxu0 %v859
    %v1420 = vpop.f32.mrf.mxu0
    %v1421 = vadd.f32 %v880, %v1420
    %v1422 = vpop.f32.mrf.mxu0
    %v1423 = vadd.f32 %v884, %v1422
    %v1424 = vpop.f32.mrf.mxu0
    %v1425 = vadd.f32 %v880, %v1424
    %v1426 = vpop.f32.mrf.mxu0
    %v1427 = vadd.f32 %v884, %v1426
    %1428 = vmatprep.mubr.bf16.mxu0 %v863
    %1429 = vmatmul.mubr.bf16.gmra.mxu0 %v862
    %v1430 = vpop.f32.mrf.mxu0
    %v1431 = vadd.f32 %v880, %v1430
    %v1432 = vpop.f32.mrf.mxu0
    %v1433 = vadd.f32 %v884, %v1432
    %v1434 = vpop.f32.mrf.mxu0
    %v1435 = vadd.f32 %v880, %v1434
    %v1436 = vpop.f32.mrf.mxu0
    %v1437 = vadd.f32 %v884, %v1436
    %1438 = vmatprep.mubr.bf16.mxu0 %v866
    %1439 = vmatmul.mubr.bf16.gmra.mxu0 %v865
    %v1440 = vpop.f32.mrf.mxu0
    %v1441 = vadd.f32 %v880, %v1440
    %v1442 = vpop.f32.mrf.mxu0
    %v1443 = vadd.f32 %v884, %v1442
    %v1444 = vpop.f32.mrf.mxu0
    %v1445 = vadd.f32 %v880, %v1444
    %v1446 = vpop.f32.mrf.mxu0
    %v1447 = vadd.f32 %v884, %v1446
    %1448 = vmatprep.mubr.bf16.mxu0 %v869
    %1449 = vmatmul.mubr.bf16.gmra.mxu0 %v868
    %v1450 = vpop.f32.mrf.mxu0
    %v1451 = vadd.f32 %v880, %v1450
    %v1452 = vpop.f32.mrf.mxu0
    %v1453 = vadd.f32 %v884, %v1452
    %v1454 = vpop.f32.mrf.mxu0
    %v1455 = vadd.f32 %v880, %v1454
    %v1456 = vpop.f32.mrf.mxu0
    %v1457 = vadd.f32 %v884, %v1456
    %1458 = vmatprep.mubr.bf16.mxu0 %v872
    %1459 = vmatmul.mubr.bf16.gmra.mxu0 %v871
    %v1460 = vpop.f32.mrf.mxu0
    %v1461 = vadd.f32 %v880, %v1460
    %v1462 = vpop.f32.mrf.mxu0
    %v1463 = vadd.f32 %v884, %v1462
    %v1464 = vpop.f32.mrf.mxu0
    %v1465 = vadd.f32 %v880, %v1464
    %v1466 = vpop.f32.mrf.mxu0
    %v1467 = vadd.f32 %v884, %v1466
    %1468 = vdwg.mxu0
    %1469 = vmatprep.subr.bf16.mxu0 %v1202
    %1470 = vmatpush1.bf16.msra.mxu0 %v1201
    %1471 = vmatprep.subr.bf16.mxu0 %v1199
    %1472 = vmatpush1.bf16.msra.mxu0 %v1198
    %1473 = vmatprep.subr.bf16.mxu0 %v1196
    %1474 = vmatpush1.bf16.msra.mxu0 %v1195
    %1475 = vmatprep.subr.bf16.mxu0 %v1193
    %1476 = vmatpush1.bf16.msra.mxu0 %v1192
    %1477 = vmatprep.subr.bf16.mxu0 %v1190
    %1478 = vmatpush1.bf16.msra.mxu0 %v1189
    %1479 = vmatprep.subr.bf16.mxu0 %v1187
    %1480 = vmatpush1.bf16.msra.mxu0 %v1186
    %1481 = vmatprep.subr.bf16.mxu0 %v1184
    %1482 = vmatpush1.bf16.msra.mxu0 %v1183
    %1483 = vmatprep.subr.bf16.mxu0 %v1181
    %1484 = vmatpush1.bf16.msra.mxu0 %v1180
    %1485 = vmatprep.subr.bf16.mxu0 0
    %1486 = vmatpush2.bf16.msra.mxu0 0
    %1487 = vmatprep.subr.bf16.mxu0 0
    %1488 = vmatpush2.bf16.msra.mxu0 0
    %1489 = vmatprep.subr.bf16.mxu0 0
    %1490 = vmatpush2.bf16.msra.mxu0 0
    %1491 = vmatprep.subr.bf16.mxu0 0
    %1492 = vmatpush2.bf16.msra.mxu0 0
    %1493 = vmatprep.subr.bf16.mxu0 0
    %1494 = vmatpush2.bf16.msra.mxu0 0
    %1495 = vmatprep.subr.bf16.mxu0 0
    %1496 = vmatpush2.bf16.msra.mxu0 0
    %1497 = vmatprep.subr.bf16.mxu0 0
    %1498 = vmatpush2.bf16.msra.mxu0 0
    %1499 = vmatprep.subr.bf16.mxu0 0
    %1500 = vmatpush2.bf16.msra.mxu0 0
    %1501 = vmatprep.mubr.bf16.mxu0 0
    %1502 = vmatmul.mubr.bf16.gmra.mxu0 %v828
    %v1503 = vpop.f32.mrf.mxu0
    %v1504 = vadd.f32 %v1311, %v1503
    %v1505 = vpop.f32.mrf.mxu0
    %v1506 = vadd.f32 %v1313, %v1505
    %v1507 = vpop.f32.mrf.mxu0
    %v1508 = vadd.f32 %v1315, %v1507
    %v1509 = vpop.f32.mrf.mxu0
    %v1510 = vadd.f32 %v1317, %v1509
    %1511 = vmatprep.mubr.bf16.mxu0 0
    %1512 = vmatmul.mubr.bf16.gmra.mxu0 %v831
    %v1513 = vpop.f32.mrf.mxu0
    %v1514 = vadd.f32 %v1321, %v1513
    %v1515 = vpop.f32.mrf.mxu0
    %v1516 = vadd.f32 %v1323, %v1515
    %v1517 = vpop.f32.mrf.mxu0
    %v1518 = vadd.f32 %v1325, %v1517
    %v1519 = vpop.f32.mrf.mxu0
    %v1520 = vadd.f32 %v1327, %v1519
    %1521 = vmatprep.mubr.bf16.mxu0 0
    %1522 = vmatmul.mubr.bf16.gmra.mxu0 %v834
    %v1523 = vpop.f32.mrf.mxu0
    %v1524 = vadd.f32 %v1331, %v1523
    %v1525 = vpop.f32.mrf.mxu0
    %v1526 = vadd.f32 %v1333, %v1525
    %v1527 = vpop.f32.mrf.mxu0
    %v1528 = vadd.f32 %v1335, %v1527
    %v1529 = vpop.f32.mrf.mxu0
    %v1530 = vadd.f32 %v1337, %v1529
    %1531 = vmatprep.mubr.bf16.mxu0 0
    %1532 = vmatmul.mubr.bf16.gmra.mxu0 %v837
    %v1533 = vpop.f32.mrf.mxu0
    %v1534 = vadd.f32 %v1341, %v1533
    %v1535 = vpop.f32.mrf.mxu0
    %v1536 = vadd.f32 %v1343, %v1535
    %v1537 = vpop.f32.mrf.mxu0
    %v1538 = vadd.f32 %v1345, %v1537
    %v1539 = vpop.f32.mrf.mxu0
    %v1540 = vadd.f32 %v1347, %v1539
    %1541 = vmatprep.mubr.bf16.mxu0 0
    %1542 = vmatmul.mubr.bf16.gmra.mxu0 %v840
    %v1543 = vpop.f32.mrf.mxu0
    %v1544 = vadd.f32 %v1351, %v1543
    %v1545 = vpop.f32.mrf.mxu0
    %v1546 = vadd.f32 %v1353, %v1545
    %v1547 = vpop.f32.mrf.mxu0
    %v1548 = vadd.f32 %v1355, %v1547
    %v1549 = vpop.f32.mrf.mxu0
    %v1550 = vadd.f32 %v1357, %v1549
    %1551 = vmatprep.mubr.bf16.mxu0 0
    %1552 = vmatmul.mubr.bf16.gmra.mxu0 %v843
    %v1553 = vpop.f32.mrf.mxu0
    %v1554 = vadd.f32 %v1361, %v1553
    %v1555 = vpop.f32.mrf.mxu0
    %v1556 = vadd.f32 %v1363, %v1555
    %v1557 = vpop.f32.mrf.mxu0
    %v1558 = vadd.f32 %v1365, %v1557
    %v1559 = vpop.f32.mrf.mxu0
    %v1560 = vadd.f32 %v1367, %v1559
    %1561 = vmatprep.mubr.bf16.mxu0 0
    %1562 = vmatmul.mubr.bf16.gmra.mxu0 %v846
    %v1563 = vpop.f32.mrf.mxu0
    %v1564 = vadd.f32 %v1371, %v1563
    %v1565 = vpop.f32.mrf.mxu0
    %v1566 = vadd.f32 %v1373, %v1565
    %v1567 = vpop.f32.mrf.mxu0
    %v1568 = vadd.f32 %v1375, %v1567
    %v1569 = vpop.f32.mrf.mxu0
    %v1570 = vadd.f32 %v1377, %v1569
    %1571 = vmatprep.mubr.bf16.mxu0 0
    %1572 = vmatmul.mubr.bf16.gmra.mxu0 %v849
    %v1573 = vpop.f32.mrf.mxu0
    %v1574 = vadd.f32 %v1381, %v1573
    %v1575 = vpop.f32.mrf.mxu0
    %v1576 = vadd.f32 %v1383, %v1575
    %v1577 = vpop.f32.mrf.mxu0
    %v1578 = vadd.f32 %v1385, %v1577
    %v1579 = vpop.f32.mrf.mxu0
    %v1580 = vadd.f32 %v1387, %v1579
    %1581 = vmatprep.mubr.bf16.mxu0 0
    %1582 = vmatmul.mubr.bf16.gmra.mxu0 %v852
    %v1583 = vpop.f32.mrf.mxu0
    %v1584 = vadd.f32 %v1391, %v1583
    %v1585 = vpop.f32.mrf.mxu0
    %v1586 = vadd.f32 %v1393, %v1585
    %v1587 = vpop.f32.mrf.mxu0
    %v1588 = vadd.f32 %v1395, %v1587
    %v1589 = vpop.f32.mrf.mxu0
    %v1590 = vadd.f32 %v1397, %v1589
    %1591 = vmatprep.mubr.bf16.mxu0 0
    %1592 = vmatmul.mubr.bf16.gmra.mxu0 %v855
    %v1593 = vpop.f32.mrf.mxu0
    %v1594 = vadd.f32 %v1401, %v1593
    %v1595 = vpop.f32.mrf.mxu0
    %v1596 = vadd.f32 %v1403, %v1595
    %v1597 = vpop.f32.mrf.mxu0
    %v1598 = vadd.f32 %v1405, %v1597
    %v1599 = vpop.f32.mrf.mxu0
    %v1600 = vadd.f32 %v1407, %v1599
    %1601 = vmatprep.mubr.bf16.mxu0 0
    %1602 = vmatmul.mubr.bf16.gmra.mxu0 %v858
    %v1603 = vpop.f32.mrf.mxu0
    %v1604 = vadd.f32 %v1411, %v1603
    %v1605 = vpop.f32.mrf.mxu0
    %v1606 = vadd.f32 %v1413, %v1605
    %v1607 = vpop.f32.mrf.mxu0
    %v1608 = vadd.f32 %v1415, %v1607
    %v1609 = vpop.f32.mrf.mxu0
    %v1610 = vadd.f32 %v1417, %v1609
    %1611 = vmatprep.mubr.bf16.mxu0 0
    %1612 = vmatmul.mubr.bf16.gmra.mxu0 %v861
    %v1613 = vpop.f32.mrf.mxu0
    %v1614 = vadd.f32 %v1421, %v1613
    %v1615 = vpop.f32.mrf.mxu0
    %v1616 = vadd.f32 %v1423, %v1615
    %v1617 = vpop.f32.mrf.mxu0
    %v1618 = vadd.f32 %v1425, %v1617
    %v1619 = vpop.f32.mrf.mxu0
    %v1620 = vadd.f32 %v1427, %v1619
    %1621 = vmatprep.mubr.bf16.mxu0 0
    %1622 = vmatmul.mubr.bf16.gmra.mxu0 %v864
    %v1623 = vpop.f32.mrf.mxu0
    %v1624 = vadd.f32 %v1431, %v1623
    %v1625 = vpop.f32.mrf.mxu0
    %v1626 = vadd.f32 %v1433, %v1625
    %v1627 = vpop.f32.mrf.mxu0
    %v1628 = vadd.f32 %v1435, %v1627
    %v1629 = vpop.f32.mrf.mxu0
    %v1630 = vadd.f32 %v1437, %v1629
    %1631 = vmatprep.mubr.bf16.mxu0 0
    %1632 = vmatmul.mubr.bf16.gmra.mxu0 %v867
    %v1633 = vpop.f32.mrf.mxu0
    %v1634 = vadd.f32 %v1441, %v1633
    %v1635 = vpop.f32.mrf.mxu0
    %v1636 = vadd.f32 %v1443, %v1635
    %v1637 = vpop.f32.mrf.mxu0
    %v1638 = vadd.f32 %v1445, %v1637
    %v1639 = vpop.f32.mrf.mxu0
    %v1640 = vadd.f32 %v1447, %v1639
    %1641 = vmatprep.mubr.bf16.mxu0 0
    %1642 = vmatmul.mubr.bf16.gmra.mxu0 %v870
    %v1643 = vpop.f32.mrf.mxu0
    %v1644 = vadd.f32 %v1451, %v1643
    %v1645 = vpop.f32.mrf.mxu0
    %v1646 = vadd.f32 %v1453, %v1645
    %v1647 = vpop.f32.mrf.mxu0
    %v1648 = vadd.f32 %v1455, %v1647
    %v1649 = vpop.f32.mrf.mxu0
    %v1650 = vadd.f32 %v1457, %v1649
    %1651 = vmatprep.mubr.bf16.mxu0 0
    %1652 = vmatmul.mubr.bf16.gmra.mxu0 %v873
    %v1653 = vpop.f32.mrf.mxu0
    %v1654 = vadd.f32 %v1461, %v1653
    %v1655 = vpop.f32.mrf.mxu0
    %v1656 = vadd.f32 %v1463, %v1655
    %v1657 = vpop.f32.mrf.mxu0
    %v1658 = vadd.f32 %v1465, %v1657
    %v1659 = vpop.f32.mrf.mxu0
    %v1660 = vadd.f32 %v1467, %v1659
    %1661 = vdwg.mxu0
    %1662 = vmatprep.subr.bf16.mxu0 0
    %1663 = vmatpush1.bf16.msra.mxu0 %v1155
    %1664 = vmatprep.subr.bf16.mxu0 0
    %1665 = vmatpush1.bf16.msra.mxu0 %v1152
    %1666 = vmatprep.subr.bf16.mxu0 0
    %1667 = vmatpush1.bf16.msra.mxu0 %v1149
    %1668 = vmatprep.subr.bf16.mxu0 0
    %1669 = vmatpush1.bf16.msra.mxu0 %v1146
    %1670 = vmatprep.subr.bf16.mxu0 0
    %1671 = vmatpush1.bf16.msra.mxu0 %v1143
    %1672 = vmatprep.subr.bf16.mxu0 0
    %1673 = vmatpush1.bf16.msra.mxu0 %v1140
    %1674 = vmatprep.subr.bf16.mxu0 0
    %1675 = vmatpush1.bf16.msra.mxu0 %v1137
    %1676 = vmatprep.subr.bf16.mxu0 0
    %1677 = vmatpush1.bf16.msra.mxu0 %v1134
    %1678 = vmatprep.subr.bf16.mxu0 0
    %1679 = vmatpush2.bf16.msra.mxu0 %v1179
    %1680 = vmatprep.subr.bf16.mxu0 0
    %1681 = vmatpush2.bf16.msra.mxu0 %v1176
    %1682 = vmatprep.subr.bf16.mxu0 0
    %1683 = vmatpush2.bf16.msra.mxu0 %v1173
    %1684 = vmatprep.subr.bf16.mxu0 0
    %1685 = vmatpush2.bf16.msra.mxu0 %v1170
    %1686 = vmatprep.subr.bf16.mxu0 0
    %1687 = vmatpush2.bf16.msra.mxu0 %v1167
    %1688 = vmatprep.subr.bf16.mxu0 0
    %1689 = vmatpush2.bf16.msra.mxu0 %v1164
    %1690 = vmatprep.subr.bf16.mxu0 0
    %1691 = vmatpush2.bf16.msra.mxu0 %v1161
    %1692 = vmatprep.subr.bf16.mxu0 0
    %1693 = vmatpush2.bf16.msra.mxu0 %v1158
    %1694 = vmatprep.mubr.bf16.mxu0 %v827
    %1695 = vmatmul.mubr.bf16.gmra.mxu0 %v826
    %v1696 = vpop.f32.mrf.mxu0
    %v1697 = vadd.f32 %v888, %v1696
    %v1698 = vpop.f32.mrf.mxu0
    %v1699 = vpop.f32.mrf.mxu0
    %v1700 = vadd.f32 %v888, %v1699
    %v1701 = vpop.f32.mrf.mxu0
    %1702 = vmatprep.mubr.bf16.mxu0 %v830
    %1703 = vmatmul.mubr.bf16.gmra.mxu0 %v829
    %v1704 = vpop.f32.mrf.mxu0
    %v1705 = vadd.f32 %v888, %v1704
    %v1706 = vpop.f32.mrf.mxu0
    %v1707 = vpop.f32.mrf.mxu0
    %v1708 = vadd.f32 %v888, %v1707
    %v1709 = vpop.f32.mrf.mxu0
    %1710 = vmatprep.mubr.bf16.mxu0 %v833
    %1711 = vmatmul.mubr.bf16.gmra.mxu0 %v832
    %v1712 = vpop.f32.mrf.mxu0
    %v1713 = vadd.f32 %v888, %v1712
    %v1714 = vpop.f32.mrf.mxu0
    %v1715 = vpop.f32.mrf.mxu0
    %v1716 = vadd.f32 %v888, %v1715
    %v1717 = vpop.f32.mrf.mxu0
    %1718 = vmatprep.mubr.bf16.mxu0 %v836
    %1719 = vmatmul.mubr.bf16.gmra.mxu0 %v835
    %v1720 = vpop.f32.mrf.mxu0
    %v1721 = vadd.f32 %v888, %v1720
    %v1722 = vpop.f32.mrf.mxu0
    %v1723 = vpop.f32.mrf.mxu0
    %v1724 = vadd.f32 %v888, %v1723
    %v1725 = vpop.f32.mrf.mxu0
    %1726 = vmatprep.mubr.bf16.mxu0 %v839
    %1727 = vmatmul.mubr.bf16.gmra.mxu0 %v838
    %v1728 = vpop.f32.mrf.mxu0
    %v1729 = vadd.f32 %v888, %v1728
    %v1730 = vpop.f32.mrf.mxu0
    %v1731 = vpop.f32.mrf.mxu0
    %v1732 = vadd.f32 %v888, %v1731
    %v1733 = vpop.f32.mrf.mxu0
    %1734 = vmatprep.mubr.bf16.mxu0 %v842
    %1735 = vmatmul.mubr.bf16.gmra.mxu0 %v841
    %v1736 = vpop.f32.mrf.mxu0
    %v1737 = vadd.f32 %v888, %v1736
    %v1738 = vpop.f32.mrf.mxu0
    %v1739 = vpop.f32.mrf.mxu0
    %v1740 = vadd.f32 %v888, %v1739
    %v1741 = vpop.f32.mrf.mxu0
    %1742 = vmatprep.mubr.bf16.mxu0 %v845
    %1743 = vmatmul.mubr.bf16.gmra.mxu0 %v844
    %v1744 = vpop.f32.mrf.mxu0
    %v1745 = vadd.f32 %v888, %v1744
    %v1746 = vpop.f32.mrf.mxu0
    %v1747 = vpop.f32.mrf.mxu0
    %v1748 = vadd.f32 %v888, %v1747
    %v1749 = vpop.f32.mrf.mxu0
    %1750 = vmatprep.mubr.bf16.mxu0 %v848
    %1751 = vmatmul.mubr.bf16.gmra.mxu0 %v847
    %v1752 = vpop.f32.mrf.mxu0
    %v1753 = vadd.f32 %v888, %v1752
    %v1754 = vpop.f32.mrf.mxu0
    %v1755 = vpop.f32.mrf.mxu0
    %v1756 = vadd.f32 %v888, %v1755
    %v1757 = vpop.f32.mrf.mxu0
    %1758 = vmatprep.mubr.bf16.mxu0 %v851
    %1759 = vmatmul.mubr.bf16.gmra.mxu0 %v850
    %v1760 = vpop.f32.mrf.mxu0
    %v1761 = vadd.f32 %v888, %v1760
    %v1762 = vpop.f32.mrf.mxu0
    %v1763 = vpop.f32.mrf.mxu0
    %v1764 = vadd.f32 %v888, %v1763
    %v1765 = vpop.f32.mrf.mxu0
    %1766 = vmatprep.mubr.bf16.mxu0 %v854
    %1767 = vmatmul.mubr.bf16.gmra.mxu0 %v853
    %v1768 = vpop.f32.mrf.mxu0
    %v1769 = vadd.f32 %v888, %v1768
    %v1770 = vpop.f32.mrf.mxu0
    %v1771 = vpop.f32.mrf.mxu0
    %v1772 = vadd.f32 %v888, %v1771
    %v1773 = vpop.f32.mrf.mxu0
    %1774 = vmatprep.mubr.bf16.mxu0 %v857
    %1775 = vmatmul.mubr.bf16.gmra.mxu0 %v856
    %v1776 = vpop.f32.mrf.mxu0
    %v1777 = vadd.f32 %v888, %v1776
    %v1778 = vpop.f32.mrf.mxu0
    %v1779 = vpop.f32.mrf.mxu0
    %v1780 = vadd.f32 %v888, %v1779
    %v1781 = vpop.f32.mrf.mxu0
    %1782 = vmatprep.mubr.bf16.mxu0 %v860
    %1783 = vmatmul.mubr.bf16.gmra.mxu0 %v859
    %v1784 = vpop.f32.mrf.mxu0
    %v1785 = vadd.f32 %v888, %v1784
    %v1786 = vpop.f32.mrf.mxu0
    %v1787 = vpop.f32.mrf.mxu0
    %v1788 = vadd.f32 %v888, %v1787
    %v1789 = vpop.f32.mrf.mxu0
    %1790 = vmatprep.mubr.bf16.mxu0 %v863
    %1791 = vmatmul.mubr.bf16.gmra.mxu0 %v862
    %v1792 = vpop.f32.mrf.mxu0
    %v1793 = vadd.f32 %v888, %v1792
    %v1794 = vpop.f32.mrf.mxu0
    %v1795 = vpop.f32.mrf.mxu0
    %v1796 = vadd.f32 %v888, %v1795
    %v1797 = vpop.f32.mrf.mxu0
    %1798 = vmatprep.mubr.bf16.mxu0 %v866
    %1799 = vmatmul.mubr.bf16.gmra.mxu0 %v865
    %v1800 = vpop.f32.mrf.mxu0
    %v1801 = vadd.f32 %v888, %v1800
    %v1802 = vpop.f32.mrf.mxu0
    %v1803 = vpop.f32.mrf.mxu0
    %v1804 = vadd.f32 %v888, %v1803
    %v1805 = vpop.f32.mrf.mxu0
    %1806 = vmatprep.mubr.bf16.mxu0 %v869
    %1807 = vmatmul.mubr.bf16.gmra.mxu0 %v868
    %v1808 = vpop.f32.mrf.mxu0
    %v1809 = vadd.f32 %v888, %v1808
    %v1810 = vpop.f32.mrf.mxu0
    %v1811 = vpop.f32.mrf.mxu0
    %v1812 = vadd.f32 %v888, %v1811
    %v1813 = vpop.f32.mrf.mxu0
    %1814 = vmatprep.mubr.bf16.mxu0 %v872
    %1815 = vmatmul.mubr.bf16.gmra.mxu0 %v871
    %v1816 = vpop.f32.mrf.mxu0
    %v1817 = vadd.f32 %v888, %v1816
    %v1818 = vpop.f32.mrf.mxu0
    %v1819 = vpop.f32.mrf.mxu0
    %v1820 = vadd.f32 %v888, %v1819
    %v1821 = vpop.f32.mrf.mxu0
    %1822 = vdwg.mxu0
    %1823 = vmatprep.subr.bf16.mxu0 0
    %1824 = vmatpush1.bf16.msra.mxu0 %v1203
    %1825 = vmatprep.subr.bf16.mxu0 0
    %1826 = vmatpush1.bf16.msra.mxu0 %v1200
    %1827 = vmatprep.subr.bf16.mxu0 0
    %1828 = vmatpush1.bf16.msra.mxu0 %v1197
    %1829 = vmatprep.subr.bf16.mxu0 0
    %1830 = vmatpush1.bf16.msra.mxu0 %v1194
    %1831 = vmatprep.subr.bf16.mxu0 0
    %1832 = vmatpush1.bf16.msra.mxu0 %v1191
    %1833 = vmatprep.subr.bf16.mxu0 0
    %1834 = vmatpush1.bf16.msra.mxu0 %v1188
    %1835 = vmatprep.subr.bf16.mxu0 0
    %1836 = vmatpush1.bf16.msra.mxu0 %v1185
    %1837 = vmatprep.subr.bf16.mxu0 0
    %1838 = vmatpush1.bf16.msra.mxu0 %v1182
    %1839 = vmatprep.subr.bf16.mxu0 0
    %1840 = vmatpush2.bf16.msra.mxu0 0
    %1841 = vmatprep.subr.bf16.mxu0 0
    %1842 = vmatpush2.bf16.msra.mxu0 0
    %1843 = vmatprep.subr.bf16.mxu0 0
    %1844 = vmatpush2.bf16.msra.mxu0 0
    %1845 = vmatprep.subr.bf16.mxu0 0
    %1846 = vmatpush2.bf16.msra.mxu0 0
    %1847 = vmatprep.subr.bf16.mxu0 0
    %1848 = vmatpush2.bf16.msra.mxu0 0
    %1849 = vmatprep.subr.bf16.mxu0 0
    %1850 = vmatpush2.bf16.msra.mxu0 0
    %1851 = vmatprep.subr.bf16.mxu0 0
    %1852 = vmatpush2.bf16.msra.mxu0 0
    %1853 = vmatprep.subr.bf16.mxu0 0
    %1854 = vmatpush2.bf16.msra.mxu0 0
    %1855 = vmatprep.mubr.bf16.mxu0 0
    %1856 = vmatmul.mubr.bf16.gmra.mxu0 %v828
    %v1857 = vpop.f32.mrf.mxu0
    %v1858 = vadd.f32 %v1697, %v1857
    %v1859 = vpop.f32.mrf.mxu0
    %v1860 = vpop.f32.mrf.mxu0
    %v1861 = vadd.f32 %v1700, %v1860
    %v1862 = vpop.f32.mrf.mxu0
    %1863 = vmatprep.mubr.bf16.mxu0 0
    %1864 = vmatmul.mubr.bf16.gmra.mxu0 %v831
    %v1865 = vpop.f32.mrf.mxu0
    %v1866 = vadd.f32 %v1705, %v1865
    %v1867 = vpop.f32.mrf.mxu0
    %v1868 = vpop.f32.mrf.mxu0
    %v1869 = vadd.f32 %v1708, %v1868
    %v1870 = vpop.f32.mrf.mxu0
    %1871 = vmatprep.mubr.bf16.mxu0 0
    %1872 = vmatmul.mubr.bf16.gmra.mxu0 %v834
    %v1873 = vpop.f32.mrf.mxu0
    %v1874 = vadd.f32 %v1713, %v1873
    %v1875 = vpop.f32.mrf.mxu0
    %v1876 = vpop.f32.mrf.mxu0
    %v1877 = vadd.f32 %v1716, %v1876
    %v1878 = vpop.f32.mrf.mxu0
    %1879 = vmatprep.mubr.bf16.mxu0 0
    %1880 = vmatmul.mubr.bf16.gmra.mxu0 %v837
    %v1881 = vpop.f32.mrf.mxu0
    %v1882 = vadd.f32 %v1721, %v1881
    %v1883 = vpop.f32.mrf.mxu0
    %v1884 = vpop.f32.mrf.mxu0
    %v1885 = vadd.f32 %v1724, %v1884
    %v1886 = vpop.f32.mrf.mxu0
    %1887 = vmatprep.mubr.bf16.mxu0 0
    %1888 = vmatmul.mubr.bf16.gmra.mxu0 %v840
    %v1889 = vpop.f32.mrf.mxu0
    %v1890 = vadd.f32 %v1729, %v1889
    %v1891 = vpop.f32.mrf.mxu0
    %v1892 = vpop.f32.mrf.mxu0
    %v1893 = vadd.f32 %v1732, %v1892
    %v1894 = vpop.f32.mrf.mxu0
    %1895 = vmatprep.mubr.bf16.mxu0 0
    %1896 = vmatmul.mubr.bf16.gmra.mxu0 %v843
    %v1897 = vpop.f32.mrf.mxu0
    %v1898 = vadd.f32 %v1737, %v1897
    %v1899 = vpop.f32.mrf.mxu0
    %v1900 = vpop.f32.mrf.mxu0
    %v1901 = vadd.f32 %v1740, %v1900
    %v1902 = vpop.f32.mrf.mxu0
    %1903 = vmatprep.mubr.bf16.mxu0 0
    %1904 = vmatmul.mubr.bf16.gmra.mxu0 %v846
    %v1905 = vpop.f32.mrf.mxu0
    %v1906 = vadd.f32 %v1745, %v1905
    %v1907 = vpop.f32.mrf.mxu0
    %v1908 = vpop.f32.mrf.mxu0
    %v1909 = vadd.f32 %v1748, %v1908
    %v1910 = vpop.f32.mrf.mxu0
    %1911 = vmatprep.mubr.bf16.mxu0 0
    %1912 = vmatmul.mubr.bf16.gmra.mxu0 %v849
    %v1913 = vpop.f32.mrf.mxu0
    %v1914 = vadd.f32 %v1753, %v1913
    %v1915 = vpop.f32.mrf.mxu0
    %v1916 = vpop.f32.mrf.mxu0
    %v1917 = vadd.f32 %v1756, %v1916
    %v1918 = vpop.f32.mrf.mxu0
    %1919 = vmatprep.mubr.bf16.mxu0 0
    %1920 = vmatmul.mubr.bf16.gmra.mxu0 %v852
    %v1921 = vpop.f32.mrf.mxu0
    %v1922 = vadd.f32 %v1761, %v1921
    %v1923 = vpop.f32.mrf.mxu0
    %v1924 = vpop.f32.mrf.mxu0
    %v1925 = vadd.f32 %v1764, %v1924
    %v1926 = vpop.f32.mrf.mxu0
    %1927 = vmatprep.mubr.bf16.mxu0 0
    %1928 = vmatmul.mubr.bf16.gmra.mxu0 %v855
    %v1929 = vpop.f32.mrf.mxu0
    %v1930 = vadd.f32 %v1769, %v1929
    %v1931 = vpop.f32.mrf.mxu0
    %v1932 = vpop.f32.mrf.mxu0
    %v1933 = vadd.f32 %v1772, %v1932
    %v1934 = vpop.f32.mrf.mxu0
    %1935 = vmatprep.mubr.bf16.mxu0 0
    %1936 = vmatmul.mubr.bf16.gmra.mxu0 %v858
    %v1937 = vpop.f32.mrf.mxu0
    %v1938 = vadd.f32 %v1777, %v1937
    %v1939 = vpop.f32.mrf.mxu0
    %v1940 = vpop.f32.mrf.mxu0
    %v1941 = vadd.f32 %v1780, %v1940
    %v1942 = vpop.f32.mrf.mxu0
    %1943 = vmatprep.mubr.bf16.mxu0 0
    %1944 = vmatmul.mubr.bf16.gmra.mxu0 %v861
    %v1945 = vpop.f32.mrf.mxu0
    %v1946 = vadd.f32 %v1785, %v1945
    %v1947 = vpop.f32.mrf.mxu0
    %v1948 = vpop.f32.mrf.mxu0
    %v1949 = vadd.f32 %v1788, %v1948
    %v1950 = vpop.f32.mrf.mxu0
    %1951 = vmatprep.mubr.bf16.mxu0 0
    %1952 = vmatmul.mubr.bf16.gmra.mxu0 %v864
    %v1953 = vpop.f32.mrf.mxu0
    %v1954 = vadd.f32 %v1793, %v1953
    %v1955 = vpop.f32.mrf.mxu0
    %v1956 = vpop.f32.mrf.mxu0
    %v1957 = vadd.f32 %v1796, %v1956
    %v1958 = vpop.f32.mrf.mxu0
    %1959 = vmatprep.mubr.bf16.mxu0 0
    %1960 = vmatmul.mubr.bf16.gmra.mxu0 %v867
    %v1961 = vpop.f32.mrf.mxu0
    %v1962 = vadd.f32 %v1801, %v1961
    %v1963 = vpop.f32.mrf.mxu0
    %v1964 = vpop.f32.mrf.mxu0
    %v1965 = vadd.f32 %v1804, %v1964
    %v1966 = vpop.f32.mrf.mxu0
    %1967 = vmatprep.mubr.bf16.mxu0 0
    %1968 = vmatmul.mubr.bf16.gmra.mxu0 %v870
    %v1969 = vpop.f32.mrf.mxu0
    %v1970 = vadd.f32 %v1809, %v1969
    %v1971 = vpop.f32.mrf.mxu0
    %v1972 = vpop.f32.mrf.mxu0
    %v1973 = vadd.f32 %v1812, %v1972
    %v1974 = vpop.f32.mrf.mxu0
    %1975 = vmatprep.mubr.bf16.mxu0 0
    %1976 = vmatmul.mubr.bf16.gmra.mxu0 %v873
    %v1977 = vpop.f32.mrf.mxu0
    %v1978 = vadd.f32 %v1817, %v1977
    %v1979 = vpop.f32.mrf.mxu0
    %v1980 = vpop.f32.mrf.mxu0
    %v1981 = vadd.f32 %v1820, %v1980
    %v1982 = vpop.f32.mrf.mxu0
    %1983 = vdwg.mxu0
    %v1984 = vmax.f32 %v1504, 0.0
    %v1985 = vmax.f32 %v1506, 0.0
    %v1986 = vmax.f32 %v1858, 0.0
    %v1987 = vmax.f32 %v1508, 0.0
    %v1988 = vmax.f32 %v1510, 0.0
    %v1989 = vmax.f32 %v1861, 0.0
    %v1990 = vmax.f32 %v1514, 0.0
    %v1991 = vmax.f32 %v1516, 0.0
    %v1992 = vmax.f32 %v1866, 0.0
    %v1993 = vmax.f32 %v1518, 0.0
    %v1994 = vmax.f32 %v1520, 0.0
    %v1995 = vmax.f32 %v1869, 0.0
    %v1996 = vmax.f32 %v1524, 0.0
    %v1997 = vmax.f32 %v1526, 0.0
    %v1998 = vmax.f32 %v1874, 0.0
    %v1999 = vmax.f32 %v1528, 0.0
    %v2000 = vmax.f32 %v1530, 0.0
    %v2001 = vmax.f32 %v1877, 0.0
    %v2002 = vmax.f32 %v1534, 0.0
    %v2003 = vmax.f32 %v1536, 0.0
    %v2004 = vmax.f32 %v1882, 0.0
    %v2005 = vmax.f32 %v1538, 0.0
    %v2006 = vmax.f32 %v1540, 0.0
    %v2007 = vmax.f32 %v1885, 0.0
    %v2008 = vmax.f32 %v1544, 0.0
    %v2009 = vmax.f32 %v1546, 0.0
    %v2010 = vmax.f32 %v1890, 0.0
    %v2011 = vmax.f32 %v1548, 0.0
    %v2012 = vmax.f32 %v1550, 0.0
    %v2013 = vmax.f32 %v1893, 0.0
    %v2014 = vmax.f32 %v1554, 0.0
    %v2015 = vmax.f32 %v1556, 0.0
    %v2016 = vmax.f32 %v1898, 0.0
    %v2017 = vmax.f32 %v1558, 0.0
    %v2018 = vmax.f32 %v1560, 0.0
    %v2019 = vmax.f32 %v1901, 0.0
    %v2020 = vmax.f32 %v1564, 0.0
    %v2021 = vmax.f32 %v1566, 0.0
    %v2022 = vmax.f32 %v1906, 0.0
    %v2023 = vmax.f32 %v1568, 0.0
    %v2024 = vmax.f32 %v1570, 0.0
    %v2025 = vmax.f32 %v1909, 0.0
    %v2026 = vmax.f32 %v1574, 0.0
    %v2027 = vmax.f32 %v1576, 0.0
    %v2028 = vmax.f32 %v1914, 0.0
    %v2029 = vmax.f32 %v1578, 0.0
    %v2030 = vmax.f32 %v1580, 0.0
    %v2031 = vmax.f32 %v1917, 0.0
    %v2032 = vmax.f32 %v1584, 0.0
    %v2033 = vmax.f32 %v1586, 0.0
    %v2034 = vmax.f32 %v1922, 0.0
    %v2035 = vmax.f32 %v1588, 0.0
    %v2036 = vmax.f32 %v1590, 0.0
    %v2037 = vmax.f32 %v1925, 0.0
    %v2038 = vmax.f32 %v1594, 0.0
    %v2039 = vmax.f32 %v1596, 0.0
    %v2040 = vmax.f32 %v1930, 0.0
    %v2041 = vmax.f32 %v1598, 0.0
    %v2042 = vmax.f32 %v1600, 0.0
    %v2043 = vmax.f32 %v1933, 0.0
    %v2044 = vmax.f32 %v1604, 0.0
    %v2045 = vmax.f32 %v1606, 0.0
    %v2046 = vmax.f32 %v1938, 0.0
    %v2047 = vmax.f32 %v1608, 0.0
    %v2048 = vmax.f32 %v1610, 0.0
    %v2049 = vmax.f32 %v1941, 0.0
    %v2050 = vmax.f32 %v1614, 0.0
    %v2051 = vmax.f32 %v1616, 0.0
    %v2052 = vmax.f32 %v1946, 0.0
    %v2053 = vmax.f32 %v1618, 0.0
    %v2054 = vmax.f32 %v1620, 0.0
    %v2055 = vmax.f32 %v1949, 0.0
    %v2056 = vmax.f32 %v1624, 0.0
    %v2057 = vmax.f32 %v1626, 0.0
    %v2058 = vmax.f32 %v1954, 0.0
    %v2059 = vmax.f32 %v1628, 0.0
    %v2060 = vmax.f32 %v1630, 0.0
    %v2061 = vmax.f32 %v1957, 0.0
    %v2062 = vmax.f32 %v1634, 0.0
    %v2063 = vmax.f32 %v1636, 0.0
    %v2064 = vmax.f32 %v1962, 0.0
    %v2065 = vmax.f32 %v1638, 0.0
    %v2066 = vmax.f32 %v1640, 0.0
    %v2067 = vmax.f32 %v1965, 0.0
    %v2068 = vmax.f32 %v1644, 0.0
    %v2069 = vmax.f32 %v1646, 0.0
    %v2070 = vmax.f32 %v1970, 0.0
    %v2071 = vmax.f32 %v1648, 0.0
    %v2072 = vmax.f32 %v1650, 0.0
    %v2073 = vmax.f32 %v1973, 0.0
    %v2074 = vmax.f32 %v1654, 0.0
    %v2075 = vmax.f32 %v1656, 0.0
    %v2076 = vmax.f32 %v1978, 0.0
    %v2077 = vmax.f32 %v1658, 0.0
    %v2078 = vmax.f32 %v1660, 0.0
    %v2079 = vmax.f32 %v1981, 0.0
    %v2080 = vld [vmem:[#allocation5 + $0x300] sm:$0xf]
    %v2081 = vld [vmem:[#allocation5 + $0x30c] sm:$0xf]
    %v2082 = vld [vmem:[#allocation5 + $0x318] sm:$0xf]
    %v2083 = vld [vmem:[#allocation5 + $0x324] sm:$0xf]
    %v2084 = vld [vmem:[#allocation5 + $0x330] sm:$0xf]
    %v2085 = vld [vmem:[#allocation5 + $0x33c] sm:$0xf]
    %v2086 = vld [vmem:[#allocation5 + $0x348] sm:$0xf]
    %v2087 = vld [vmem:[#allocation5 + $0x354] sm:$0xf]
    %v2088 = vld [vmem:[#allocation5 + $0x360] sm:$0xf]
    %v2089 = vld [vmem:[#allocation5 + $0x36c] sm:$0xf]
    %v2090 = vld [vmem:[#allocation5 + $0x378] sm:$0xf]
    %v2091 = vld [vmem:[#allocation5 + $0x384] sm:$0xf]
    %v2092 = vld [vmem:[#allocation5 + $0x390] sm:$0xf]
    %v2093 = vld [vmem:[#allocation5 + $0x39c] sm:$0xf]
    %v2094 = vld [vmem:[#allocation5 + $0x3a8] sm:$0xf]
    %v2095 = vld [vmem:[#allocation5 + $0x3b4] sm:$0xf]
    %v2096 = vld [vmem:[#allocation5 + $0x3c0] sm:$0xf]
    %v2097 = vld [vmem:[#allocation5 + $0x3cc] sm:$0xf]
    %v2098 = vld [vmem:[#allocation5 + $0x3d8] sm:$0xf]
    %v2099 = vld [vmem:[#allocation5 + $0x3e4] sm:$0xf]
    %v2100 = vld [vmem:[#allocation5 + $0x3f0] sm:$0xf]
    %v2101 = vld [vmem:[#allocation5 + $0x3fc] sm:$0xf]
    %v2102 = vld [vmem:[#allocation5 + $0x408] sm:$0xf]
    %v2103 = vld [vmem:[#allocation5 + $0x414] sm:$0xf]
    %v2104 = vld [vmem:[#allocation5 + $0x420] sm:$0xf]
    %v2105 = vld [vmem:[#allocation5 + $0x42c] sm:$0xf]
    %v2106 = vld [vmem:[#allocation5 + $0x438] sm:$0xf]
    %v2107 = vld [vmem:[#allocation5 + $0x444] sm:$0xf]
    %v2108 = vld [vmem:[#allocation5 + $0x450] sm:$0xf]
    %v2109 = vld [vmem:[#allocation5 + $0x45c] sm:$0xf]
    %v2110 = vld [vmem:[#allocation5 + $0x468] sm:$0xf]
    %v2111 = vld [vmem:[#allocation5 + $0x474] sm:$0xf]
    %v2112 = vld [vmem:[#allocation5 + $0x480] sm:$0xf]
    %v2113 = vld [vmem:[#allocation5 + $0x48c] sm:$0xf]
    %v2114 = vld [vmem:[#allocation5 + $0x498] sm:$0xf]
    %v2115 = vld [vmem:[#allocation5 + $0x4a4] sm:$0xf]
    %v2116 = vld [vmem:[#allocation5 + $0x4b0] sm:$0xf]
    %v2117 = vld [vmem:[#allocation5 + $0x4bc] sm:$0xf]
    %v2118 = vld [vmem:[#allocation5 + $0x4c8] sm:$0xf]
    %v2119 = vld [vmem:[#allocation5 + $0x4d4] sm:$0xf]
    %v2120 = vld [vmem:[#allocation5 + $0x4e0] sm:$0xf]
    %v2121 = vld [vmem:[#allocation5 + $0x4ec] sm:$0xf]
    %v2122 = vld [vmem:[#allocation5 + $0x4f8] sm:$0xf]
    %v2123 = vld [vmem:[#allocation5 + $0x504] sm:$0xf]
    %v2124 = vld [vmem:[#allocation5 + $0x510] sm:$0xf]
    %v2125 = vld [vmem:[#allocation5 + $0x51c] sm:$0xf]
    %v2126 = vld [vmem:[#allocation5 + $0x528] sm:$0xf]
    %v2127 = vld [vmem:[#allocation5 + $0x534] sm:$0xf]
    %v2128 = vpack.c.bf16 %v1987, %v1984
    %v2129 = vpack.c.bf16 %v1988, %v1985
    %v2130 = vpack.c.bf16 %v1989, %v1986
    %v2131 = vpack.c.bf16 %v1993, %v1990
    %v2132 = vpack.c.bf16 %v1994, %v1991
    %v2133 = vpack.c.bf16 %v1995, %v1992
    %v2134 = vpack.c.bf16 %v1999, %v1996
    %v2135 = vpack.c.bf16 %v2000, %v1997
    %v2136 = vpack.c.bf16 %v2001, %v1998
    %v2137 = vpack.c.bf16 %v2005, %v2002
    %v2138 = vpack.c.bf16 %v2006, %v2003
    %v2139 = vpack.c.bf16 %v2007, %v2004
    %v2140 = vpack.c.bf16 %v2011, %v2008
    %v2141 = vpack.c.bf16 %v2012, %v2009
    %v2142 = vpack.c.bf16 %v2013, %v2010
    %v2143 = vpack.c.bf16 %v2017, %v2014
    %v2144 = vpack.c.bf16 %v2018, %v2015
    %v2145 = vpack.c.bf16 %v2019, %v2016
    %v2146 = vpack.c.bf16 %v2023, %v2020
    %v2147 = vpack.c.bf16 %v2024, %v2021
    %v2148 = vpack.c.bf16 %v2025, %v2022
    %v2149 = vpack.c.bf16 %v2029, %v2026
    %v2150 = vpack.c.bf16 %v2030, %v2027
    %v2151 = vpack.c.bf16 %v2031, %v2028
    %v2152 = vpack.c.bf16 %v2035, %v2032
    %v2153 = vpack.c.bf16 %v2036, %v2033
    %v2154 = vpack.c.bf16 %v2037, %v2034
    %v2155 = vpack.c.bf16 %v2041, %v2038
    %v2156 = vpack.c.bf16 %v2042, %v2039
    %v2157 = vpack.c.bf16 %v2043, %v2040
    %v2158 = vpack.c.bf16 %v2047, %v2044
    %v2159 = vpack.c.bf16 %v2048, %v2045
    %v2160 = vpack.c.bf16 %v2049, %v2046
    %v2161 = vpack.c.bf16 %v2053, %v2050
    %v2162 = vpack.c.bf16 %v2054, %v2051
    %v2163 = vpack.c.bf16 %v2055, %v2052
    %v2164 = vpack.c.bf16 %v2059, %v2056
    %v2165 = vpack.c.bf16 %v2060, %v2057
    %v2166 = vpack.c.bf16 %v2061, %v2058
    %v2167 = vpack.c.bf16 %v2065, %v2062
    %v2168 = vpack.c.bf16 %v2066, %v2063
    %v2169 = vpack.c.bf16 %v2067, %v2064
    %v2170 = vpack.c.bf16 %v2071, %v2068
    %v2171 = vpack.c.bf16 %v2072, %v2069
    %v2172 = vpack.c.bf16 %v2073, %v2070
    %v2173 = vpack.c.bf16 %v2077, %v2074
    %v2174 = vpack.c.bf16 %v2078, %v2075
    %v2175 = vpack.c.bf16 %v2079, %v2076
    %v2176 = vld [vmem:[#allocation7 + $0x2] ss:$0 sm:$0xff]
    %v2225 = vunpack.c.l.b16 %v2080
    %v2226 = vunpack.c.l.b16 %v2081
    %v2227 = vunpack.c.l.b16 %v2082
    %v2228 = vunpack.c.l.b16 %v2083
    %v2229 = vunpack.c.l.b16 %v2084
    %v2230 = vunpack.c.l.b16 %v2085
    %v2231 = vunpack.c.l.b16 %v2086
    %v2232 = vunpack.c.l.b16 %v2087
    %v2233 = vunpack.c.l.b16 %v2088
    %v2234 = vunpack.c.l.b16 %v2089
    %v2235 = vunpack.c.l.b16 %v2090
    %v2236 = vunpack.c.l.b16 %v2091
    %v2237 = vunpack.c.l.b16 %v2092
    %v2238 = vunpack.c.l.b16 %v2093
    %v2239 = vunpack.c.l.b16 %v2094
    %v2240 = vunpack.c.l.b16 %v2095
    %v2241 = vunpack.c.l.b16 %v2096
    %v2242 = vunpack.c.l.b16 %v2097
    %v2243 = vunpack.c.l.b16 %v2098
    %v2244 = vunpack.c.l.b16 %v2099
    %v2245 = vunpack.c.l.b16 %v2100
    %v2246 = vunpack.c.l.b16 %v2101
    %v2247 = vunpack.c.l.b16 %v2102
    %v2248 = vunpack.c.l.b16 %v2103
    %v2249 = vunpack.c.l.b16 %v2104
    %v2250 = vunpack.c.l.b16 %v2105
    %v2251 = vunpack.c.l.b16 %v2106
    %v2252 = vunpack.c.l.b16 %v2107
    %v2253 = vunpack.c.l.b16 %v2108
    %v2254 = vunpack.c.l.b16 %v2109
    %v2255 = vunpack.c.l.b16 %v2110
    %v2256 = vunpack.c.l.b16 %v2111
    %v2257 = vunpack.c.l.b16 %v2112
    %v2258 = vunpack.c.l.b16 %v2113
    %v2259 = vunpack.c.l.b16 %v2114
    %v2260 = vunpack.c.l.b16 %v2115
    %v2261 = vunpack.c.l.b16 %v2116
    %v2262 = vunpack.c.l.b16 %v2117
    %v2263 = vunpack.c.l.b16 %v2118
    %v2264 = vunpack.c.l.b16 %v2119
    %v2265 = vunpack.c.l.b16 %v2120
    %v2266 = vunpack.c.l.b16 %v2121
    %v2267 = vunpack.c.l.b16 %v2122
    %v2268 = vunpack.c.l.b16 %v2123
    %v2269 = vunpack.c.l.b16 %v2124
    %v2270 = vunpack.c.l.b16 %v2125
    %v2271 = vunpack.c.l.b16 %v2126
    %v2272 = vunpack.c.l.b16 %v2127
    %v2273 = vpack.c.b16 %v2226, %v2225
    %v2274 = vpack.c.b16 %v2228, %v2227
    %v2275 = vpack.c.b16 %v2230, %v2229
    %v2276 = vpack.c.b16 %v2232, %v2231
    %v2277 = vpack.c.b16 %v2234, %v2233
    %v2278 = vpack.c.b16 %v2236, %v2235
    %v2279 = vpack.c.b16 %v2238, %v2237
    %v2280 = vpack.c.b16 %v2240, %v2239
    %v2281 = vpack.c.b16 %v2242, %v2241
    %v2282 = vpack.c.b16 %v2244, %v2243
    %v2283 = vpack.c.b16 %v2246, %v2245
    %v2284 = vpack.c.b16 %v2248, %v2247
    %v2285 = vpack.c.b16 %v2250, %v2249
    %v2286 = vpack.c.b16 %v2252, %v2251
    %v2287 = vpack.c.b16 %v2254, %v2253
    %v2288 = vpack.c.b16 %v2256, %v2255
    %v2289 = vpack.c.b16 %v2258, %v2257
    %v2290 = vpack.c.b16 %v2260, %v2259
    %v2291 = vpack.c.b16 %v2262, %v2261
    %v2292 = vpack.c.b16 %v2264, %v2263
    %v2293 = vpack.c.b16 %v2266, %v2265
    %v2294 = vpack.c.b16 %v2268, %v2267
    %v2295 = vpack.c.b16 %v2270, %v2269
    %v2296 = vpack.c.b16 %v2272, %v2271
    %2321 = vmatprep.subr.bf16.mxu0 0
    %2322 = vmatpush1.bf16.msra.mxu0 %v2280
    %2323 = vmatprep.subr.bf16.mxu0 0
    %2324 = vmatpush1.bf16.msra.mxu0 %v2279
    %2325 = vmatprep.subr.bf16.mxu0 0
    %2326 = vmatpush1.bf16.msra.mxu0 %v2278
    %2327 = vmatprep.subr.bf16.mxu0 0
    %2328 = vmatpush1.bf16.msra.mxu0 %v2277
    %2329 = vmatprep.subr.bf16.mxu0 0
    %2330 = vmatpush1.bf16.msra.mxu0 %v2276
    %2331 = vmatprep.subr.bf16.mxu0 0
    %2332 = vmatpush1.bf16.msra.mxu0 %v2275
    %2333 = vmatprep.subr.bf16.mxu0 0
    %2334 = vmatpush1.bf16.msra.mxu0 %v2274
    %2335 = vmatprep.subr.bf16.mxu0 0
    %2336 = vmatpush1.bf16.msra.mxu0 %v2273
    %2337 = vmatprep.subr.bf16.mxu0 0
    %2338 = vmatpush2.bf16.msra.mxu0 %v2288
    %2339 = vmatprep.subr.bf16.mxu0 0
    %2340 = vmatpush2.bf16.msra.mxu0 %v2287
    %2341 = vmatprep.subr.bf16.mxu0 0
    %2342 = vmatpush2.bf16.msra.mxu0 %v2286
    %2343 = vmatprep.subr.bf16.mxu0 0
    %2344 = vmatpush2.bf16.msra.mxu0 %v2285
    %2345 = vmatprep.subr.bf16.mxu0 0
    %2346 = vmatpush2.bf16.msra.mxu0 %v2284
    %2347 = vmatprep.subr.bf16.mxu0 0
    %2348 = vmatpush2.bf16.msra.mxu0 %v2283
    %2349 = vmatprep.subr.bf16.mxu0 0
    %2350 = vmatpush2.bf16.msra.mxu0 %v2282
    %2351 = vmatprep.subr.bf16.mxu0 0
    %2352 = vmatpush2.bf16.msra.mxu0 %v2281
    %2353 = vmatprep.mubr.bf16.mxu0 %v2129
    %2354 = vmatmul.mubr.bf16.gmra.mxu0 %v2128
    %v2355 = vpop.f32.mrf.mxu0
    %v2356 = vadd.f32 %v2176, %v2355
    %v2357 = vpop.f32.mrf.mxu0
    %v2358 = vpop.f32.mrf.mxu0
    %v2359 = vadd.f32 %v2176, %v2358
    %v2360 = vpop.f32.mrf.mxu0
    %2361 = vmatprep.mubr.bf16.mxu0 %v2132
    %2362 = vmatmul.mubr.bf16.gmra.mxu0 %v2131
    %v2363 = vpop.f32.mrf.mxu0
    %v2364 = vadd.f32 %v2176, %v2363
    %v2365 = vpop.f32.mrf.mxu0
    %v2366 = vpop.f32.mrf.mxu0
    %v2367 = vadd.f32 %v2176, %v2366
    %v2368 = vpop.f32.mrf.mxu0
    %2369 = vmatprep.mubr.bf16.mxu0 %v2135
    %2370 = vmatmul.mubr.bf16.gmra.mxu0 %v2134
    %v2371 = vpop.f32.mrf.mxu0
    %v2372 = vadd.f32 %v2176, %v2371
    %v2373 = vpop.f32.mrf.mxu0
    %v2374 = vpop.f32.mrf.mxu0
    %v2375 = vadd.f32 %v2176, %v2374
    %v2376 = vpop.f32.mrf.mxu0
    %2377 = vmatprep.mubr.bf16.mxu0 %v2138
    %2378 = vmatmul.mubr.bf16.gmra.mxu0 %v2137
    %v2379 = vpop.f32.mrf.mxu0
    %v2380 = vadd.f32 %v2176, %v2379
    %v2381 = vpop.f32.mrf.mxu0
    %v2382 = vpop.f32.mrf.mxu0
    %v2383 = vadd.f32 %v2176, %v2382
    %v2384 = vpop.f32.mrf.mxu0
    %2385 = vmatprep.mubr.bf16.mxu0 %v2141
    %2386 = vmatmul.mubr.bf16.gmra.mxu0 %v2140
    %v2387 = vpop.f32.mrf.mxu0
    %v2388 = vadd.f32 %v2176, %v2387
    %v2389 = vpop.f32.mrf.mxu0
    %v2390 = vpop.f32.mrf.mxu0
    %v2391 = vadd.f32 %v2176, %v2390
    %v2392 = vpop.f32.mrf.mxu0
    %2393 = vmatprep.mubr.bf16.mxu0 %v2144
    %2394 = vmatmul.mubr.bf16.gmra.mxu0 %v2143
    %v2395 = vpop.f32.mrf.mxu0
    %v2396 = vadd.f32 %v2176, %v2395
    %v2397 = vpop.f32.mrf.mxu0
    %v2398 = vpop.f32.mrf.mxu0
    %v2399 = vadd.f32 %v2176, %v2398
    %v2400 = vpop.f32.mrf.mxu0
    %2401 = vmatprep.mubr.bf16.mxu0 %v2147
    %2402 = vmatmul.mubr.bf16.gmra.mxu0 %v2146
    %v2403 = vpop.f32.mrf.mxu0
    %v2404 = vadd.f32 %v2176, %v2403
    %v2405 = vpop.f32.mrf.mxu0
    %v2406 = vpop.f32.mrf.mxu0
    %v2407 = vadd.f32 %v2176, %v2406
    %v2408 = vpop.f32.mrf.mxu0
    %2409 = vmatprep.mubr.bf16.mxu0 %v2150
    %2410 = vmatmul.mubr.bf16.gmra.mxu0 %v2149
    %v2411 = vpop.f32.mrf.mxu0
    %v2412 = vadd.f32 %v2176, %v2411
    %v2413 = vpop.f32.mrf.mxu0
    %v2414 = vpop.f32.mrf.mxu0
    %v2415 = vadd.f32 %v2176, %v2414
    %v2416 = vpop.f32.mrf.mxu0
    %2417 = vmatprep.mubr.bf16.mxu0 %v2153
    %2418 = vmatmul.mubr.bf16.gmra.mxu0 %v2152
    %v2419 = vpop.f32.mrf.mxu0
    %v2420 = vadd.f32 %v2176, %v2419
    %v2421 = vpop.f32.mrf.mxu0
    %v2422 = vpop.f32.mrf.mxu0
    %v2423 = vadd.f32 %v2176, %v2422
    %v2424 = vpop.f32.mrf.mxu0
    %2425 = vmatprep.mubr.bf16.mxu0 %v2156
    %2426 = vmatmul.mubr.bf16.gmra.mxu0 %v2155
    %v2427 = vpop.f32.mrf.mxu0
    %v2428 = vadd.f32 %v2176, %v2427
    %v2429 = vpop.f32.mrf.mxu0
    %v2430 = vpop.f32.mrf.mxu0
    %v2431 = vadd.f32 %v2176, %v2430
    %v2432 = vpop.f32.mrf.mxu0
    %2433 = vmatprep.mubr.bf16.mxu0 %v2159
    %2434 = vmatmul.mubr.bf16.gmra.mxu0 %v2158
    %v2435 = vpop.f32.mrf.mxu0
    %v2436 = vadd.f32 %v2176, %v2435
    %v2437 = vpop.f32.mrf.mxu0
    %v2438 = vpop.f32.mrf.mxu0
    %v2439 = vadd.f32 %v2176, %v2438
    %v2440 = vpop.f32.mrf.mxu0
    %2441 = vmatprep.mubr.bf16.mxu0 %v2162
    %2442 = vmatmul.mubr.bf16.gmra.mxu0 %v2161
    %v2443 = vpop.f32.mrf.mxu0
    %v2444 = vadd.f32 %v2176, %v2443
    %v2445 = vpop.f32.mrf.mxu0
    %v2446 = vpop.f32.mrf.mxu0
    %v2447 = vadd.f32 %v2176, %v2446
    %v2448 = vpop.f32.mrf.mxu0
    %2449 = vmatprep.mubr.bf16.mxu0 %v2165
    %2450 = vmatmul.mubr.bf16.gmra.mxu0 %v2164
    %v2451 = vpop.f32.mrf.mxu0
    %v2452 = vadd.f32 %v2176, %v2451
    %v2453 = vpop.f32.mrf.mxu0
    %v2454 = vpop.f32.mrf.mxu0
    %v2455 = vadd.f32 %v2176, %v2454
    %v2456 = vpop.f32.mrf.mxu0
    %2457 = vmatprep.mubr.bf16.mxu0 %v2168
    %2458 = vmatmul.mubr.bf16.gmra.mxu0 %v2167
    %v2459 = vpop.f32.mrf.mxu0
    %v2460 = vadd.f32 %v2176, %v2459
    %v2461 = vpop.f32.mrf.mxu0
    %v2462 = vpop.f32.mrf.mxu0
    %v2463 = vadd.f32 %v2176, %v2462
    %v2464 = vpop.f32.mrf.mxu0
    %2465 = vmatprep.mubr.bf16.mxu0 %v2171
    %2466 = vmatmul.mubr.bf16.gmra.mxu0 %v2170
    %v2467 = vpop.f32.mrf.mxu0
    %v2468 = vadd.f32 %v2176, %v2467
    %v2469 = vpop.f32.mrf.mxu0
    %v2470 = vpop.f32.mrf.mxu0
    %v2471 = vadd.f32 %v2176, %v2470
    %v2472 = vpop.f32.mrf.mxu0
    %2473 = vmatprep.mubr.bf16.mxu0 %v2174
    %2474 = vmatmul.mubr.bf16.gmra.mxu0 %v2173
    %v2475 = vpop.f32.mrf.mxu0
    %v2476 = vadd.f32 %v2176, %v2475
    %v2477 = vpop.f32.mrf.mxu0
    %v2478 = vpop.f32.mrf.mxu0
    %v2479 = vadd.f32 %v2176, %v2478
    %v2480 = vpop.f32.mrf.mxu0
    %2481 = vdwg.mxu0
    %2482 = vmatprep.subr.bf16.mxu0 0
    %2483 = vmatpush1.bf16.msra.mxu0 %v2296
    %2484 = vmatprep.subr.bf16.mxu0 0
    %2485 = vmatpush1.bf16.msra.mxu0 %v2295
    %2486 = vmatprep.subr.bf16.mxu0 0
    %2487 = vmatpush1.bf16.msra.mxu0 %v2294
    %2488 = vmatprep.subr.bf16.mxu0 0
    %2489 = vmatpush1.bf16.msra.mxu0 %v2293
    %2490 = vmatprep.subr.bf16.mxu0 0
    %2491 = vmatpush1.bf16.msra.mxu0 %v2292
    %2492 = vmatprep.subr.bf16.mxu0 0
    %2493 = vmatpush1.bf16.msra.mxu0 %v2291
    %2494 = vmatprep.subr.bf16.mxu0 0
    %2495 = vmatpush1.bf16.msra.mxu0 %v2290
    %2496 = vmatprep.subr.bf16.mxu0 0
    %2497 = vmatpush1.bf16.msra.mxu0 %v2289
    %2498 = vmatprep.subr.bf16.mxu0 0
    %2499 = vmatpush2.bf16.msra.mxu0 0
    %2500 = vmatprep.subr.bf16.mxu0 0
    %2501 = vmatpush2.bf16.msra.mxu0 0
    %2502 = vmatprep.subr.bf16.mxu0 0
    %2503 = vmatpush2.bf16.msra.mxu0 0
    %2504 = vmatprep.subr.bf16.mxu0 0
    %2505 = vmatpush2.bf16.msra.mxu0 0
    %2506 = vmatprep.subr.bf16.mxu0 0
    %2507 = vmatpush2.bf16.msra.mxu0 0
    %2508 = vmatprep.subr.bf16.mxu0 0
    %2509 = vmatpush2.bf16.msra.mxu0 0
    %2510 = vmatprep.subr.bf16.mxu0 0
    %2511 = vmatpush2.bf16.msra.mxu0 0
    %2512 = vmatprep.subr.bf16.mxu0 0
    %2513 = vmatpush2.bf16.msra.mxu0 0
    %2514 = vmatprep.mubr.bf16.mxu0 0
    %2515 = vmatmul.mubr.bf16.gmra.mxu0 %v2130
    %v2516 = vpop.f32.mrf.mxu0
    %v2517 = vadd.f32 %v2356, %v2516
    %v2518 = vpop.f32.mrf.mxu0
    %v2519 = vpop.f32.mrf.mxu0
    %v2520 = vadd.f32 %v2359, %v2519
    %v2521 = vpop.f32.mrf.mxu0
    %2522 = vmatprep.mubr.bf16.mxu0 0
    %2523 = vmatmul.mubr.bf16.gmra.mxu0 %v2133
    %v2524 = vpop.f32.mrf.mxu0
    %v2525 = vadd.f32 %v2364, %v2524
    %v2526 = vpop.f32.mrf.mxu0
    %v2527 = vpop.f32.mrf.mxu0
    %v2528 = vadd.f32 %v2367, %v2527
    %v2529 = vpop.f32.mrf.mxu0
    %2530 = vmatprep.mubr.bf16.mxu0 0
    %2531 = vmatmul.mubr.bf16.gmra.mxu0 %v2136
    %v2532 = vpop.f32.mrf.mxu0
    %v2533 = vadd.f32 %v2372, %v2532
    %v2534 = vpop.f32.mrf.mxu0
    %v2535 = vpop.f32.mrf.mxu0
    %v2536 = vadd.f32 %v2375, %v2535
    %v2537 = vpop.f32.mrf.mxu0
    %2538 = vmatprep.mubr.bf16.mxu0 0
    %2539 = vmatmul.mubr.bf16.gmra.mxu0 %v2139
    %v2540 = vpop.f32.mrf.mxu0
    %v2541 = vadd.f32 %v2380, %v2540
    %v2542 = vpop.f32.mrf.mxu0
    %v2543 = vpop.f32.mrf.mxu0
    %v2544 = vadd.f32 %v2383, %v2543
    %v2545 = vpop.f32.mrf.mxu0
    %2546 = vmatprep.mubr.bf16.mxu0 0
    %2547 = vmatmul.mubr.bf16.gmra.mxu0 %v2142
    %v2548 = vpop.f32.mrf.mxu0
    %v2549 = vadd.f32 %v2388, %v2548
    %v2550 = vpop.f32.mrf.mxu0
    %v2551 = vpop.f32.mrf.mxu0
    %v2552 = vadd.f32 %v2391, %v2551
    %v2553 = vpop.f32.mrf.mxu0
    %2554 = vmatprep.mubr.bf16.mxu0 0
    %2555 = vmatmul.mubr.bf16.gmra.mxu0 %v2145
    %v2556 = vpop.f32.mrf.mxu0
    %v2557 = vadd.f32 %v2396, %v2556
    %v2558 = vpop.f32.mrf.mxu0
    %v2559 = vpop.f32.mrf.mxu0
    %v2560 = vadd.f32 %v2399, %v2559
    %v2561 = vpop.f32.mrf.mxu0
    %2562 = vmatprep.mubr.bf16.mxu0 0
    %2563 = vmatmul.mubr.bf16.gmra.mxu0 %v2148
    %v2564 = vpop.f32.mrf.mxu0
    %v2565 = vadd.f32 %v2404, %v2564
    %v2566 = vpop.f32.mrf.mxu0
    %v2567 = vpop.f32.mrf.mxu0
    %v2568 = vadd.f32 %v2407, %v2567
    %v2569 = vpop.f32.mrf.mxu0
    %2570 = vmatprep.mubr.bf16.mxu0 0
    %2571 = vmatmul.mubr.bf16.gmra.mxu0 %v2151
    %v2572 = vpop.f32.mrf.mxu0
    %v2573 = vadd.f32 %v2412, %v2572
    %v2574 = vpop.f32.mrf.mxu0
    %v2575 = vpop.f32.mrf.mxu0
    %v2576 = vadd.f32 %v2415, %v2575
    %v2577 = vpop.f32.mrf.mxu0
    %2578 = vmatprep.mubr.bf16.mxu0 0
    %2579 = vmatmul.mubr.bf16.gmra.mxu0 %v2154
    %v2580 = vpop.f32.mrf.mxu0
    %v2581 = vadd.f32 %v2420, %v2580
    %v2582 = vpop.f32.mrf.mxu0
    %v2583 = vpop.f32.mrf.mxu0
    %v2584 = vadd.f32 %v2423, %v2583
    %v2585 = vpop.f32.mrf.mxu0
    %2586 = vmatprep.mubr.bf16.mxu0 0
    %2587 = vmatmul.mubr.bf16.gmra.mxu0 %v2157
    %v2588 = vpop.f32.mrf.mxu0
    %v2589 = vadd.f32 %v2428, %v2588
    %v2590 = vpop.f32.mrf.mxu0
    %v2591 = vpop.f32.mrf.mxu0
    %v2592 = vadd.f32 %v2431, %v2591
    %v2593 = vpop.f32.mrf.mxu0
    %2594 = vmatprep.mubr.bf16.mxu0 0
    %2595 = vmatmul.mubr.bf16.gmra.mxu0 %v2160
    %v2596 = vpop.f32.mrf.mxu0
    %v2597 = vadd.f32 %v2436, %v2596
    %v2598 = vpop.f32.mrf.mxu0
    %v2599 = vpop.f32.mrf.mxu0
    %v2600 = vadd.f32 %v2439, %v2599
    %v2601 = vpop.f32.mrf.mxu0
    %2602 = vmatprep.mubr.bf16.mxu0 0
    %2603 = vmatmul.mubr.bf16.gmra.mxu0 %v2163
    %v2604 = vpop.f32.mrf.mxu0
    %v2605 = vadd.f32 %v2444, %v2604
    %v2606 = vpop.f32.mrf.mxu0
    %v2607 = vpop.f32.mrf.mxu0
    %v2608 = vadd.f32 %v2447, %v2607
    %v2609 = vpop.f32.mrf.mxu0
    %2610 = vmatprep.mubr.bf16.mxu0 0
    %2611 = vmatmul.mubr.bf16.gmra.mxu0 %v2166
    %v2612 = vpop.f32.mrf.mxu0
    %v2613 = vadd.f32 %v2452, %v2612
    %v2614 = vpop.f32.mrf.mxu0
    %v2615 = vpop.f32.mrf.mxu0
    %v2616 = vadd.f32 %v2455, %v2615
    %v2617 = vpop.f32.mrf.mxu0
    %2618 = vmatprep.mubr.bf16.mxu0 0
    %2619 = vmatmul.mubr.bf16.gmra.mxu0 %v2169
    %v2620 = vpop.f32.mrf.mxu0
    %v2621 = vadd.f32 %v2460, %v2620
    %v2622 = vpop.f32.mrf.mxu0
    %v2623 = vpop.f32.mrf.mxu0
    %v2624 = vadd.f32 %v2463, %v2623
    %v2625 = vpop.f32.mrf.mxu0
    %2626 = vmatprep.mubr.bf16.mxu0 0
    %2627 = vmatmul.mubr.bf16.gmra.mxu0 %v2172
    %v2628 = vpop.f32.mrf.mxu0
    %v2629 = vadd.f32 %v2468, %v2628
    %v2630 = vpop.f32.mrf.mxu0
    %v2631 = vpop.f32.mrf.mxu0
    %v2632 = vadd.f32 %v2471, %v2631
    %v2633 = vpop.f32.mrf.mxu0
    %2634 = vmatprep.mubr.bf16.mxu0 0
    %2635 = vmatmul.mubr.bf16.gmra.mxu0 %v2175
    %v2636 = vpop.f32.mrf.mxu0
    %v2637 = vadd.f32 %v2476, %v2636
    %v2638 = vpop.f32.mrf.mxu0
    %v2639 = vpop.f32.mrf.mxu0
    %v2640 = vadd.f32 %v2479, %v2639
    %v2641 = vpop.f32.mrf.mxu0
    %2642 = vdwg.mxu0
    %v2643 = vmax.f32 %v2517, 0.0
    %v2644 = vmax.f32 %v2520, 0.0
    %v2645 = vmax.f32 %v2525, 0.0
    %v2646 = vmax.f32 %v2528, 0.0
    %v2647 = vmax.f32 %v2533, 0.0
    %v2648 = vmax.f32 %v2536, 0.0
    %v2649 = vmax.f32 %v2541, 0.0
    %v2650 = vmax.f32 %v2544, 0.0
    %v2651 = vmax.f32 %v2549, 0.0
    %v2652 = vmax.f32 %v2552, 0.0
    %v2653 = vmax.f32 %v2557, 0.0
    %v2654 = vmax.f32 %v2560, 0.0
    %v2655 = vmax.f32 %v2565, 0.0
    %v2656 = vmax.f32 %v2568, 0.0
    %v2657 = vmax.f32 %v2573, 0.0
    %v2658 = vmax.f32 %v2576, 0.0
    %v2659 = vmax.f32 %v2581, 0.0
    %v2660 = vmax.f32 %v2584, 0.0
    %v2661 = vmax.f32 %v2589, 0.0
    %v2662 = vmax.f32 %v2592, 0.0
    %v2663 = vmax.f32 %v2597, 0.0
    %v2664 = vmax.f32 %v2600, 0.0
    %v2665 = vmax.f32 %v2605, 0.0
    %v2666 = vmax.f32 %v2608, 0.0
    %v2667 = vmax.f32 %v2613, 0.0
    %v2668 = vmax.f32 %v2616, 0.0
    %v2669 = vmax.f32 %v2621, 0.0
    %v2670 = vmax.f32 %v2624, 0.0
    %v2671 = vmax.f32 %v2629, 0.0
    %v2672 = vmax.f32 %v2632, 0.0
    %v2673 = vmax.f32 %v2637, 0.0
    %v2674 = vmax.f32 %v2640, 0.0
    %v2675 = vld [vmem:[#allocation5 + $0x540] sm:$0xf]
    %v2676 = vld [vmem:[#allocation5 + $0x54c] sm:$0xf]
    %v2677 = vld [vmem:[#allocation5 + $0x558] sm:$0xf]
    %v2678 = vld [vmem:[#allocation5 + $0x564] sm:$0xf]
    %v2679 = vld [vmem:[#allocation5 + $0x570] sm:$0xf]
    %v2680 = vld [vmem:[#allocation5 + $0x57c] sm:$0xf]
    %v2681 = vld [vmem:[#allocation5 + $0x588] sm:$0xf]
    %v2682 = vld [vmem:[#allocation5 + $0x594] sm:$0xf]
    %v2683 = vld [vmem:[#allocation5 + $0x5a0] sm:$0xf]
    %v2684 = vld [vmem:[#allocation5 + $0x5ac] sm:$0xf]
    %v2685 = vld [vmem:[#allocation5 + $0x5b8] sm:$0xf]
    %v2686 = vld [vmem:[#allocation5 + $0x5c4] sm:$0xf]
    %v2687 = vld [vmem:[#allocation5 + $0x5d0] sm:$0xf]
    %v2688 = vld [vmem:[#allocation5 + $0x5dc] sm:$0xf]
    %v2689 = vld [vmem:[#allocation5 + $0x5e8] sm:$0xf]
    %v2690 = vld [vmem:[#allocation5 + $0x5f4] sm:$0xf]
    %v2691 = vpack.c.bf16 %v2644, %v2643
    %v2692 = vpack.c.bf16 %v2646, %v2645
    %v2693 = vpack.c.bf16 %v2648, %v2647
    %v2694 = vpack.c.bf16 %v2650, %v2649
    %v2695 = vpack.c.bf16 %v2652, %v2651
    %v2696 = vpack.c.bf16 %v2654, %v2653
    %v2697 = vpack.c.bf16 %v2656, %v2655
    %v2698 = vpack.c.bf16 %v2658, %v2657
    %v2699 = vpack.c.bf16 %v2660, %v2659
    %v2700 = vpack.c.bf16 %v2662, %v2661
    %v2701 = vpack.c.bf16 %v2664, %v2663
    %v2702 = vpack.c.bf16 %v2666, %v2665
    %v2703 = vpack.c.bf16 %v2668, %v2667
    %v2704 = vpack.c.bf16 %v2670, %v2669
    %v2705 = vpack.c.bf16 %v2672, %v2671
    %v2706 = vpack.c.bf16 %v2674, %v2673
    %v2707 = vld [vmem:[#allocation7 + $0x3] ss:$0 sm:$0xff]
    %v2724 = vunpack.c.l.b16 %v2675
    %v2725 = vunpack.c.l.b16 %v2676
    %v2726 = vunpack.c.l.b16 %v2677
    %v2727 = vunpack.c.l.b16 %v2678
    %v2728 = vunpack.c.l.b16 %v2679
    %v2729 = vunpack.c.l.b16 %v2680
    %v2730 = vunpack.c.l.b16 %v2681
    %v2731 = vunpack.c.l.b16 %v2682
    %v2732 = vunpack.c.l.b16 %v2683
    %v2733 = vunpack.c.l.b16 %v2684
    %v2734 = vunpack.c.l.b16 %v2685
    %v2735 = vunpack.c.l.b16 %v2686
    %v2736 = vunpack.c.l.b16 %v2687
    %v2737 = vunpack.c.l.b16 %v2688
    %v2738 = vunpack.c.l.b16 %v2689
    %v2739 = vunpack.c.l.b16 %v2690
    %v2740 = vpack.c.b16 %v2725, %v2724
    %v2741 = vpack.c.b16 %v2727, %v2726
    %v2742 = vpack.c.b16 %v2729, %v2728
    %v2743 = vpack.c.b16 %v2731, %v2730
    %v2744 = vpack.c.b16 %v2733, %v2732
    %v2745 = vpack.c.b16 %v2735, %v2734
    %v2746 = vpack.c.b16 %v2737, %v2736
    %v2747 = vpack.c.b16 %v2739, %v2738
    %2756 = vmatprep.subr.bf16.mxu0 0
    %2757 = vmatpush1.bf16.msra.mxu0 %v2747
    %2758 = vmatprep.subr.bf16.mxu0 0
    %2759 = vmatpush1.bf16.msra.mxu0 %v2746
    %2760 = vmatprep.subr.bf16.mxu0 0
    %2761 = vmatpush1.bf16.msra.mxu0 %v2745
    %2762 = vmatprep.subr.bf16.mxu0 0
    %2763 = vmatpush1.bf16.msra.mxu0 %v2744
    %2764 = vmatprep.subr.bf16.mxu0 0
    %2765 = vmatpush1.bf16.msra.mxu0 %v2743
    %2766 = vmatprep.subr.bf16.mxu0 0
    %2767 = vmatpush1.bf16.msra.mxu0 %v2742
    %2768 = vmatprep.subr.bf16.mxu0 0
    %2769 = vmatpush1.bf16.msra.mxu0 %v2741
    %2770 = vmatprep.subr.bf16.mxu0 0
    %2771 = vmatpush1.bf16.msra.mxu0 %v2740
    %2772 = vmatprep.subr.bf16.mxu0 0
    %2773 = vmatpush2.bf16.msra.mxu0 0
    %2774 = vmatprep.subr.bf16.mxu0 0
    %2775 = vmatpush2.bf16.msra.mxu0 0
    %2776 = vmatprep.subr.bf16.mxu0 0
    %2777 = vmatpush2.bf16.msra.mxu0 0
    %2778 = vmatprep.subr.bf16.mxu0 0
    %2779 = vmatpush2.bf16.msra.mxu0 0
    %2780 = vmatprep.subr.bf16.mxu0 0
    %2781 = vmatpush2.bf16.msra.mxu0 0
    %2782 = vmatprep.subr.bf16.mxu0 0
    %2783 = vmatpush2.bf16.msra.mxu0 0
    %2784 = vmatprep.subr.bf16.mxu0 0
    %2785 = vmatpush2.bf16.msra.mxu0 0
    %2786 = vmatprep.subr.bf16.mxu0 0
    %2787 = vmatpush2.bf16.msra.mxu0 0
    %2788 = vmatprep.mubr.bf16.mxu0 0
    %2789 = vmatmul.mubr.bf16.gmra.mxu0 %v2691
    %v2790 = vpop.f32.mrf.mxu0
    %v2791 = vadd.f32 %v2707, %v2790
    %v2792 = vpop.f32.mrf.mxu0
    %v2793 = vpop.f32.mrf.mxu0
    %v2794 = vadd.f32 %v2707, %v2793
    %v2795 = vpop.f32.mrf.mxu0
    %2796 = vmatprep.mubr.bf16.mxu0 0
    %2797 = vmatmul.mubr.bf16.gmra.mxu0 %v2692
    %v2798 = vpop.f32.mrf.mxu0
    %v2799 = vadd.f32 %v2707, %v2798
    %v2800 = vpop.f32.mrf.mxu0
    %v2801 = vpop.f32.mrf.mxu0
    %v2802 = vadd.f32 %v2707, %v2801
    %v2803 = vpop.f32.mrf.mxu0
    %2804 = vmatprep.mubr.bf16.mxu0 0
    %2805 = vmatmul.mubr.bf16.gmra.mxu0 %v2693
    %v2806 = vpop.f32.mrf.mxu0
    %v2807 = vadd.f32 %v2707, %v2806
    %v2808 = vpop.f32.mrf.mxu0
    %v2809 = vpop.f32.mrf.mxu0
    %v2810 = vadd.f32 %v2707, %v2809
    %v2811 = vpop.f32.mrf.mxu0
    %2812 = vmatprep.mubr.bf16.mxu0 0
    %2813 = vmatmul.mubr.bf16.gmra.mxu0 %v2694
    %v2814 = vpop.f32.mrf.mxu0
    %v2815 = vadd.f32 %v2707, %v2814
    %v2816 = vpop.f32.mrf.mxu0
    %v2817 = vpop.f32.mrf.mxu0
    %v2818 = vadd.f32 %v2707, %v2817
    %v2819 = vpop.f32.mrf.mxu0
    %2820 = vmatprep.mubr.bf16.mxu0 0
    %2821 = vmatmul.mubr.bf16.gmra.mxu0 %v2695
    %v2822 = vpop.f32.mrf.mxu0
    %v2823 = vadd.f32 %v2707, %v2822
    %v2824 = vpop.f32.mrf.mxu0
    %v2825 = vpop.f32.mrf.mxu0
    %v2826 = vadd.f32 %v2707, %v2825
    %v2827 = vpop.f32.mrf.mxu0
    %2828 = vmatprep.mubr.bf16.mxu0 0
    %2829 = vmatmul.mubr.bf16.gmra.mxu0 %v2696
    %v2830 = vpop.f32.mrf.mxu0
    %v2831 = vadd.f32 %v2707, %v2830
    %v2832 = vpop.f32.mrf.mxu0
    %v2833 = vpop.f32.mrf.mxu0
    %v2834 = vadd.f32 %v2707, %v2833
    %v2835 = vpop.f32.mrf.mxu0
    %2836 = vmatprep.mubr.bf16.mxu0 0
    %2837 = vmatmul.mubr.bf16.gmra.mxu0 %v2697
    %v2838 = vpop.f32.mrf.mxu0
    %v2839 = vadd.f32 %v2707, %v2838
    %v2840 = vpop.f32.mrf.mxu0
    %v2841 = vpop.f32.mrf.mxu0
    %v2842 = vadd.f32 %v2707, %v2841
    %v2843 = vpop.f32.mrf.mxu0
    %2844 = vmatprep.mubr.bf16.mxu0 0
    %2845 = vmatmul.mubr.bf16.gmra.mxu0 %v2698
    %v2846 = vpop.f32.mrf.mxu0
    %v2847 = vadd.f32 %v2707, %v2846
    %v2848 = vpop.f32.mrf.mxu0
    %v2849 = vpop.f32.mrf.mxu0
    %v2850 = vadd.f32 %v2707, %v2849
    %v2851 = vpop.f32.mrf.mxu0
    %2852 = vmatprep.mubr.bf16.mxu0 0
    %2853 = vmatmul.mubr.bf16.gmra.mxu0 %v2699
    %v2854 = vpop.f32.mrf.mxu0
    %v2855 = vadd.f32 %v2707, %v2854
    %v2856 = vpop.f32.mrf.mxu0
    %v2857 = vpop.f32.mrf.mxu0
    %v2858 = vadd.f32 %v2707, %v2857
    %v2859 = vpop.f32.mrf.mxu0
    %2860 = vmatprep.mubr.bf16.mxu0 0
    %2861 = vmatmul.mubr.bf16.gmra.mxu0 %v2700
    %v2862 = vpop.f32.mrf.mxu0
    %v2863 = vadd.f32 %v2707, %v2862
    %v2864 = vpop.f32.mrf.mxu0
    %v2865 = vpop.f32.mrf.mxu0
    %v2866 = vadd.f32 %v2707, %v2865
    %v2867 = vpop.f32.mrf.mxu0
    %2868 = vmatprep.mubr.bf16.mxu0 0
    %2869 = vmatmul.mubr.bf16.gmra.mxu0 %v2701
    %v2870 = vpop.f32.mrf.mxu0
    %v2871 = vadd.f32 %v2707, %v2870
    %v2872 = vpop.f32.mrf.mxu0
    %v2873 = vpop.f32.mrf.mxu0
    %v2874 = vadd.f32 %v2707, %v2873
    %v2875 = vpop.f32.mrf.mxu0
    %2876 = vmatprep.mubr.bf16.mxu0 0
    %2877 = vmatmul.mubr.bf16.gmra.mxu0 %v2702
    %v2878 = vpop.f32.mrf.mxu0
    %v2879 = vadd.f32 %v2707, %v2878
    %v2880 = vpop.f32.mrf.mxu0
    %v2881 = vpop.f32.mrf.mxu0
    %v2882 = vadd.f32 %v2707, %v2881
    %v2883 = vpop.f32.mrf.mxu0
    %2884 = vmatprep.mubr.bf16.mxu0 0
    %2885 = vmatmul.mubr.bf16.gmra.mxu0 %v2703
    %v2886 = vpop.f32.mrf.mxu0
    %v2887 = vadd.f32 %v2707, %v2886
    %v2888 = vpop.f32.mrf.mxu0
    %v2889 = vpop.f32.mrf.mxu0
    %v2890 = vadd.f32 %v2707, %v2889
    %v2891 = vpop.f32.mrf.mxu0
    %2892 = vmatprep.mubr.bf16.mxu0 0
    %2893 = vmatmul.mubr.bf16.gmra.mxu0 %v2704
    %v2894 = vpop.f32.mrf.mxu0
    %v2895 = vadd.f32 %v2707, %v2894
    %v2896 = vpop.f32.mrf.mxu0
    %v2897 = vpop.f32.mrf.mxu0
    %v2898 = vadd.f32 %v2707, %v2897
    %v2899 = vpop.f32.mrf.mxu0
    %2900 = vmatprep.mubr.bf16.mxu0 0
    %2901 = vmatmul.mubr.bf16.gmra.mxu0 %v2705
    %v2902 = vpop.f32.mrf.mxu0
    %v2903 = vadd.f32 %v2707, %v2902
    %v2904 = vpop.f32.mrf.mxu0
    %v2905 = vpop.f32.mrf.mxu0
    %v2906 = vadd.f32 %v2707, %v2905
    %v2907 = vpop.f32.mrf.mxu0
    %2908 = vmatprep.mubr.bf16.mxu0 0
    %2909 = vmatmul.mubr.bf16.gmra.mxu0 %v2706
    %v2910 = vpop.f32.mrf.mxu0
    %v2911 = vadd.f32 %v2707, %v2910
    %v2912 = vpop.f32.mrf.mxu0
    %v2913 = vpop.f32.mrf.mxu0
    %v2914 = vadd.f32 %v2707, %v2913
    %v2915 = vpop.f32.mrf.mxu0
    %2916 = vdwg.mxu0
    %v2917 = vmax.f32 %v2791, 0.0
    %v2918 = vmax.f32 %v2794, 0.0
    %v2919 = vmax.f32 %v2799, 0.0
    %v2920 = vmax.f32 %v2802, 0.0
    %v2921 = vmax.f32 %v2807, 0.0
    %v2922 = vmax.f32 %v2810, 0.0
    %v2923 = vmax.f32 %v2815, 0.0
    %v2924 = vmax.f32 %v2818, 0.0
    %v2925 = vmax.f32 %v2823, 0.0
    %v2926 = vmax.f32 %v2826, 0.0
    %v2927 = vmax.f32 %v2831, 0.0
    %v2928 = vmax.f32 %v2834, 0.0
    %v2929 = vmax.f32 %v2839, 0.0
    %v2930 = vmax.f32 %v2842, 0.0
    %v2931 = vmax.f32 %v2847, 0.0
    %v2932 = vmax.f32 %v2850, 0.0
    %v2933 = vmax.f32 %v2855, 0.0
    %v2934 = vmax.f32 %v2858, 0.0
    %v2935 = vmax.f32 %v2863, 0.0
    %v2936 = vmax.f32 %v2866, 0.0
    %v2937 = vmax.f32 %v2871, 0.0
    %v2938 = vmax.f32 %v2874, 0.0
    %v2939 = vmax.f32 %v2879, 0.0
    %v2940 = vmax.f32 %v2882, 0.0
    %v2941 = vmax.f32 %v2887, 0.0
    %v2942 = vmax.f32 %v2890, 0.0
    %v2943 = vmax.f32 %v2895, 0.0
    %v2944 = vmax.f32 %v2898, 0.0
    %v2945 = vmax.f32 %v2903, 0.0
    %v2946 = vmax.f32 %v2906, 0.0
    %v2947 = vmax.f32 %v2911, 0.0
    %v2948 = vmax.f32 %v2914, 0.0
    %v2949 = vld [vmem:[#allocation5 + $0x600] sm:$0xf]
    %v2950 = vld [vmem:[#allocation5 + $0x60c] sm:$0xf]
    %v2951 = vld [vmem:[#allocation5 + $0x618] sm:$0xf]
    %v2952 = vld [vmem:[#allocation5 + $0x624] sm:$0xf]
    %v2953 = vld [vmem:[#allocation5 + $0x630] sm:$0xf]
    %v2954 = vld [vmem:[#allocation5 + $0x63c] sm:$0xf]
    %v2955 = vld [vmem:[#allocation5 + $0x648] sm:$0xf]
    %v2956 = vld [vmem:[#allocation5 + $0x654] sm:$0xf]
    %v2957 = vld [vmem:[#allocation5 + $0x660] sm:$0xf]
    %v2958 = vld [vmem:[#allocation5 + $0x66c] sm:$0xf]
    %v2959 = vld [vmem:[#allocation5 + $0x678] sm:$0xf]
    %v2960 = vld [vmem:[#allocation5 + $0x684] sm:$0xf]
    %v2961 = vld [vmem:[#allocation5 + $0x690] sm:$0xf]
    %v2962 = vld [vmem:[#allocation5 + $0x69c] sm:$0xf]
    %v2963 = vld [vmem:[#allocation5 + $0x6a8] sm:$0xf]
    %v2964 = vld [vmem:[#allocation5 + $0x6b4] sm:$0xf]
    %v2965 = vpack.c.bf16 %v2918, %v2917
    %v2966 = vpack.c.bf16 %v2920, %v2919
    %v2967 = vpack.c.bf16 %v2922, %v2921
    %v2968 = vpack.c.bf16 %v2924, %v2923
    %v2969 = vpack.c.bf16 %v2926, %v2925
    %v2970 = vpack.c.bf16 %v2928, %v2927
    %v2971 = vpack.c.bf16 %v2930, %v2929
    %v2972 = vpack.c.bf16 %v2932, %v2931
    %v2973 = vpack.c.bf16 %v2934, %v2933
    %v2974 = vpack.c.bf16 %v2936, %v2935
    %v2975 = vpack.c.bf16 %v2938, %v2937
    %v2976 = vpack.c.bf16 %v2940, %v2939
    %v2977 = vpack.c.bf16 %v2942, %v2941
    %v2978 = vpack.c.bf16 %v2944, %v2943
    %v2979 = vpack.c.bf16 %v2946, %v2945
    %v2980 = vpack.c.bf16 %v2948, %v2947
    %v2981 = vld [vmem:[#allocation7 + $0x4] ss:$0 sm:$0xff]
    %v2998 = vunpack.c.l.b16 %v2949
    %v2999 = vunpack.c.l.b16 %v2950
    %v3000 = vunpack.c.l.b16 %v2951
    %v3001 = vunpack.c.l.b16 %v2952
    %v3002 = vunpack.c.l.b16 %v2953
    %v3003 = vunpack.c.l.b16 %v2954
    %v3004 = vunpack.c.l.b16 %v2955
    %v3005 = vunpack.c.l.b16 %v2956
    %v3006 = vunpack.c.l.b16 %v2957
    %v3007 = vunpack.c.l.b16 %v2958
    %v3008 = vunpack.c.l.b16 %v2959
    %v3009 = vunpack.c.l.b16 %v2960
    %v3010 = vunpack.c.l.b16 %v2961
    %v3011 = vunpack.c.l.b16 %v2962
    %v3012 = vunpack.c.l.b16 %v2963
    %v3013 = vunpack.c.l.b16 %v2964
    %v3014 = vpack.c.b16 %v2999, %v2998
    %v3015 = vpack.c.b16 %v3001, %v3000
    %v3016 = vpack.c.b16 %v3003, %v3002
    %v3017 = vpack.c.b16 %v3005, %v3004
    %v3018 = vpack.c.b16 %v3007, %v3006
    %v3019 = vpack.c.b16 %v3009, %v3008
    %v3020 = vpack.c.b16 %v3011, %v3010
    %v3021 = vpack.c.b16 %v3013, %v3012
    %3030 = vmatprep.subr.bf16.mxu0 0
    %3031 = vmatpush1.bf16.msra.mxu0 %v3021
    %3032 = vmatprep.subr.bf16.mxu0 0
    %3033 = vmatpush1.bf16.msra.mxu0 %v3020
    %3034 = vmatprep.subr.bf16.mxu0 0
    %3035 = vmatpush1.bf16.msra.mxu0 %v3019
    %3036 = vmatprep.subr.bf16.mxu0 0
    %3037 = vmatpush1.bf16.msra.mxu0 %v3018
    %3038 = vmatprep.subr.bf16.mxu0 0
    %3039 = vmatpush1.bf16.msra.mxu0 %v3017
    %3040 = vmatprep.subr.bf16.mxu0 0
    %3041 = vmatpush1.bf16.msra.mxu0 %v3016
    %3042 = vmatprep.subr.bf16.mxu0 0
    %3043 = vmatpush1.bf16.msra.mxu0 %v3015
    %3044 = vmatprep.subr.bf16.mxu0 0
    %3045 = vmatpush1.bf16.msra.mxu0 %v3014
    %3046 = vmatprep.subr.bf16.mxu0 0
    %3047 = vmatpush2.bf16.msra.mxu0 0
    %3048 = vmatprep.subr.bf16.mxu0 0
    %3049 = vmatpush2.bf16.msra.mxu0 0
    %3050 = vmatprep.subr.bf16.mxu0 0
    %3051 = vmatpush2.bf16.msra.mxu0 0
    %3052 = vmatprep.subr.bf16.mxu0 0
    %3053 = vmatpush2.bf16.msra.mxu0 0
    %3054 = vmatprep.subr.bf16.mxu0 0
    %3055 = vmatpush2.bf16.msra.mxu0 0
    %3056 = vmatprep.subr.bf16.mxu0 0
    %3057 = vmatpush2.bf16.msra.mxu0 0
    %3058 = vmatprep.subr.bf16.mxu0 0
    %3059 = vmatpush2.bf16.msra.mxu0 0
    %3060 = vmatprep.subr.bf16.mxu0 0
    %3061 = vmatpush2.bf16.msra.mxu0 0
    %3062 = vmatprep.mubr.bf16.mxu0 0
    %3063 = vmatmul.mubr.bf16.gmra.mxu0 %v2965
    %v3064 = vpop.f32.mrf.mxu0
    %v3065 = vadd.f32 %v2981, %v3064
    %v3066 = vpop.f32.mrf.mxu0
    %v3067 = vpop.f32.mrf.mxu0
    %v3068 = vadd.f32 %v2981, %v3067
    %v3069 = vpop.f32.mrf.mxu0
    %3070 = vmatprep.mubr.bf16.mxu0 0
    %3071 = vmatmul.mubr.bf16.gmra.mxu0 %v2966
    %v3072 = vpop.f32.mrf.mxu0
    %v3073 = vadd.f32 %v2981, %v3072
    %v3074 = vpop.f32.mrf.mxu0
    %v3075 = vpop.f32.mrf.mxu0
    %v3076 = vadd.f32 %v2981, %v3075
    %v3077 = vpop.f32.mrf.mxu0
    %3078 = vmatprep.mubr.bf16.mxu0 0
    %3079 = vmatmul.mubr.bf16.gmra.mxu0 %v2967
    %v3080 = vpop.f32.mrf.mxu0
    %v3081 = vadd.f32 %v2981, %v3080
    %v3082 = vpop.f32.mrf.mxu0
    %v3083 = vpop.f32.mrf.mxu0
    %v3084 = vadd.f32 %v2981, %v3083
    %v3085 = vpop.f32.mrf.mxu0
    %3086 = vmatprep.mubr.bf16.mxu0 0
    %3087 = vmatmul.mubr.bf16.gmra.mxu0 %v2968
    %v3088 = vpop.f32.mrf.mxu0
    %v3089 = vadd.f32 %v2981, %v3088
    %v3090 = vpop.f32.mrf.mxu0
    %v3091 = vpop.f32.mrf.mxu0
    %v3092 = vadd.f32 %v2981, %v3091
    %v3093 = vpop.f32.mrf.mxu0
    %3094 = vmatprep.mubr.bf16.mxu0 0
    %3095 = vmatmul.mubr.bf16.gmra.mxu0 %v2969
    %v3096 = vpop.f32.mrf.mxu0
    %v3097 = vadd.f32 %v2981, %v3096
    %v3098 = vpop.f32.mrf.mxu0
    %v3099 = vpop.f32.mrf.mxu0
    %v3100 = vadd.f32 %v2981, %v3099
    %v3101 = vpop.f32.mrf.mxu0
    %3102 = vmatprep.mubr.bf16.mxu0 0
    %3103 = vmatmul.mubr.bf16.gmra.mxu0 %v2970
    %v3104 = vpop.f32.mrf.mxu0
    %v3105 = vadd.f32 %v2981, %v3104
    %v3106 = vpop.f32.mrf.mxu0
    %v3107 = vpop.f32.mrf.mxu0
    %v3108 = vadd.f32 %v2981, %v3107
    %v3109 = vpop.f32.mrf.mxu0
    %3110 = vmatprep.mubr.bf16.mxu0 0
    %3111 = vmatmul.mubr.bf16.gmra.mxu0 %v2971
    %v3112 = vpop.f32.mrf.mxu0
    %v3113 = vadd.f32 %v2981, %v3112
    %v3114 = vpop.f32.mrf.mxu0
    %v3115 = vpop.f32.mrf.mxu0
    %v3116 = vadd.f32 %v2981, %v3115
    %v3117 = vpop.f32.mrf.mxu0
    %3118 = vmatprep.mubr.bf16.mxu0 0
    %3119 = vmatmul.mubr.bf16.gmra.mxu0 %v2972
    %v3120 = vpop.f32.mrf.mxu0
    %v3121 = vadd.f32 %v2981, %v3120
    %v3122 = vpop.f32.mrf.mxu0
    %v3123 = vpop.f32.mrf.mxu0
    %v3124 = vadd.f32 %v2981, %v3123
    %v3125 = vpop.f32.mrf.mxu0
    %3126 = vmatprep.mubr.bf16.mxu0 0
    %3127 = vmatmul.mubr.bf16.gmra.mxu0 %v2973
    %v3128 = vpop.f32.mrf.mxu0
    %v3129 = vadd.f32 %v2981, %v3128
    %v3130 = vpop.f32.mrf.mxu0
    %v3131 = vpop.f32.mrf.mxu0
    %v3132 = vadd.f32 %v2981, %v3131
    %v3133 = vpop.f32.mrf.mxu0
    %3134 = vmatprep.mubr.bf16.mxu0 0
    %3135 = vmatmul.mubr.bf16.gmra.mxu0 %v2974
    %v3136 = vpop.f32.mrf.mxu0
    %v3137 = vadd.f32 %v2981, %v3136
    %v3138 = vpop.f32.mrf.mxu0
    %v3139 = vpop.f32.mrf.mxu0
    %v3140 = vadd.f32 %v2981, %v3139
    %v3141 = vpop.f32.mrf.mxu0
    %3142 = vmatprep.mubr.bf16.mxu0 0
    %3143 = vmatmul.mubr.bf16.gmra.mxu0 %v2975
    %v3144 = vpop.f32.mrf.mxu0
    %v3145 = vadd.f32 %v2981, %v3144
    %v3146 = vpop.f32.mrf.mxu0
    %v3147 = vpop.f32.mrf.mxu0
    %v3148 = vadd.f32 %v2981, %v3147
    %v3149 = vpop.f32.mrf.mxu0
    %3150 = vmatprep.mubr.bf16.mxu0 0
    %3151 = vmatmul.mubr.bf16.gmra.mxu0 %v2976
    %v3152 = vpop.f32.mrf.mxu0
    %v3153 = vadd.f32 %v2981, %v3152
    %v3154 = vpop.f32.mrf.mxu0
    %v3155 = vpop.f32.mrf.mxu0
    %v3156 = vadd.f32 %v2981, %v3155
    %v3157 = vpop.f32.mrf.mxu0
    %3158 = vmatprep.mubr.bf16.mxu0 0
    %3159 = vmatmul.mubr.bf16.gmra.mxu0 %v2977
    %v3160 = vpop.f32.mrf.mxu0
    %v3161 = vadd.f32 %v2981, %v3160
    %v3162 = vpop.f32.mrf.mxu0
    %v3163 = vpop.f32.mrf.mxu0
    %v3164 = vadd.f32 %v2981, %v3163
    %v3165 = vpop.f32.mrf.mxu0
    %3166 = vmatprep.mubr.bf16.mxu0 0
    %3167 = vmatmul.mubr.bf16.gmra.mxu0 %v2978
    %v3168 = vpop.f32.mrf.mxu0
    %v3169 = vadd.f32 %v2981, %v3168
    %v3170 = vpop.f32.mrf.mxu0
    %v3171 = vpop.f32.mrf.mxu0
    %v3172 = vadd.f32 %v2981, %v3171
    %v3173 = vpop.f32.mrf.mxu0
    %3174 = vmatprep.mubr.bf16.mxu0 0
    %3175 = vmatmul.mubr.bf16.gmra.mxu0 %v2979
    %v3176 = vpop.f32.mrf.mxu0
    %v3177 = vadd.f32 %v2981, %v3176
    %v3178 = vpop.f32.mrf.mxu0
    %v3179 = vpop.f32.mrf.mxu0
    %v3180 = vadd.f32 %v2981, %v3179
    %v3181 = vpop.f32.mrf.mxu0
    %3182 = vmatprep.mubr.bf16.mxu0 0
    %3183 = vmatmul.mubr.bf16.gmra.mxu0 %v2980
    %v3184 = vpop.f32.mrf.mxu0
    %v3185 = vadd.f32 %v2981, %v3184
    %v3186 = vpop.f32.mrf.mxu0
    %v3187 = vpop.f32.mrf.mxu0
    %v3188 = vadd.f32 %v2981, %v3187
    %v3189 = vpop.f32.mrf.mxu0
    %3190 = vdwg.mxu0
    %v3191 = vxor.u32 %v3065, 2147483648
    %v3192 = vxor.u32 %v3068, 2147483648
    %v3193 = vxor.u32 %v3073, 2147483648
    %v3194 = vxor.u32 %v3076, 2147483648
    %v3195 = vxor.u32 %v3081, 2147483648
    %v3196 = vxor.u32 %v3084, 2147483648
    %v3197 = vxor.u32 %v3089, 2147483648
    %v3198 = vxor.u32 %v3092, 2147483648
    %v3199 = vxor.u32 %v3097, 2147483648
    %v3200 = vxor.u32 %v3100, 2147483648
    %v3201 = vxor.u32 %v3105, 2147483648
    %v3202 = vxor.u32 %v3108, 2147483648
    %v3203 = vxor.u32 %v3113, 2147483648
    %v3204 = vxor.u32 %v3116, 2147483648
    %v3205 = vxor.u32 %v3121, 2147483648
    %v3206 = vxor.u32 %v3124, 2147483648
    %v3207 = vxor.u32 %v3129, 2147483648
    %v3208 = vxor.u32 %v3132, 2147483648
    %v3209 = vxor.u32 %v3137, 2147483648
    %v3210 = vxor.u32 %v3140, 2147483648
    %v3211 = vxor.u32 %v3145, 2147483648
    %v3212 = vxor.u32 %v3148, 2147483648
    %v3213 = vxor.u32 %v3153, 2147483648
    %v3214 = vxor.u32 %v3156, 2147483648
    %v3215 = vxor.u32 %v3161, 2147483648
    %v3216 = vxor.u32 %v3164, 2147483648
    %v3217 = vxor.u32 %v3169, 2147483648
    %v3218 = vxor.u32 %v3172, 2147483648
    %v3219 = vxor.u32 %v3177, 2147483648
    %v3220 = vxor.u32 %v3180, 2147483648
    %v3221 = vxor.u32 %v3185, 2147483648
    %v3222 = vxor.u32 %v3188, 2147483648
    %v3223 = vmul.f32 %v3191, 1.442695
    %v3224 = vpow.pop %v3223
    %v3225 = vmul.f32 %v3192, 1.442695
    %v3226 = vpow.pop %v3225
    %v3227 = vmul.f32 %v3193, 1.442695
    %v3228 = vpow.pop %v3227
    %v3229 = vmul.f32 %v3194, 1.442695
    %v3230 = vpow.pop %v3229
    %v3231 = vmul.f32 %v3195, 1.442695
    %v3232 = vpow.pop %v3231
    %v3233 = vmul.f32 %v3196, 1.442695
    %v3234 = vpow.pop %v3233
    %v3235 = vmul.f32 %v3197, 1.442695
    %v3236 = vpow.pop %v3235
    %v3237 = vmul.f32 %v3198, 1.442695
    %v3238 = vpow.pop %v3237
    %v3239 = vmul.f32 %v3199, 1.442695
    %v3240 = vpow.pop %v3239
    %v3241 = vmul.f32 %v3200, 1.442695
    %v3242 = vpow.pop %v3241
    %v3243 = vmul.f32 %v3201, 1.442695
    %v3244 = vpow.pop %v3243
    %v3245 = vmul.f32 %v3202, 1.442695
    %v3246 = vpow.pop %v3245
    %v3247 = vmul.f32 %v3203, 1.442695
    %v3248 = vpow.pop %v3247
    %v3249 = vmul.f32 %v3204, 1.442695
    %v3250 = vpow.pop %v3249
    %v3251 = vmul.f32 %v3205, 1.442695
    %v3252 = vpow.pop %v3251
    %v3253 = vmul.f32 %v3206, 1.442695
    %v3254 = vpow.pop %v3253
    %v3255 = vmul.f32 %v3207, 1.442695
    %v3256 = vpow.pop %v3255
    %v3257 = vmul.f32 %v3208, 1.442695
    %v3258 = vpow.pop %v3257
    %v3259 = vmul.f32 %v3209, 1.442695
    %v3260 = vpow.pop %v3259
    %v3261 = vmul.f32 %v3210, 1.442695
    %v3262 = vpow.pop %v3261
    %v3263 = vmul.f32 %v3211, 1.442695
    %v3264 = vpow.pop %v3263
    %v3265 = vmul.f32 %v3212, 1.442695
    %v3266 = vpow.pop %v3265
    %v3267 = vmul.f32 %v3213, 1.442695
    %v3268 = vpow.pop %v3267
    %v3269 = vmul.f32 %v3214, 1.442695
    %v3270 = vpow.pop %v3269
    %v3271 = vmul.f32 %v3215, 1.442695
    %v3272 = vpow.pop %v3271
    %v3273 = vmul.f32 %v3216, 1.442695
    %v3274 = vpow.pop %v3273
    %v3275 = vmul.f32 %v3217, 1.442695
    %v3276 = vpow.pop %v3275
    %v3277 = vmul.f32 %v3218, 1.442695
    %v3278 = vpow.pop %v3277
    %v3279 = vmul.f32 %v3219, 1.442695
    %v3280 = vpow.pop %v3279
    %v3281 = vmul.f32 %v3220, 1.442695
    %v3282 = vpow.pop %v3281
    %v3283 = vmul.f32 %v3221, 1.442695
    %v3284 = vpow.pop %v3283
    %v3285 = vmul.f32 %v3222, 1.442695
    %v3286 = vpow.pop %v3285
    %v3287 = vadd.f32 %v3224, 1.0
    %v3288 = vadd.f32 %v3226, 1.0
    %v3289 = vadd.f32 %v3228, 1.0
    %v3290 = vadd.f32 %v3230, 1.0
    %v3291 = vadd.f32 %v3232, 1.0
    %v3292 = vadd.f32 %v3234, 1.0
    %v3293 = vadd.f32 %v3236, 1.0
    %v3294 = vadd.f32 %v3238, 1.0
    %v3295 = vadd.f32 %v3240, 1.0
    %v3296 = vadd.f32 %v3242, 1.0
    %v3297 = vadd.f32 %v3244, 1.0
    %v3298 = vadd.f32 %v3246, 1.0
    %v3299 = vadd.f32 %v3248, 1.0
    %v3300 = vadd.f32 %v3250, 1.0
    %v3301 = vadd.f32 %v3252, 1.0
    %v3302 = vadd.f32 %v3254, 1.0
    %v3303 = vadd.f32 %v3256, 1.0
    %v3304 = vadd.f32 %v3258, 1.0
    %v3305 = vadd.f32 %v3260, 1.0
    %v3306 = vadd.f32 %v3262, 1.0
    %v3307 = vadd.f32 %v3264, 1.0
    %v3308 = vadd.f32 %v3266, 1.0
    %v3309 = vadd.f32 %v3268, 1.0
    %v3310 = vadd.f32 %v3270, 1.0
    %v3311 = vadd.f32 %v3272, 1.0
    %v3312 = vadd.f32 %v3274, 1.0
    %v3313 = vadd.f32 %v3276, 1.0
    %v3314 = vadd.f32 %v3278, 1.0
    %v3315 = vadd.f32 %v3280, 1.0
    %v3316 = vadd.f32 %v3282, 1.0
    %v3317 = vadd.f32 %v3284, 1.0
    %v3318 = vadd.f32 %v3286, 1.0
    %v3319 = vrcp.pop %v3287
    %v3320 = vmul.f32 1.0, %v3319
    %v3321 = vrcp.pop %v3288
    %v3322 = vmul.f32 1.0, %v3321
    %v3323 = vrcp.pop %v3289
    %v3324 = vmul.f32 1.0, %v3323
    %v3325 = vrcp.pop %v3290
    %v3326 = vmul.f32 1.0, %v3325
    %v3327 = vrcp.pop %v3291
    %v3328 = vmul.f32 1.0, %v3327
    %v3329 = vrcp.pop %v3292
    %v3330 = vmul.f32 1.0, %v3329
    %v3331 = vrcp.pop %v3293
    %v3332 = vmul.f32 1.0, %v3331
    %v3333 = vrcp.pop %v3294
    %v3334 = vmul.f32 1.0, %v3333
    %v3335 = vrcp.pop %v3295
    %v3336 = vmul.f32 1.0, %v3335
    %v3337 = vrcp.pop %v3296
    %v3338 = vmul.f32 1.0, %v3337
    %v3339 = vrcp.pop %v3297
    %v3340 = vmul.f32 1.0, %v3339
    %v3341 = vrcp.pop %v3298
    %v3342 = vmul.f32 1.0, %v3341
    %v3343 = vrcp.pop %v3299
    %v3344 = vmul.f32 1.0, %v3343
    %v3345 = vrcp.pop %v3300
    %v3346 = vmul.f32 1.0, %v3345
    %v3347 = vrcp.pop %v3301
    %v3348 = vmul.f32 1.0, %v3347
    %v3349 = vrcp.pop %v3302
    %v3350 = vmul.f32 1.0, %v3349
    %v3351 = vrcp.pop %v3303
    %v3352 = vmul.f32 1.0, %v3351
    %v3353 = vrcp.pop %v3304
    %v3354 = vmul.f32 1.0, %v3353
    %v3355 = vrcp.pop %v3305
    %v3356 = vmul.f32 1.0, %v3355
    %v3357 = vrcp.pop %v3306
    %v3358 = vmul.f32 1.0, %v3357
    %v3359 = vrcp.pop %v3307
    %v3360 = vmul.f32 1.0, %v3359
    %v3361 = vrcp.pop %v3308
    %v3362 = vmul.f32 1.0, %v3361
    %v3363 = vrcp.pop %v3309
    %v3364 = vmul.f32 1.0, %v3363
    %v3365 = vrcp.pop %v3310
    %v3366 = vmul.f32 1.0, %v3365
    %v3367 = vrcp.pop %v3311
    %v3368 = vmul.f32 1.0, %v3367
    %v3369 = vrcp.pop %v3312
    %v3370 = vmul.f32 1.0, %v3369
    %v3371 = vrcp.pop %v3313
    %v3372 = vmul.f32 1.0, %v3371
    %v3373 = vrcp.pop %v3314
    %v3374 = vmul.f32 1.0, %v3373
    %v3375 = vrcp.pop %v3315
    %v3376 = vmul.f32 1.0, %v3375
    %v3377 = vrcp.pop %v3316
    %v3378 = vmul.f32 1.0, %v3377
    %v3379 = vrcp.pop %v3317
    %v3380 = vmul.f32 1.0, %v3379
    %v3381 = vrcp.pop %v3318
    %v3382 = vmul.f32 1.0, %v3381
    %v3383 = vld [vmem:[#allocation5 + $0x6c0] sm:$0xf]
    %v3384 = vld [vmem:[#allocation5 + $0x6cc] sm:$0xf]
    %v3385 = vld [vmem:[#allocation5 + $0x6d8] sm:$0xf]
    %v3386 = vld [vmem:[#allocation5 + $0x6e4] sm:$0xf]
    %v3387 = vld [vmem:[#allocation5 + $0x6f0] sm:$0xf]
    %v3388 = vld [vmem:[#allocation5 + $0x6fc] sm:$0xf]
    %v3389 = vld [vmem:[#allocation5 + $0x708] sm:$0xf]
    %v3390 = vld [vmem:[#allocation5 + $0x714] sm:$0xf]
    %v3391 = vld [vmem:[#allocation5 + $0x720] sm:$0xf]
    %v3392 = vld [vmem:[#allocation5 + $0x72c] sm:$0xf]
    %v3393 = vld [vmem:[#allocation5 + $0x738] sm:$0xf]
    %v3394 = vld [vmem:[#allocation5 + $0x744] sm:$0xf]
    %v3395 = vld [vmem:[#allocation5 + $0x750] sm:$0xf]
    %v3396 = vld [vmem:[#allocation5 + $0x75c] sm:$0xf]
    %v3397 = vld [vmem:[#allocation5 + $0x768] sm:$0xf]
    %v3398 = vld [vmem:[#allocation5 + $0x774] sm:$0xf]
    %v3399 = vpack.c.bf16 %v3322, %v3320
    %v3400 = vpack.c.bf16 %v3326, %v3324
    %v3401 = vpack.c.bf16 %v3330, %v3328
    %v3402 = vpack.c.bf16 %v3334, %v3332
    %v3403 = vpack.c.bf16 %v3338, %v3336
    %v3404 = vpack.c.bf16 %v3342, %v3340
    %v3405 = vpack.c.bf16 %v3346, %v3344
    %v3406 = vpack.c.bf16 %v3350, %v3348
    %v3407 = vpack.c.bf16 %v3354, %v3352
    %v3408 = vpack.c.bf16 %v3358, %v3356
    %v3409 = vpack.c.bf16 %v3362, %v3360
    %v3410 = vpack.c.bf16 %v3366, %v3364
    %v3411 = vpack.c.bf16 %v3370, %v3368
    %v3412 = vpack.c.bf16 %v3374, %v3372
    %v3413 = vpack.c.bf16 %v3378, %v3376
    %v3414 = vpack.c.bf16 %v3382, %v3380
    %v3415 = vld [vmem:[#allocation7 + $0x5] ss:$0 sm:$0xff]
    %v3432 = vunpack.c.l.b16 %v3383
    %v3433 = vunpack.c.l.b16 %v3384
    %v3434 = vunpack.c.l.b16 %v3385
    %v3435 = vunpack.c.l.b16 %v3386
    %v3436 = vunpack.c.l.b16 %v3387
    %v3437 = vunpack.c.l.b16 %v3388
    %v3438 = vunpack.c.l.b16 %v3389
    %v3439 = vunpack.c.l.b16 %v3390
    %v3440 = vunpack.c.l.b16 %v3391
    %v3441 = vunpack.c.l.b16 %v3392
    %v3442 = vunpack.c.l.b16 %v3393
    %v3443 = vunpack.c.l.b16 %v3394
    %v3444 = vunpack.c.l.b16 %v3395
    %v3445 = vunpack.c.l.b16 %v3396
    %v3446 = vunpack.c.l.b16 %v3397
    %v3447 = vunpack.c.l.b16 %v3398
    %v3448 = vpack.c.b16 %v3433, %v3432
    %v3449 = vpack.c.b16 %v3435, %v3434
    %v3450 = vpack.c.b16 %v3437, %v3436
    %v3451 = vpack.c.b16 %v3439, %v3438
    %v3452 = vpack.c.b16 %v3441, %v3440
    %v3453 = vpack.c.b16 %v3443, %v3442
    %v3454 = vpack.c.b16 %v3445, %v3444
    %v3455 = vpack.c.b16 %v3447, %v3446
    %3464 = vmatprep.subr.bf16.mxu0 0
    %3465 = vmatpush1.bf16.msra.mxu0 %v3455
    %3466 = vmatprep.subr.bf16.mxu0 0
    %3467 = vmatpush1.bf16.msra.mxu0 %v3454
    %3468 = vmatprep.subr.bf16.mxu0 0
    %3469 = vmatpush1.bf16.msra.mxu0 %v3453
    %3470 = vmatprep.subr.bf16.mxu0 0
    %3471 = vmatpush1.bf16.msra.mxu0 %v3452
    %3472 = vmatprep.subr.bf16.mxu0 0
    %3473 = vmatpush1.bf16.msra.mxu0 %v3451
    %3474 = vmatprep.subr.bf16.mxu0 0
    %3475 = vmatpush1.bf16.msra.mxu0 %v3450
    %3476 = vmatprep.subr.bf16.mxu0 0
    %3477 = vmatpush1.bf16.msra.mxu0 %v3449
    %3478 = vmatprep.subr.bf16.mxu0 0
    %3479 = vmatpush1.bf16.msra.mxu0 %v3448
    %3480 = vmatprep.subr.bf16.mxu0 0
    %3481 = vmatpush2.bf16.msra.mxu0 0
    %3482 = vmatprep.subr.bf16.mxu0 0
    %3483 = vmatpush2.bf16.msra.mxu0 0
    %3484 = vmatprep.subr.bf16.mxu0 0
    %3485 = vmatpush2.bf16.msra.mxu0 0
    %3486 = vmatprep.subr.bf16.mxu0 0
    %3487 = vmatpush2.bf16.msra.mxu0 0
    %3488 = vmatprep.subr.bf16.mxu0 0
    %3489 = vmatpush2.bf16.msra.mxu0 0
    %3490 = vmatprep.subr.bf16.mxu0 0
    %3491 = vmatpush2.bf16.msra.mxu0 0
    %3492 = vmatprep.subr.bf16.mxu0 0
    %3493 = vmatpush2.bf16.msra.mxu0 0
    %3494 = vmatprep.subr.bf16.mxu0 0
    %3495 = vmatpush2.bf16.msra.mxu0 0
    %3496 = vmatprep.mubr.bf16.mxu0 0
    %3497 = vmatmul.mubr.bf16.gmra.mxu0 %v3399
    %v3498 = vpop.f32.mrf.mxu0
    %v3499 = vadd.f32 %v3415, %v3498
    %v3500 = vpop.f32.mrf.mxu0
    %v3501 = vpop.f32.mrf.mxu0
    %v3502 = vadd.f32 %v3415, %v3501
    %v3503 = vpop.f32.mrf.mxu0
    %3504 = vmatprep.mubr.bf16.mxu0 0
    %3505 = vmatmul.mubr.bf16.gmra.mxu0 %v3400
    %v3506 = vpop.f32.mrf.mxu0
    %v3507 = vadd.f32 %v3415, %v3506
    %v3508 = vpop.f32.mrf.mxu0
    %v3509 = vpop.f32.mrf.mxu0
    %v3510 = vadd.f32 %v3415, %v3509
    %v3511 = vpop.f32.mrf.mxu0
    %3512 = vmatprep.mubr.bf16.mxu0 0
    %3513 = vmatmul.mubr.bf16.gmra.mxu0 %v3401
    %v3514 = vpop.f32.mrf.mxu0
    %v3515 = vadd.f32 %v3415, %v3514
    %v3516 = vpop.f32.mrf.mxu0
    %v3517 = vpop.f32.mrf.mxu0
    %v3518 = vadd.f32 %v3415, %v3517
    %v3519 = vpop.f32.mrf.mxu0
    %3520 = vmatprep.mubr.bf16.mxu0 0
    %3521 = vmatmul.mubr.bf16.gmra.mxu0 %v3402
    %v3522 = vpop.f32.mrf.mxu0
    %v3523 = vadd.f32 %v3415, %v3522
    %v3524 = vpop.f32.mrf.mxu0
    %v3525 = vpop.f32.mrf.mxu0
    %v3526 = vadd.f32 %v3415, %v3525
    %v3527 = vpop.f32.mrf.mxu0
    %3528 = vmatprep.mubr.bf16.mxu0 0
    %3529 = vmatmul.mubr.bf16.gmra.mxu0 %v3403
    %v3530 = vpop.f32.mrf.mxu0
    %v3531 = vadd.f32 %v3415, %v3530
    %v3532 = vpop.f32.mrf.mxu0
    %v3533 = vpop.f32.mrf.mxu0
    %v3534 = vadd.f32 %v3415, %v3533
    %v3535 = vpop.f32.mrf.mxu0
    %3536 = vmatprep.mubr.bf16.mxu0 0
    %3537 = vmatmul.mubr.bf16.gmra.mxu0 %v3404
    %v3538 = vpop.f32.mrf.mxu0
    %v3539 = vadd.f32 %v3415, %v3538
    %v3540 = vpop.f32.mrf.mxu0
    %v3541 = vpop.f32.mrf.mxu0
    %v3542 = vadd.f32 %v3415, %v3541
    %v3543 = vpop.f32.mrf.mxu0
    %3544 = vmatprep.mubr.bf16.mxu0 0
    %3545 = vmatmul.mubr.bf16.gmra.mxu0 %v3405
    %v3546 = vpop.f32.mrf.mxu0
    %v3547 = vadd.f32 %v3415, %v3546
    %v3548 = vpop.f32.mrf.mxu0
    %v3549 = vpop.f32.mrf.mxu0
    %v3550 = vadd.f32 %v3415, %v3549
    %v3551 = vpop.f32.mrf.mxu0
    %3552 = vmatprep.mubr.bf16.mxu0 0
    %3553 = vmatmul.mubr.bf16.gmra.mxu0 %v3406
    %v3554 = vpop.f32.mrf.mxu0
    %v3555 = vadd.f32 %v3415, %v3554
    %v3556 = vpop.f32.mrf.mxu0
    %v3557 = vpop.f32.mrf.mxu0
    %v3558 = vadd.f32 %v3415, %v3557
    %v3559 = vpop.f32.mrf.mxu0
    %3560 = vmatprep.mubr.bf16.mxu0 0
    %3561 = vmatmul.mubr.bf16.gmra.mxu0 %v3407
    %v3562 = vpop.f32.mrf.mxu0
    %v3563 = vadd.f32 %v3415, %v3562
    %v3564 = vpop.f32.mrf.mxu0
    %v3565 = vpop.f32.mrf.mxu0
    %v3566 = vadd.f32 %v3415, %v3565
    %v3567 = vpop.f32.mrf.mxu0
    %3568 = vmatprep.mubr.bf16.mxu0 0
    %3569 = vmatmul.mubr.bf16.gmra.mxu0 %v3408
    %v3570 = vpop.f32.mrf.mxu0
    %v3571 = vadd.f32 %v3415, %v3570
    %v3572 = vpop.f32.mrf.mxu0
    %v3573 = vpop.f32.mrf.mxu0
    %v3574 = vadd.f32 %v3415, %v3573
    %v3575 = vpop.f32.mrf.mxu0
    %3576 = vmatprep.mubr.bf16.mxu0 0
    %3577 = vmatmul.mubr.bf16.gmra.mxu0 %v3409
    %v3578 = vpop.f32.mrf.mxu0
    %v3579 = vadd.f32 %v3415, %v3578
    %v3580 = vpop.f32.mrf.mxu0
    %v3581 = vpop.f32.mrf.mxu0
    %v3582 = vadd.f32 %v3415, %v3581
    %v3583 = vpop.f32.mrf.mxu0
    %3584 = vmatprep.mubr.bf16.mxu0 0
    %3585 = vmatmul.mubr.bf16.gmra.mxu0 %v3410
    %v3586 = vpop.f32.mrf.mxu0
    %v3587 = vadd.f32 %v3415, %v3586
    %v3588 = vpop.f32.mrf.mxu0
    %v3589 = vpop.f32.mrf.mxu0
    %v3590 = vadd.f32 %v3415, %v3589
    %v3591 = vpop.f32.mrf.mxu0
    %3592 = vmatprep.mubr.bf16.mxu0 0
    %3593 = vmatmul.mubr.bf16.gmra.mxu0 %v3411
    %v3594 = vpop.f32.mrf.mxu0
    %v3595 = vadd.f32 %v3415, %v3594
    %v3596 = vpop.f32.mrf.mxu0
    %v3597 = vpop.f32.mrf.mxu0
    %v3598 = vadd.f32 %v3415, %v3597
    %v3599 = vpop.f32.mrf.mxu0
    %3600 = vmatprep.mubr.bf16.mxu0 0
    %3601 = vmatmul.mubr.bf16.gmra.mxu0 %v3412
    %v3602 = vpop.f32.mrf.mxu0
    %v3603 = vadd.f32 %v3415, %v3602
    %v3604 = vpop.f32.mrf.mxu0
    %v3605 = vpop.f32.mrf.mxu0
    %v3606 = vadd.f32 %v3415, %v3605
    %v3607 = vpop.f32.mrf.mxu0
    %3608 = vmatprep.mubr.bf16.mxu0 0
    %3609 = vmatmul.mubr.bf16.gmra.mxu0 %v3413
    %v3610 = vpop.f32.mrf.mxu0
    %v3611 = vadd.f32 %v3415, %v3610
    %v3612 = vpop.f32.mrf.mxu0
    %v3613 = vpop.f32.mrf.mxu0
    %v3614 = vadd.f32 %v3415, %v3613
    %v3615 = vpop.f32.mrf.mxu0
    %3616 = vmatprep.mubr.bf16.mxu0 0
    %3617 = vmatmul.mubr.bf16.gmra.mxu0 %v3414
    %v3618 = vpop.f32.mrf.mxu0
    %v3619 = vadd.f32 %v3415, %v3618
    %v3620 = vpop.f32.mrf.mxu0
    %v3621 = vpop.f32.mrf.mxu0
    %v3622 = vadd.f32 %v3415, %v3621
    %v3623 = vpop.f32.mrf.mxu0
    %3624 = vdwg.mxu0
    %3625 = vst [vmem:[#allocation8] sm:$0xff] %v3499
    %3626 = vst [vmem:[#allocation8 + $0x8] sm:$0xff] %v3502
    %3627 = vst [vmem:[#allocation8 + $0x10] sm:$0xff] %v3507
    %3628 = vst [vmem:[#allocation8 + $0x18] sm:$0xff] %v3510
    %3629 = vst [vmem:[#allocation8 + $0x20] sm:$0xff] %v3515
    %3630 = vst [vmem:[#allocation8 + $0x28] sm:$0xff] %v3518
    %3631 = vst [vmem:[#allocation8 + $0x30] sm:$0xff] %v3523
    %3632 = vst [vmem:[#allocation8 + $0x38] sm:$0xff] %v3526
    %3633 = vst [vmem:[#allocation8 + $0x40] sm:$0xff] %v3531
    %3634 = vst [vmem:[#allocation8 + $0x48] sm:$0xff] %v3534
    %3635 = vst [vmem:[#allocation8 + $0x50] sm:$0xff] %v3539
    %3636 = vst [vmem:[#allocation8 + $0x58] sm:$0xff] %v3542
    %3637 = vst [vmem:[#allocation8 + $0x60] sm:$0xff] %v3547
    %3638 = vst [vmem:[#allocation8 + $0x68] sm:$0xff] %v3550
    %3639 = vst [vmem:[#allocation8 + $0x70] sm:$0xff] %v3555
    %3640 = vst [vmem:[#allocation8 + $0x78] sm:$0xff] %v3558
    %3641 = vst [vmem:[#allocation8 + $0x80] sm:$0xff] %v3563
    %3642 = vst [vmem:[#allocation8 + $0x88] sm:$0xff] %v3566
    %3643 = vst [vmem:[#allocation8 + $0x90] sm:$0xff] %v3571
    %3644 = vst [vmem:[#allocation8 + $0x98] sm:$0xff] %v3574
    %3645 = vst [vmem:[#allocation8 + $0xa0] sm:$0xff] %v3579
    %3646 = vst [vmem:[#allocation8 + $0xa8] sm:$0xff] %v3582
    %3647 = vst [vmem:[#allocation8 + $0xb0] sm:$0xff] %v3587
    %3648 = vst [vmem:[#allocation8 + $0xb8] sm:$0xff] %v3590
    %3649 = vst [vmem:[#allocation8 + $0xc0] sm:$0xff] %v3595
    %3650 = vst [vmem:[#allocation8 + $0xc8] sm:$0xff] %v3598
    %3651 = vst [vmem:[#allocation8 + $0xd0] sm:$0xff] %v3603
    %3652 = vst [vmem:[#allocation8 + $0xd8] sm:$0xff] %v3606
    %3653 = vst [vmem:[#allocation8 + $0xe0] sm:$0xff] %v3611
    %3654 = vst [vmem:[#allocation8 + $0xe8] sm:$0xff] %v3614
    %3655 = vst [vmem:[#allocation8 + $0xf0] sm:$0xff] %v3619
    %3656 = vst [vmem:[#allocation8 + $0xf8] sm:$0xff] %v3622
    // Predicated region
    $region26: #{tpu_custom_call.1} parent=1 // pred_check
      _
    $region27: #{tpu_custom_call.1} parent=1 // pred_check_branch
      %3658 = sbr.rel (0) target = $region29
    $region28: #{tpu_custom_call.1} parent=1 // pred_region
      %s3660 = ssub.s32 4096, 4096
      %3661 = vsyncadd [#allocation4], %s3660
      %s3662 = sshll.u32 [#allocation8], 4
      %s3663 = int_to_ptr.vmem [resolvable:$true] %s3662
      %3668 = dma.vmem_to_hbm [thread:$0]  %s3663, 4096, %s3, [#allocation4], 128, 128, 8
    $region29: #{tpu_custom_call.1} parent=1 // pred_fallthru
      _
    // Predicated region
    $region30: #{tpu_custom_call.1} parent=1 // pred_check
      _
    $region31: #{tpu_custom_call.1} parent=1 // pred_check_branch
      %3670 = sbr.rel (0) target = $region33
    $region32: #{tpu_custom_call.1} parent=1 // pred_region
      %3671 = dma.done [#allocation4], 4096
    $region33: #{tpu_custom_call.1} parent=1 // pred_fallthru
      _
    %3672 = vsyncpa [#allocation3], 1
    %3673 = vsyncpa [#allocation6], 1
    %3674 = vsyncpa [#allocation4], 1

</llo_original>
